<compile_context>
chip_gen: v7x
topology: tpu7x:2x2x1
jax: 0.10.0
libtpu: 0.0.40
codegen_flags: <defaults>
</compile_context>

<pallas_src>
import functools

import jax
import jax.numpy as jnp
from jax import lax
from jax.experimental import pallas as pl
from jax.experimental.pallas import tpu as pltpu

EPS = 1e-5
LANES = 128
VMEM_LIMIT = 32 * 1024 * 1024    # explicit scoped-VMEM limit (safe on v5e/v6e/v7x)
VMEM_BUDGET = 24 * 1024 * 1024   # tile-picker budget (headroom below the limit)


# ------------------------------ Pallas kernels ------------------------------

def _mm_bias_single_kernel(x_ref, w_ref, b_ref, o_ref, *, relu):
    """o = [relu]( x @ w + bias ), single K step (no accumulator scratch)."""
    y = jnp.dot(x_ref[...], w_ref[...],
                preferred_element_type=jnp.float32) + b_ref[...]
    if relu:
        y = jnp.maximum(y, 0.0)
    o_ref[...] = y.astype(o_ref.dtype)


def _mm_bias_res_relu_single_kernel(x_ref, w_ref, b_ref, r_ref, o_ref):
    """o = relu( x @ w + bias + residual ), single K step."""
    y = (jnp.dot(x_ref[...], w_ref[...], preferred_element_type=jnp.float32)
         + b_ref[...] + r_ref[...].astype(jnp.float32))
    o_ref[...] = jnp.maximum(y, 0.0).astype(o_ref.dtype)


def _mm_bias_kernel(x_ref, w_ref, b_ref, o_ref, acc_ref, *, relu):
    """o = [relu]( x @ w + bias ), accumulated over the trailing K grid axis."""
    k = pl.program_id(2)

    @pl.when(k == 0)
    def _init():
        acc_ref[...] = jnp.zeros_like(acc_ref)

    acc_ref[...] += jnp.dot(x_ref[...], w_ref[...],
                            preferred_element_type=jnp.float32)

    @pl.when(k == pl.num_programs(2) - 1)
    def _fin():
        y = acc_ref[...] + b_ref[...]
        if relu:
            y = jnp.maximum(y, 0.0)
        o_ref[...] = y.astype(o_ref.dtype)


def _mm_bias_res_relu_kernel(x_ref, w_ref, b_ref, r_ref, o_ref, acc_ref):
    """o = relu( x @ w + bias + residual ), accumulated over the K grid axis."""
    k = pl.program_id(2)

    @pl.when(k == 0)
    def _init():
        acc_ref[...] = jnp.zeros_like(acc_ref)

    acc_ref[...] += jnp.dot(x_ref[...], w_ref[...],
                            preferred_element_type=jnp.float32)

    @pl.when(k == pl.num_programs(2) - 1)
    def _fin():
        y = acc_ref[...] + b_ref[...] + r_ref[...].astype(jnp.float32)
        o_ref[...] = jnp.maximum(y, 0.0).astype(o_ref.dtype)


def _conv3x3_kernel(x0_ref, x1_ref, x2_ref, w_ref, b_ref, o_ref, *, stride, wo):
    """One output row per grid step; all 9 taps reduced in-register.

    x{0,1,2}_ref : (1, 1, Wp, Ci) padded input rows ho*stride + {0,1,2}
    w_ref        : (3, 3, Ci, Co) BN-scale-folded weight (VMEM-resident)
    b_ref        : (1, Co)        BN bias
    o_ref        : (1, 1, Wo, Co)
    """
    co = o_ref.shape[-1]
    acc = jnp.zeros((wo, co), jnp.float32)
    for kh, xr in enumerate((x0_ref, x1_ref, x2_ref)):   # static unroll
        for kw in range(3):                               # static unroll
            if stride == 1:
                xs = xr[0, 0, pl.ds(kw, wo), :]
            else:
                xs = xr[0, 0, pl.ds(kw, wo, stride=stride), :]
            acc = acc + jnp.dot(xs, w_ref[kh, kw],
                                preferred_element_type=jnp.float32)
    y = jnp.maximum(acc + b_ref[...], 0.0)
    o_ref[0, 0] = y.astype(o_ref.dtype)


def _conv1x1s_kernel(x_ref, w_ref, b_ref, o_ref, *, stride, wo):
    """Strided 1x1 conv + BN bias, one output row per step (shortcut, stride>1)."""
    xs = x_ref[0, 0, pl.ds(0, wo, stride=stride), :]
    y = jnp.dot(xs, w_ref[...], preferred_element_type=jnp.float32) + b_ref[...]
    o_ref[0, 0] = y.astype(o_ref.dtype)


# ------------------------------ tile selection -------------------------------

def _round_up(x, m):
    return (x + m - 1) // m * m


def _pick_div(dim, candidates):
    for c in candidates:
        if dim % c == 0:
            return c
    return dim  # full-extent block


def _pick_tm(m, tk, tn, xb, wb, ob, rb):
    """Largest tm whose double-buffered tiles fit the VMEM budget."""
    for tm in (1024, 512, 256, 128, 64, 32, 16, 8):
        if m % tm:
            continue
        need = (2 * tm * tk * xb      # LHS tile (double-buffered)
                + 2 * tk * tn * wb    # weight tile
                + 2 * tn * 4          # bias
                + 2 * tm * tn * ob    # output tile
                + 2 * tm * tn * rb    # residual tile (if any)
                + tm * tn * 4)        # f32 accumulator scratch (worst case)
        if need <= VMEM_BUDGET:
            return tm
    # Fallback: whole-M block (only hit for tiny / non-8-divisible M).
    return m


# ------------------------------- kernel wrappers ------------------------------

def matmul_bias(x, w, bias, *, relu, out_dtype, res=None):
    """Fused  [relu]( x @ w + bias [+ res] ).   x:(M,K)  w:(K,C)  res:(M,C)."""
    M, K = x.shape
    _, C = w.shape
    tn = _pick_div(C, (256, 128))
    tk = _pick_div(K, (512, 256, 128))
    xb, wb = x.dtype.itemsize, w.dtype.itemsize
    ob = jnp.dtype(out_dtype).itemsize
    rb = res.dtype.itemsize if res is not None else 0
    tm = _pick_tm(M, tk, tn, xb, wb, ob, rb)
    nk = K // tk

    args = [x, w, bias]
    if nk == 1:
        # Single contraction step: no accumulator, fully parallel 2-D grid.
        grid = (M // tm, C // tn)
        in_specs = [
            pl.BlockSpec((tm, tk), lambda i, j: (i, 0)),
            pl.BlockSpec((tk, tn), lambda i, j: (0, j)),
            pl.BlockSpec((1, tn), lambda i, j: (0, j)),
        ]
        out_spec = pl.BlockSpec((tm, tn), lambda i, j: (i, j))
        scratch = []
        dims = ("parallel", "parallel")
        if res is None:
            kernel = functools.partial(_mm_bias_single_kernel, relu=relu)
        else:
            kernel = _mm_bias_res_relu_single_kernel
            in_specs.append(pl.BlockSpec((tm, tn), lambda i, j: (i, j)))
            args.append(res)
    else:
        grid = (M // tm, C // tn, nk)
        in_specs = [
            pl.BlockSpec((tm, tk), lambda i, j, k: (i, k)),
            pl.BlockSpec((tk, tn), lambda i, j, k: (k, j)),
            pl.BlockSpec((1, tn), lambda i, j, k: (0, j)),
        ]
        out_spec = pl.BlockSpec((tm, tn), lambda i, j, k: (i, j))
        scratch = [pltpu.VMEM((tm, tn), jnp.float32)]
        dims = ("parallel", "parallel", "arbitrary")
        if res is None:
            kernel = functools.partial(_mm_bias_kernel, relu=relu)
        else:
            kernel = _mm_bias_res_relu_kernel
            in_specs.append(pl.BlockSpec((tm, tn), lambda i, j, k: (i, j)))
            args.append(res)

    return pl.pallas_call(
        kernel,
        out_shape=jax.ShapeDtypeStruct((M, C), out_dtype),
        grid_spec=pltpu.PrefetchScalarGridSpec(
            num_scalar_prefetch=0,
            grid=grid,
            in_specs=in_specs,
            out_specs=out_spec,
            scratch_shapes=scratch,
        ),
        compiler_params=pltpu.CompilerParams(
            dimension_semantics=dims,
            vmem_limit_bytes=VMEM_LIMIT,
        ),
    )(*args)


def conv3x3_bn_relu(x_pad, w, bias, *, stride, out_dtype):
    """3x3 conv (already spatially zero-padded input) + BN bias + ReLU.

    x_pad:(N,Hp,Wp,Ci)  w:(3,3,Ci,Co) scale-folded  bias:(1,Co).  No im2col.
    One output row per grid step; the three needed input rows arrive as three
    BlockSpec'd operands and all 9 taps are reduced in-register."""
    N, Hp, Wp, Ci = x_pad.shape
    Co = w.shape[-1]
    Ho = (Hp - 3) // stride + 1
    Wo = (Wp - 3) // stride + 1
    kern = functools.partial(_conv3x3_kernel, stride=stride, wo=Wo)

    def row_spec(kh):
        return pl.BlockSpec((1, 1, Wp, Ci),
                            lambda n, ho, kh=kh: (n, ho * stride + kh, 0, 0))

    return pl.pallas_call(
        kern,
        out_shape=jax.ShapeDtypeStruct((N, Ho, Wo, Co), out_dtype),
        grid_spec=pltpu.PrefetchScalarGridSpec(
            num_scalar_prefetch=0,
            grid=(N, Ho),
            in_specs=[
                row_spec(0), row_spec(1), row_spec(2),
                # Constant index -> the whole folded weight is DMA'd once and
                # stays resident in VMEM for the entire grid.
                pl.BlockSpec((3, 3, Ci, Co), lambda n, ho: (0, 0, 0, 0)),
                pl.BlockSpec((1, Co), lambda n, ho: (0, 0)),
            ],
            out_specs=pl.BlockSpec((1, 1, Wo, Co), lambda n, ho: (n, ho, 0, 0)),
        ),
        compiler_params=pltpu.CompilerParams(
            dimension_semantics=("parallel", "parallel"),
            vmem_limit_bytes=VMEM_LIMIT,
        ),
    )(x_pad, x_pad, x_pad, w, bias)


def conv1x1_strided_bn(x_nhwc, w, bias, *, stride, out_dtype):
    """1x1 conv with spatial stride (+BN bias) without materializing a strided copy."""
    N, H, W, Ci = x_nhwc.shape
    Co = w.shape[-1]
    Ho = (H - 1) // stride + 1
    Wo = (W - 1) // stride + 1
    kern = functools.partial(_conv1x1s_kernel, stride=stride, wo=Wo)
    return pl.pallas_call(
        kern,
        out_shape=jax.ShapeDtypeStruct((N, Ho, Wo, Co), out_dtype),
        grid_spec=pltpu.PrefetchScalarGridSpec(
            num_scalar_prefetch=0,
            grid=(N, Ho),
            in_specs=[
                pl.BlockSpec((1, 1, W, Ci), lambda n, ho: (n, ho * stride, 0, 0)),
                pl.BlockSpec((Ci, Co), lambda n, ho: (0, 0)),
                pl.BlockSpec((1, Co), lambda n, ho: (0, 0)),
            ],
            out_specs=pl.BlockSpec((1, 1, Wo, Co), lambda n, ho: (n, ho, 0, 0)),
        ),
        compiler_params=pltpu.CompilerParams(
            dimension_semantics=("parallel", "parallel"),
            vmem_limit_bytes=VMEM_LIMIT,
        ),
    )(x_nhwc, w, bias)


# ------------------------------- JAX glue ------------------------------------

def _bn_fold(gamma, beta, mean=None, var=None):
    """Inference-mode BN fold.  Defaults match a fresh nn.BatchNorm2d (mean=0,var=1)."""
    mean = jnp.zeros_like(gamma) if mean is None else mean
    var = jnp.ones_like(gamma) if var is None else var
    scale = gamma / jnp.sqrt(var + EPS)
    bias = beta - mean * scale
    return scale.astype(jnp.float32), bias.astype(jnp.float32)


def _fold_1x1(w_oihw, gamma, beta, cin_p, cout_p, dtype):
    scale, bias = _bn_fold(gamma, beta)
    w = jnp.transpose(w_oihw[:, :, 0, 0], (1, 0)) * scale[None, :]       # (I, O)
    w = jnp.pad(w, ((0, cin_p - w.shape[0]), (0, cout_p - w.shape[1])))
    bias = jnp.pad(bias, (0, cout_p - bias.shape[0])).reshape(1, cout_p)
    return w.astype(dtype), bias


def _fold_3x3(w_oihw, gamma, beta, cin_p, cout_p, dtype):
    scale, bias = _bn_fold(gamma, beta)
    w = jnp.transpose(w_oihw, (2, 3, 1, 0)) * scale[None, None, None, :]  # (3,3,I,O)
    w = jnp.pad(w, ((0, 0), (0, 0),
                    (0, cin_p - w.shape[2]), (0, cout_p - w.shape[3])))
    bias = jnp.pad(bias, (0, cout_p - bias.shape[0])).reshape(1, cout_p)
    return w.astype(dtype), bias


def bottleneck_forward(x_nchw, p, stride, *, compute_dtype=jnp.bfloat16):
    N, Cin, H, W = x_nchw.shape
    planes = p["w1"].shape[0]
    Cout = p["w3"].shape[0]
    Cin_p = _round_up(Cin, LANES)
    Cpl_p = _round_up(planes, LANES)
    Cout_p = _round_up(Cout, LANES)

    x_nhwc = jnp.transpose(x_nchw, (0, 2, 3, 1))
    x_p = jnp.pad(x_nhwc, ((0, 0), (0, 0), (0, 0), (0, Cin_p - Cin)))
    x_flat = x_p.reshape(N * H * W, Cin_p).astype(compute_dtype)

    # conv1 (1x1) + bn1 + relu  — fused matmul, bf16 MXU, f32 accumulate
    w1, b1 = _fold_1x1(p["w1"], p["g1"], p["b1"], Cin_p, Cpl_p, compute_dtype)
    o1 = matmul_bias(x_flat, w1, b1, relu=True, out_dtype=compute_dtype)
    o1 = o1.reshape(N, H, W, Cpl_p)

    # conv2 (3x3, stride, pad=1) + bn2 + relu — no im2col: spatial zero-pad only,
    # 9 taps reduced in-register per output row, weight resident in VMEM.
    o1p = jnp.pad(o1, ((0, 0), (1, 1), (1, 1), (0, 0)))
    w2, b2 = _fold_3x3(p["w2"], p["g2"], p["b2"], Cpl_p, Cpl_p, compute_dtype)
    o2 = conv3x3_bn_relu(o1p, w2, b2, stride=stride, out_dtype=compute_dtype)
    _, Ho, Wo, _ = o2.shape
    o2_flat = o2.reshape(N * Ho * Wo, Cpl_p)

    # shortcut branch (residual kept in f32 for accuracy)
    if "wsc" in p:
        wsc, bsc = _fold_1x1(p["wsc"], p["gsc"], p["bsc"], Cin_p, Cout_p,
                             compute_dtype)
        if stride == 1:
            res = matmul_bias(x_flat, wsc, bsc, relu=False, out_dtype=jnp.float32)
        else:
            res = conv1x1_strided_bn(x_p.astype(compute_dtype), wsc, bsc,
                                     stride=stride, out_dtype=jnp.float32)
            res = res.reshape(N * Ho * Wo, Cout_p)
    else:
        # identity shortcut: stride==1 and Cin == Cout (so Cin_p == Cout_p)
        res = x_p.reshape(N * H * W, Cin_p)

    # conv3 (1x1) + bn3 + residual add + relu — fully fused
    w3, b3 = _fold_1x1(p["w3"], p["g3"], p["b3"], Cpl_p, Cout_p, compute_dtype)
    o3 = matmul_bias(o2_flat, w3, b3, relu=True, out_dtype=jnp.float32, res=res)

    out = o3.reshape(N, Ho, Wo, Cout_p)[..., :Cout]
    return jnp.transpose(out, (0, 3, 1, 2))        # back to NCHW


# ------------------------------- reference -----------------------------------

def ref_forward(x, p, stride):
    dn = ("NCHW", "OIHW", "NCHW")

    def bn(y, g, b):
        s = g / jnp.sqrt(1.0 + EPS)
        return y * s[None, :, None, None] + b[None, :, None, None]

    out = lax.conv_general_dilated(x, p["w1"], (1, 1), "VALID", dimension_numbers=dn)
    out = jax.nn.relu(bn(out, p["g1"], p["b1"]))
    out = lax.conv_general_dilated(out, p["w2"], (stride, stride), ((1, 1), (1, 1)),
                                   dimension_numbers=dn)
    out = jax.nn.relu(bn(out, p["g2"], p["b2"]))
    out = lax.conv_general_dilated(out, p["w3"], (1, 1), "VALID", dimension_numbers=dn)
    out = bn(out, p["g3"], p["b3"])
    if "wsc" in p:
        sc = lax.conv_general_dilated(x, p["wsc"], (stride, stride), "VALID",
                                      dimension_numbers=dn)
        sc = bn(sc, p["gsc"], p["bsc"])
    else:
        sc = x
    return jax.nn.relu(out + sc)


# --------------------------------- main ---------------------------------------

def make_params(key, in_planes, planes, stride, expansion=4):
    ks = jax.random.split(key, 12)
    f32 = jnp.float32
    p = {
        "w1": jax.random.normal(ks[0], (planes, in_planes, 1, 1), f32) * 0.1,
        "g1": 1.0 + 0.1 * jax.random.normal(ks[1], (planes,), f32),
        "b1": 0.1 * jax.random.normal(ks[2], (planes,), f32),
        "w2": jax.random.normal(ks[3], (planes, planes, 3, 3), f32) * 0.1,
        "g2": 1.0 + 0.1 * jax.random.normal(ks[4], (planes,), f32),
        "b2": 0.1 * jax.random.normal(ks[5], (planes,), f32),
        "w3": jax.random.normal(ks[6], (planes * expansion, planes, 1, 1), f32) * 0.1,
        "g3": 1.0 + 0.1 * jax.random.normal(ks[7], (planes * expansion,), f32),
        "b3": 0.1 * jax.random.normal(ks[8], (planes * expansion,), f32),
    }
    if stride != 1 or expansion * planes != in_planes:
        p["wsc"] = jax.random.normal(ks[9], (planes * expansion, in_planes, 1, 1), f32) * 0.1
        p["gsc"] = 1.0 + 0.1 * jax.random.normal(ks[10], (planes * expansion,), f32)
        p["bsc"] = 0.1 * jax.random.normal(ks[11], (planes * expansion,), f32)
    return p


if __name__ == "__main__":
    in_planes, planes, stride = 4, 4, 1
    key = jax.random.PRNGKey(0)
    kx, kp = jax.random.split(key)
    x = jax.random.normal(kx, (2, in_planes, 16, 16), jnp.float32)   # NCHW, like PyTorch
    params = make_params(kp, in_planes, planes, stride)

    fwd = jax.jit(functools.partial(bottleneck_forward, stride=stride))
    out = jax.block_until_ready(fwd(x, params))

    ref = jax.block_until_ready(ref_forward(x, params, stride))
    assert out.shape == ref.shape == (2, 4 * planes, 16, 16)
    max_err = float(jnp.max(jnp.abs(out - ref)))
    # bf16 MXU operands + bf16 intermediates => loosened (but comfortable) tolerance
    assert jnp.allclose(out, ref, rtol=2e-2, atol=2e-2), f"mismatch vs reference (max|d|={max_err})"

    print("KERNEL_OK")
</pallas_src>

<mosaic_0001>
module attributes {stable_mosaic.version = 11 : i64} {
  func.func @_mm_bias_single_kernel(%arg0: i32, %arg1: i32, %arg2: memref<512x128xbf16, #tpu.memory_space<vmem>>, %arg3: memref<128x128xbf16, #tpu.memory_space<vmem>>, %arg4: memref<1x128xf32, #tpu.memory_space<vmem>>, %arg5: memref<512x128xbf16, #tpu.memory_space<vmem>>) attributes {dimension_semantics = [#tpu.dimension_semantics<parallel>, #tpu.dimension_semantics<parallel>], iteration_bounds = array<i64: 1, 1>, scalar_prefetch = 0 : i64, scratch_operands = 0 : i64, tpu.core_type = #tpu.core_type<tc>, window_params = [{transform_indices = @transform_0, window_bounds = array<i64: 512, 128>}, {transform_indices = @transform_1, window_bounds = array<i64: 128, 128>}, {transform_indices = @transform_2, window_bounds = array<i64: 1, 128>}, {transform_indices = @transform_3, window_bounds = array<i64: 512, 128>}]} {
    %c0 = arith.constant 0 : index
    %c0_0 = arith.constant 0 : index
    %0 = vector.load %arg2[%c0, %c0_0] : memref<512x128xbf16, #tpu.memory_space<vmem>>, vector<512x128xbf16>
    %c0_1 = arith.constant 0 : index
    %c0_2 = arith.constant 0 : index
    %1 = vector.load %arg3[%c0_1, %c0_2] : memref<128x128xbf16, #tpu.memory_space<vmem>>, vector<128x128xbf16>
    %cst = arith.constant dense<0.000000e+00> : vector<512x128xf32>
    %2 = tpu.matmul %0, %1, %cst {dimension_numbers = #tpu.dot_dimension_numbers<[1], [0], [0], [1], [0, 0, 1, 1], [], []>} : vector<512x128xbf16>, vector<128x128xbf16>, vector<512x128xf32> -> vector<512x128xf32>
    %c0_3 = arith.constant 0 : index
    %c0_4 = arith.constant 0 : index
    %3 = vector.load %arg4[%c0_3, %c0_4] : memref<1x128xf32, #tpu.memory_space<vmem>>, vector<1x128xf32>
    %4 = vector.broadcast %3 : vector<1x128xf32> to vector<512x128xf32>
    %5 = arith.addf %2, %4 : vector<512x128xf32>
    %cst_5 = arith.constant 0.000000e+00 : f32
    %6 = vector.broadcast %cst_5 : f32 to vector<512x128xf32>
    %7 = arith.maximumf %5, %6 : vector<512x128xf32>
    %8 = arith.truncf %7 : vector<512x128xf32> to vector<512x128xbf16>
    %c0_6 = arith.constant 0 : index
    %c0_7 = arith.constant 0 : index
    %9 = vector.load %arg5[%c0_6, %c0_7] : memref<512x128xbf16, #tpu.memory_space<vmem>>, vector<512x128xbf16>
    tpu.vector_store %arg5[%c0_6, %c0_7], %8 {strides = array<i32>} : memref<512x128xbf16, #tpu.memory_space<vmem>>, vector<512x128xbf16>,
    return
  }
  func.func @transform_0(%arg0: i32, %arg1: i32) -> (i32, i32) {
    %c0_i32 = arith.constant 0 : i32
    %c0_i32_0 = arith.constant 0 : i32
    return %arg0, %c0_i32 : i32, i32
  }
  func.func @transform_1(%arg0: i32, %arg1: i32) -> (i32, i32) {
    %c0_i32 = arith.constant 0 : i32
    %c0_i32_0 = arith.constant 0 : i32
    return %c0_i32, %arg1 : i32, i32
  }
  func.func @transform_2(%arg0: i32, %arg1: i32) -> (i32, i32) {
    %c0_i32 = arith.constant 0 : i32
    %c0_i32_0 = arith.constant 0 : i32
    return %c0_i32, %arg1 : i32, i32
  }
  func.func @transform_3(%arg0: i32, %arg1: i32) -> (i32, i32) {
    %c0_i32 = arith.constant 0 : i32
    return %arg0, %arg1 : i32, i32
  }
}

module attributes {stable_mosaic.version = 11 : i64} {
  func.func @_conv3x3_kernel(%arg0: i32, %arg1: i32, %arg2: memref<1x1x18x128xbf16, #tpu.memory_space<vmem>>, %arg3: memref<1x1x18x128xbf16, #tpu.memory_space<vmem>>, %arg4: memref<1x1x18x128xbf16, #tpu.memory_space<vmem>>, %arg5: memref<3x3x128x128xbf16, #tpu.memory_space<vmem>>, %arg6: memref<1x128xf32, #tpu.memory_space<vmem>>, %arg7: memref<1x1x16x128xbf16, #tpu.memory_space<vmem>>) attributes {dimension_semantics = [#tpu.dimension_semantics<parallel>, #tpu.dimension_semantics<parallel>], iteration_bounds = array<i64: 2, 16>, scalar_prefetch = 0 : i64, scratch_operands = 0 : i64, tpu.core_type = #tpu.core_type<tc>, window_params = [{transform_indices = @transform_0, window_bounds = array<i64: 1, 1, 18, 128>}, {transform_indices = @transform_1, window_bounds = array<i64: 1, 1, 18, 128>}, {transform_indices = @transform_2, window_bounds = array<i64: 1, 1, 18, 128>}, {pipeline_mode = #tpu.pipeline_mode<synchronous>, transform_indices = @transform_3, window_bounds = array<i64: 3, 3, 128, 128>}, {pipeline_mode = #tpu.pipeline_mode<synchronous>, transform_indices = @transform_4, window_bounds = array<i64: 1, 128>}, {transform_indices = @transform_5, window_bounds = array<i64: 1, 1, 16, 128>}]} {
    %cst = arith.constant 0.000000e+00 : f32
    %0 = vector.broadcast %cst : f32 to vector<16x128xf32>
    %c0 = arith.constant 0 : index
    %c0_0 = arith.constant 0 : index
    %c0_1 = arith.constant 0 : index
    %c0_2 = arith.constant 0 : index
    %1 = vector.load %arg2[%c0, %c0_0, %c0_1, %c0_2] : memref<1x1x18x128xbf16, #tpu.memory_space<vmem>>, vector<1x1x16x128xbf16>
    %2 = vector.shape_cast %1 : vector<1x1x16x128xbf16> to vector<16x128xbf16>
    %c0_3 = arith.constant 0 : index
    %c0_4 = arith.constant 0 : index
    %c0_5 = arith.constant 0 : index
    %c0_6 = arith.constant 0 : index
    %3 = vector.load %arg5[%c0_3, %c0_4, %c0_5, %c0_6] : memref<3x3x128x128xbf16, #tpu.memory_space<vmem>>, vector<1x1x128x128xbf16>
    %4 = vector.shape_cast %3 : vector<1x1x128x128xbf16> to vector<128x128xbf16>
    %cst_7 = arith.constant dense<0.000000e+00> : vector<16x128xf32>
    %5 = tpu.matmul %2, %4, %cst_7 {dimension_numbers = #tpu.dot_dimension_numbers<[1], [0], [0], [1], [0, 0, 1, 1], [], []>} : vector<16x128xbf16>, vector<128x128xbf16>, vector<16x128xf32> -> vector<16x128xf32>
    %6 = arith.addf %0, %5 : vector<16x128xf32>
    %c0_8 = arith.constant 0 : index
    %c0_9 = arith.constant 0 : index
    %c1 = arith.constant 1 : index
    %c0_10 = arith.constant 0 : index
    %7 = vector.load %arg2[%c0_8, %c0_9, %c1, %c0_10] : memref<1x1x18x128xbf16, #tpu.memory_space<vmem>>, vector<1x1x16x128xbf16>
    %8 = vector.shape_cast %7 : vector<1x1x16x128xbf16> to vector<16x128xbf16>
    %c0_11 = arith.constant 0 : index
    %c1_12 = arith.constant 1 : index
    %c0_13 = arith.constant 0 : index
    %c0_14 = arith.constant 0 : index
    %9 = vector.load %arg5[%c0_11, %c1_12, %c0_13, %c0_14] : memref<3x3x128x128xbf16, #tpu.memory_space<vmem>>, vector<1x1x128x128xbf16>
    %10 = vector.shape_cast %9 : vector<1x1x128x128xbf16> to vector<128x128xbf16>
    %cst_15 = arith.constant dense<0.000000e+00> : vector<16x128xf32>
    %11 = tpu.matmul %8, %10, %cst_15 {dimension_numbers = #tpu.dot_dimension_numbers<[1], [0], [0], [1], [0, 0, 1, 1], [], []>} : vector<16x128xbf16>, vector<128x128xbf16>, vector<16x128xf32> -> vector<16x128xf32>
    %12 = arith.addf %6, %11 : vector<16x128xf32>
    %c0_16 = arith.constant 0 : index
    %c0_17 = arith.constant 0 : index
    %c2 = arith.constant 2 : index
    %c0_18 = arith.constant 0 : index
    %13 = vector.load %arg2[%c0_16, %c0_17, %c2, %c0_18] : memref<1x1x18x128xbf16, #tpu.memory_space<vmem>>, vector<1x1x16x128xbf16>
    %14 = vector.shape_cast %13 : vector<1x1x16x128xbf16> to vector<16x128xbf16>
    %c0_19 = arith.constant 0 : index
    %c2_20 = arith.constant 2 : index
    %c0_21 = arith.constant 0 : index
    %c0_22 = arith.constant 0 : index
    %15 = vector.load %arg5[%c0_19, %c2_20, %c0_21, %c0_22] : memref<3x3x128x128xbf16, #tpu.memory_space<vmem>>, vector<1x1x128x128xbf16>
    %16 = vector.shape_cast %15 : vector<1x1x128x128xbf16> to vector<128x128xbf16>
    %cst_23 = arith.constant dense<0.000000e+00> : vector<16x128xf32>
    %17 = tpu.matmul %14, %16, %cst_23 {dimension_numbers = #tpu.dot_dimension_numbers<[1], [0], [0], [1], [0, 0, 1, 1], [], []>} : vector<16x128xbf16>, vector<128x128xbf16>, vector<16x128xf32> -> vector<16x128xf32>
    %18 = arith.addf %12, %17 : vector<16x128xf32>
    %c0_24 = arith.constant 0 : index
    %c0_25 = arith.constant 0 : index
    %c0_26 = arith.constant 0 : index
    %c0_27 = arith.constant 0 : index
    %19 = vector.load %arg3[%c0_24, %c0_25, %c0_26, %c0_27] : memref<1x1x18x128xbf16, #tpu.memory_space<vmem>>, vector<1x1x16x128xbf16>
    %20 = vector.shape_cast %19 : vector<1x1x16x128xbf16> to vector<16x128xbf16>
    %c1_28 = arith.constant 1 : index
    %c0_29 = arith.constant 0 : index
    %c0_30 = arith.constant 0 : index
    %c0_31 = arith.constant 0 : index
    %21 = vector.load %arg5[%c1_28, %c0_29, %c0_30, %c0_31] : memref<3x3x128x128xbf16, #tpu.memory_space<vmem>>, vector<1x1x128x128xbf16>
    %22 = vector.shape_cast %21 : vector<1x1x128x128xbf16> to vector<128x128xbf16>
    %cst_32 = arith.constant dense<0.000000e+00> : vector<16x128xf32>
    %23 = tpu.matmul %20, %22, %cst_32 {dimension_numbers = #tpu.dot_dimension_numbers<[1], [0], [0], [1], [0, 0, 1, 1], [], []>} : vector<16x128xbf16>, vector<128x128xbf16>, vector<16x128xf32> -> vector<16x128xf32>
    %24 = arith.addf %18, %23 : vector<16x128xf32>
    %c0_33 = arith.constant 0 : index
    %c0_34 = arith.constant 0 : index
    %c1_35 = arith.constant 1 : index
    %c0_36 = arith.constant 0 : index
    %25 = vector.load %arg3[%c0_33, %c0_34, %c1_35, %c0_36] : memref<1x1x18x128xbf16, #tpu.memory_space<vmem>>, vector<1x1x16x128xbf16>
    %26 = vector.shape_cast %25 : vector<1x1x16x128xbf16> to vector<16x128xbf16>
    %c1_37 = arith.constant 1 : index
    %c1_38 = arith.constant 1 : index
    %c0_39 = arith.constant 0 : index
    %c0_40 = arith.constant 0 : index
    %27 = vector.load %arg5[%c1_37, %c1_38, %c0_39, %c0_40] : memref<3x3x128x128xbf16, #tpu.memory_space<vmem>>, vector<1x1x128x128xbf16>
    %28 = vector.shape_cast %27 : vector<1x1x128x128xbf16> to vector<128x128xbf16>
    %cst_41 = arith.constant dense<0.000000e+00> : vector<16x128xf32>
    %29 = tpu.matmul %26, %28, %cst_41 {dimension_numbers = #tpu.dot_dimension_numbers<[1], [0], [0], [1], [0, 0, 1, 1], [], []>} : vector<16x128xbf16>, vector<128x128xbf16>, vector<16x128xf32> -> vector<16x128xf32>
    %30 = arith.addf %24, %29 : vector<16x128xf32>
    %c0_42 = arith.constant 0 : index
    %c0_43 = arith.constant 0 : index
    %c2_44 = arith.constant 2 : index
    %c0_45 = arith.constant 0 : index
    %31 = vector.load %arg3[%c0_42, %c0_43, %c2_44, %c0_45] : memref<1x1x18x128xbf16, #tpu.memory_space<vmem>>, vector<1x1x16x128xbf16>
    %32 = vector.shape_cast %31 : vector<1x1x16x128xbf16> to vector<16x128xbf16>
    %c1_46 = arith.constant 1 : index
    %c2_47 = arith.constant 2 : index
    %c0_48 = arith.constant 0 : index
    %c0_49 = arith.constant 0 : index
    %33 = vector.load %arg5[%c1_46, %c2_47, %c0_48, %c0_49] : memref<3x3x128x128xbf16, #tpu.memory_space<vmem>>, vector<1x1x128x128xbf16>
    %34 = vector.shape_cast %33 : vector<1x1x128x128xbf16> to vector<128x128xbf16>
    %cst_50 = arith.constant dense<0.000000e+00> : vector<16x128xf32>
    %35 = tpu.matmul %32, %34, %cst_50 {dimension_numbers = #tpu.dot_dimension_numbers<[1], [0], [0], [1], [0, 0, 1, 1], [], []>} : vector<16x128xbf16>, vector<128x128xbf16>, vector<16x128xf32> -> vector<16x128xf32>
    %36 = arith.addf %30, %35 : vector<16x128xf32>
    %c0_51 = arith.constant 0 : index
    %c0_52 = arith.constant 0 : index
    %c0_53 = arith.constant 0 : index
    %c0_54 = arith.constant 0 : index
    %37 = vector.load %arg4[%c0_51, %c0_52, %c0_53, %c0_54] : memref<1x1x18x128xbf16, #tpu.memory_space<vmem>>, vector<1x1x16x128xbf16>
    %38 = vector.shape_cast %37 : vector<1x1x16x128xbf16> to vector<16x128xbf16>
    %c2_55 = arith.constant 2 : index
    %c0_56 = arith.constant 0 : index
    %c0_57 = arith.constant 0 : index
    %c0_58 = arith.constant 0 : index
    %39 = vector.load %arg5[%c2_55, %c0_56, %c0_57, %c0_58] : memref<3x3x128x128xbf16, #tpu.memory_space<vmem>>, vector<1x1x128x128xbf16>
    %40 = vector.shape_cast %39 : vector<1x1x128x128xbf16> to vector<128x128xbf16>
    %cst_59 = arith.constant dense<0.000000e+00> : vector<16x128xf32>
    %41 = tpu.matmul %38, %40, %cst_59 {dimension_numbers = #tpu.dot_dimension_numbers<[1], [0], [0], [1], [0, 0, 1, 1], [], []>} : vector<16x128xbf16>, vector<128x128xbf16>, vector<16x128xf32> -> vector<16x128xf32>
    %42 = arith.addf %36, %41 : vector<16x128xf32>
    %c0_60 = arith.constant 0 : index
    %c0_61 = arith.constant 0 : index
    %c1_62 = arith.constant 1 : index
    %c0_63 = arith.constant 0 : index
    %43 = vector.load %arg4[%c0_60, %c0_61, %c1_62, %c0_63] : memref<1x1x18x128xbf16, #tpu.memory_space<vmem>>, vector<1x1x16x128xbf16>
    %44 = vector.shape_cast %43 : vector<1x1x16x128xbf16> to vector<16x128xbf16>
    %c2_64 = arith.constant 2 : index
    %c1_65 = arith.constant 1 : index
    %c0_66 = arith.constant 0 : index
    %c0_67 = arith.constant 0 : index
    %45 = vector.load %arg5[%c2_64, %c1_65, %c0_66, %c0_67] : memref<3x3x128x128xbf16, #tpu.memory_space<vmem>>, vector<1x1x128x128xbf16>
    %46 = vector.shape_cast %45 : vector<1x1x128x128xbf16> to vector<128x128xbf16>
    %cst_68 = arith.constant dense<0.000000e+00> : vector<16x128xf32>
    %47 = tpu.matmul %44, %46, %cst_68 {dimension_numbers = #tpu.dot_dimension_numbers<[1], [0], [0], [1], [0, 0, 1, 1], [], []>} : vector<16x128xbf16>, vector<128x128xbf16>, vector<16x128xf32> -> vector<16x128xf32>
    %48 = arith.addf %42, %47 : vector<16x128xf32>
    %c0_69 = arith.constant 0 : index
    %c0_70 = arith.constant 0 : index
    %c2_71 = arith.constant 2 : index
    %c0_72 = arith.constant 0 : index
    %49 = vector.load %arg4[%c0_69, %c0_70, %c2_71, %c0_72] : memref<1x1x18x128xbf16, #tpu.memory_space<vmem>>, vector<1x1x16x128xbf16>
    %50 = vector.shape_cast %49 : vector<1x1x16x128xbf16> to vector<16x128xbf16>
    %c2_73 = arith.constant 2 : index
    %c2_74 = arith.constant 2 : index
    %c0_75 = arith.constant 0 : index
    %c0_76 = arith.constant 0 : index
    %51 = vector.load %arg5[%c2_73, %c2_74, %c0_75, %c0_76] : memref<3x3x128x128xbf16, #tpu.memory_space<vmem>>, vector<1x1x128x128xbf16>
    %52 = vector.shape_cast %51 : vector<1x1x128x128xbf16> to vector<128x128xbf16>
    %cst_77 = arith.constant dense<0.000000e+00> : vector<16x128xf32>
    %53 = tpu.matmul %50, %52, %cst_77 {dimension_numbers = #tpu.dot_dimension_numbers<[1], [0], [0], [1], [0, 0, 1, 1], [], []>} : vector<16x128xbf16>, vector<128x128xbf16>, vector<16x128xf32> -> vector<16x128xf32>
    %54 = arith.addf %48, %53 : vector<16x128xf32>
    %c0_78 = arith.constant 0 : index
    %c0_79 = arith.constant 0 : index
    %55 = vector.load %arg6[%c0_78, %c0_79] : memref<1x128xf32, #tpu.memory_space<vmem>>, vector<1x128xf32>
    %56 = vector.broadcast %55 : vector<1x128xf32> to vector<16x128xf32>
    %57 = arith.addf %54, %56 : vector<16x128xf32>
    %cst_80 = arith.constant 0.000000e+00 : f32
    %58 = vector.broadcast %cst_80 : f32 to vector<16x128xf32>
    %59 = arith.maximumf %57, %58 : vector<16x128xf32>
    %60 = arith.truncf %59 : vector<16x128xf32> to vector<16x128xbf16>
    %c0_81 = arith.constant 0 : index
    %c0_82 = arith.constant 0 : index
    %c0_83 = arith.constant 0 : index
    %c0_84 = arith.constant 0 : index
    %61 = vector.load %arg7[%c0_81, %c0_82, %c0_83, %c0_84] : memref<1x1x16x128xbf16, #tpu.memory_space<vmem>>, vector<1x1x16x128xbf16>
    %62 = vector.shape_cast %61 : vector<1x1x16x128xbf16> to vector<16x128xbf16>
    %63 = vector.shape_cast %60 : vector<16x128xbf16> to vector<1x1x16x128xbf16>
    tpu.vector_store %arg7[%c0_81, %c0_82, %c0_83, %c0_84], %63 {strides = array<i32>} : memref<1x1x16x128xbf16, #tpu.memory_space<vmem>>, vector<1x1x16x128xbf16>,
    return
  }
  func.func @transform_0(%arg0: i32, %arg1: i32) -> (i32, i32, i32, i32) {
    %c1_i32 = arith.constant 1 : i32
    %0 = arith.muli %arg1, %c1_i32 : i32
    %c0_i32 = arith.constant 0 : i32
    %1 = arith.addi %0, %c0_i32 : i32
    %c0_i32_0 = arith.constant 0 : i32
    %c0_i32_1 = arith.constant 0 : i32
    %c0_i32_2 = arith.constant 0 : i32
    return %arg0, %1, %c0_i32_0, %c0_i32_1 : i32, i32, i32, i32
  }
  func.func @transform_1(%arg0: i32, %arg1: i32) -> (i32, i32, i32, i32) {
    %c1_i32 = arith.constant 1 : i32
    %0 = arith.muli %arg1, %c1_i32 : i32
    %c1_i32_0 = arith.constant 1 : i32
    %1 = arith.addi %0, %c1_i32_0 : i32
    %c0_i32 = arith.constant 0 : i32
    %c0_i32_1 = arith.constant 0 : i32
    %c0_i32_2 = arith.constant 0 : i32
    return %arg0, %1, %c0_i32, %c0_i32_1 : i32, i32, i32, i32
  }
  func.func @transform_2(%arg0: i32, %arg1: i32) -> (i32, i32, i32, i32) {
    %c1_i32 = arith.constant 1 : i32
    %0 = arith.muli %arg1, %c1_i32 : i32
    %c2_i32 = arith.constant 2 : i32
    %1 = arith.addi %0, %c2_i32 : i32
    %c0_i32 = arith.constant 0 : i32
    %c0_i32_0 = arith.constant 0 : i32
    %c0_i32_1 = arith.constant 0 : i32
    return %arg0, %1, %c0_i32, %c0_i32_0 : i32, i32, i32, i32
  }
  func.func @transform_3(%arg0: i32, %arg1: i32) -> (i32, i32, i32, i32) {
    %c0_i32 = arith.constant 0 : i32
    %c0_i32_0 = arith.constant 0 : i32
    %c0_i32_1 = arith.constant 0 : i32
    %c0_i32_2 = arith.constant 0 : i32
    %c0_i32_3 = arith.constant 0 : i32
    return %c0_i32, %c0_i32_0, %c0_i32_1, %c0_i32_2 : i32, i32, i32, i32
  }
  func.func @transform_4(%arg0: i32, %arg1: i32) -> (i32, i32) {
    %c0_i32 = arith.constant 0 : i32
    %c0_i32_0 = arith.constant 0 : i32
    %c0_i32_1 = arith.constant 0 : i32
    return %c0_i32, %c0_i32_0 : i32, i32
  }
  func.func @transform_5(%arg0: i32, %arg1: i32) -> (i32, i32, i32, i32) {
    %c0_i32 = arith.constant 0 : i32
    %c0_i32_0 = arith.constant 0 : i32
    %c0_i32_1 = arith.constant 0 : i32
    return %arg0, %arg1, %c0_i32, %c0_i32_0 : i32, i32, i32, i32
  }
}

module attributes {stable_mosaic.version = 11 : i64} {
  func.func @_mm_bias_single_kernel(%arg0: i32, %arg1: i32, %arg2: memref<512x128xbf16, #tpu.memory_space<vmem>>, %arg3: memref<128x128xbf16, #tpu.memory_space<vmem>>, %arg4: memref<1x128xf32, #tpu.memory_space<vmem>>, %arg5: memref<512x128xf32, #tpu.memory_space<vmem>>) attributes {dimension_semantics = [#tpu.dimension_semantics<parallel>, #tpu.dimension_semantics<parallel>], iteration_bounds = array<i64: 1, 1>, scalar_prefetch = 0 : i64, scratch_operands = 0 : i64, tpu.core_type = #tpu.core_type<tc>, window_params = [{transform_indices = @transform_0, window_bounds = array<i64: 512, 128>}, {transform_indices = @transform_1, window_bounds = array<i64: 128, 128>}, {transform_indices = @transform_2, window_bounds = array<i64: 1, 128>}, {transform_indices = @transform_3, window_bounds = array<i64: 512, 128>}]} {
    %c0 = arith.constant 0 : index
    %c0_0 = arith.constant 0 : index
    %0 = vector.load %arg2[%c0, %c0_0] : memref<512x128xbf16, #tpu.memory_space<vmem>>, vector<512x128xbf16>
    %c0_1 = arith.constant 0 : index
    %c0_2 = arith.constant 0 : index
    %1 = vector.load %arg3[%c0_1, %c0_2] : memref<128x128xbf16, #tpu.memory_space<vmem>>, vector<128x128xbf16>
    %cst = arith.constant dense<0.000000e+00> : vector<512x128xf32>
    %2 = tpu.matmul %0, %1, %cst {dimension_numbers = #tpu.dot_dimension_numbers<[1], [0], [0], [1], [0, 0, 1, 1], [], []>} : vector<512x128xbf16>, vector<128x128xbf16>, vector<512x128xf32> -> vector<512x128xf32>
    %c0_3 = arith.constant 0 : index
    %c0_4 = arith.constant 0 : index
    %3 = vector.load %arg4[%c0_3, %c0_4] : memref<1x128xf32, #tpu.memory_space<vmem>>, vector<1x128xf32>
    %4 = vector.broadcast %3 : vector<1x128xf32> to vector<512x128xf32>
    %5 = arith.addf %2, %4 : vector<512x128xf32>
    %c0_5 = arith.constant 0 : index
    %c0_6 = arith.constant 0 : index
    %6 = vector.load %arg5[%c0_5, %c0_6] : memref<512x128xf32, #tpu.memory_space<vmem>>, vector<512x128xf32>
    tpu.vector_store %arg5[%c0_5, %c0_6], %5 {strides = array<i32>} : memref<512x128xf32, #tpu.memory_space<vmem>>, vector<512x128xf32>,
    return
  }
  func.func @transform_0(%arg0: i32, %arg1: i32) -> (i32, i32) {
    %c0_i32 = arith.constant 0 : i32
    %c0_i32_0 = arith.constant 0 : i32
    return %arg0, %c0_i32 : i32, i32
  }
  func.func @transform_1(%arg0: i32, %arg1: i32) -> (i32, i32) {
    %c0_i32 = arith.constant 0 : i32
    %c0_i32_0 = arith.constant 0 : i32
    return %c0_i32, %arg1 : i32, i32
  }
  func.func @transform_2(%arg0: i32, %arg1: i32) -> (i32, i32) {
    %c0_i32 = arith.constant 0 : i32
    %c0_i32_0 = arith.constant 0 : i32
    return %c0_i32, %arg1 : i32, i32
  }
  func.func @transform_3(%arg0: i32, %arg1: i32) -> (i32, i32) {
    %c0_i32 = arith.constant 0 : i32
    return %arg0, %arg1 : i32, i32
  }
}

module attributes {stable_mosaic.version = 11 : i64} {
  func.func @_mm_bias_res_relu_single_kernel(%arg0: i32, %arg1: i32, %arg2: memref<512x128xbf16, #tpu.memory_space<vmem>>, %arg3: memref<128x128xbf16, #tpu.memory_space<vmem>>, %arg4: memref<1x128xf32, #tpu.memory_space<vmem>>, %arg5: memref<512x128xf32, #tpu.memory_space<vmem>>, %arg6: memref<512x128xf32, #tpu.memory_space<vmem>>) attributes {dimension_semantics = [#tpu.dimension_semantics<parallel>, #tpu.dimension_semantics<parallel>], iteration_bounds = array<i64: 1, 1>, scalar_prefetch = 0 : i64, scratch_operands = 0 : i64, tpu.core_type = #tpu.core_type<tc>, window_params = [{transform_indices = @transform_0, window_bounds = array<i64: 512, 128>}, {transform_indices = @transform_1, window_bounds = array<i64: 128, 128>}, {transform_indices = @transform_2, window_bounds = array<i64: 1, 128>}, {transform_indices = @transform_3, window_bounds = array<i64: 512, 128>}, {transform_indices = @transform_4, window_bounds = array<i64: 512, 128>}]} {
    %c0 = arith.constant 0 : index
    %c0_0 = arith.constant 0 : index
    %0 = vector.load %arg2[%c0, %c0_0] : memref<512x128xbf16, #tpu.memory_space<vmem>>, vector<512x128xbf16>
    %c0_1 = arith.constant 0 : index
    %c0_2 = arith.constant 0 : index
    %1 = vector.load %arg3[%c0_1, %c0_2] : memref<128x128xbf16, #tpu.memory_space<vmem>>, vector<128x128xbf16>
    %cst = arith.constant dense<0.000000e+00> : vector<512x128xf32>
    %2 = tpu.matmul %0, %1, %cst {dimension_numbers = #tpu.dot_dimension_numbers<[1], [0], [0], [1], [0, 0, 1, 1], [], []>} : vector<512x128xbf16>, vector<128x128xbf16>, vector<512x128xf32> -> vector<512x128xf32>
    %c0_3 = arith.constant 0 : index
    %c0_4 = arith.constant 0 : index
    %3 = vector.load %arg4[%c0_3, %c0_4] : memref<1x128xf32, #tpu.memory_space<vmem>>, vector<1x128xf32>
    %4 = vector.broadcast %3 : vector<1x128xf32> to vector<512x128xf32>
    %5 = arith.addf %2, %4 : vector<512x128xf32>
    %c0_5 = arith.constant 0 : index
    %c0_6 = arith.constant 0 : index
    %6 = vector.load %arg5[%c0_5, %c0_6] : memref<512x128xf32, #tpu.memory_space<vmem>>, vector<512x128xf32>
    %7 = arith.addf %5, %6 : vector<512x128xf32>
    %cst_7 = arith.constant 0.000000e+00 : f32
    %8 = vector.broadcast %cst_7 : f32 to vector<512x128xf32>
    %9 = arith.maximumf %7, %8 : vector<512x128xf32>
    %c0_8 = arith.constant 0 : index
    %c0_9 = arith.constant 0 : index
    %10 = vector.load %arg6[%c0_8, %c0_9] : memref<512x128xf32, #tpu.memory_space<vmem>>, vector<512x128xf32>
    tpu.vector_store %arg6[%c0_8, %c0_9], %9 {strides = array<i32>} : memref<512x128xf32, #tpu.memory_space<vmem>>, vector<512x128xf32>,
    return
  }
  func.func @transform_0(%arg0: i32, %arg1: i32) -> (i32, i32) {
    %c0_i32 = arith.constant 0 : i32
    %c0_i32_0 = arith.constant 0 : i32
    return %arg0, %c0_i32 : i32, i32
  }
  func.func @transform_1(%arg0: i32, %arg1: i32) -> (i32, i32) {
    %c0_i32 = arith.constant 0 : i32
    %c0_i32_0 = arith.constant 0 : i32
    return %c0_i32, %arg1 : i32, i32
  }
  func.func @transform_2(%arg0: i32, %arg1: i32) -> (i32, i32) {
    %c0_i32 = arith.constant 0 : i32
    %c0_i32_0 = arith.constant 0 : i32
    return %c0_i32, %arg1 : i32, i32
  }
  func.func @transform_3(%arg0: i32, %arg1: i32) -> (i32, i32) {
    %c0_i32 = arith.constant 0 : i32
    return %arg0, %arg1 : i32, i32
  }
  func.func @transform_4(%arg0: i32, %arg1: i32) -> (i32, i32) {
    %c0_i32 = arith.constant 0 : i32
    return %arg0, %arg1 : i32, i32
  }
}

</mosaic_0001>

<llo_original>
// kernel: bottleneck_forward.4
$region0: #{bottleneck_forward.4}
  #allocation0 [shape = 'u32[]', space=smem, size = 0x4, offset = 0x4, fixed_abs, tag = 'smem constant byte address 0x4 - core index']
  #allocation1 [shape = 'u32[144,128]{1,0:T(1,128)}', space=vmem, size = 0x12000, scoped, tag = 'internal scratch']
  %s0 = inlined_call_operand.vmem [shape: bf16[512,128], index: 0, kind: input, shape index: {}]
  %s1 = inlined_call_operand.vmem [shape: bf16[128,128], index: 1, kind: input, shape index: {}]
  %s2 = inlined_call_operand.vmem [shape: f32[1,128], index: 2, kind: input, shape index: {}]
  %s3 = inlined_call_operand.vmem [shape: bf16[512,128], index: 3, kind: output, shape index: {}]
  %s4 = sld [smem:[#allocation0]]
  $region22: #{bottleneck_forward.4} parent=0
    _
  %s6 = ssub.s32 1, %s4
  %s7 = scalar_select 0, %s6, %s4
  // Predicated region
  $region2: #{bottleneck_forward.4} parent=0 // pred_check
    _
  $region3: #{bottleneck_forward.4} parent=0 // pred_check_branch
    %9 = sbr.rel (0) target = $region5
  $region4: #{bottleneck_forward.4} parent=0 // pred_region
    _
  $region5: #{bottleneck_forward.4} parent=0 // pred_fallthru
    _
  // Predicated region
  $region6: #{bottleneck_forward.4} parent=0 // pred_check
    _
  $region7: #{bottleneck_forward.4} parent=0 // pred_check_branch
    %11 = sbr.rel (0) target = $region9
  $region8: #{bottleneck_forward.4} parent=0 // pred_region
    _
  $region9: #{bottleneck_forward.4} parent=0 // pred_fallthru
    _
  // Predicated region
  $region10: #{bottleneck_forward.4} parent=0 // pred_check
    _
  $region11: #{bottleneck_forward.4} parent=0 // pred_check_branch
    %13 = sbr.rel (0) target = $region13
  $region12: #{bottleneck_forward.4} parent=0 // pred_region
    _
  $region13: #{bottleneck_forward.4} parent=0 // pred_fallthru
    _
  %v15 = vld [vmem:[%s0] sm:$0xf]
  %v16 = vld [vmem:[%s0 + $0x4] sm:$0xf]
  %v17 = vld [vmem:[%s0 + $0x8] sm:$0xf]
  %v18 = vld [vmem:[%s0 + $0xc] sm:$0xf]
  %v19 = vld [vmem:[%s0 + $0x10] sm:$0xf]
  %v20 = vld [vmem:[%s0 + $0x14] sm:$0xf]
  %v21 = vld [vmem:[%s0 + $0x18] sm:$0xf]
  %v22 = vld [vmem:[%s0 + $0x1c] sm:$0xf]
  %v23 = vld [vmem:[%s0 + $0x20] sm:$0xf]
  %v24 = vld [vmem:[%s0 + $0x24] sm:$0xf]
  %v25 = vld [vmem:[%s0 + $0x28] sm:$0xf]
  %v26 = vld [vmem:[%s0 + $0x2c] sm:$0xf]
  %v27 = vld [vmem:[%s0 + $0x30] sm:$0xf]
  %v28 = vld [vmem:[%s0 + $0x34] sm:$0xf]
  %v29 = vld [vmem:[%s0 + $0x38] sm:$0xf]
  %v30 = vld [vmem:[%s0 + $0x3c] sm:$0xf]
  %v31 = vld [vmem:[%s0 + $0x40] sm:$0xf]
  %v32 = vld [vmem:[%s0 + $0x44] sm:$0xf]
  %v33 = vld [vmem:[%s0 + $0x48] sm:$0xf]
  %v34 = vld [vmem:[%s0 + $0x4c] sm:$0xf]
  %v35 = vld [vmem:[%s0 + $0x50] sm:$0xf]
  %v36 = vld [vmem:[%s0 + $0x54] sm:$0xf]
  %v37 = vld [vmem:[%s0 + $0x58] sm:$0xf]
  %v38 = vld [vmem:[%s0 + $0x5c] sm:$0xf]
  %v39 = vld [vmem:[%s0 + $0x60] sm:$0xf]
  %v40 = vld [vmem:[%s0 + $0x64] sm:$0xf]
  %v41 = vld [vmem:[%s0 + $0x68] sm:$0xf]
  %v42 = vld [vmem:[%s0 + $0x6c] sm:$0xf]
  %v43 = vld [vmem:[%s0 + $0x70] sm:$0xf]
  %v44 = vld [vmem:[%s0 + $0x74] sm:$0xf]
  %v45 = vld [vmem:[%s0 + $0x78] sm:$0xf]
  %v46 = vld [vmem:[%s0 + $0x7c] sm:$0xf]
  %v47 = vld [vmem:[%s0 + $0x80] sm:$0xf]
  %v48 = vld [vmem:[%s0 + $0x84] sm:$0xf]
  %v49 = vld [vmem:[%s0 + $0x88] sm:$0xf]
  %v50 = vld [vmem:[%s0 + $0x8c] sm:$0xf]
  %v51 = vld [vmem:[%s0 + $0x90] sm:$0xf]
  %v52 = vld [vmem:[%s0 + $0x94] sm:$0xf]
  %v53 = vld [vmem:[%s0 + $0x98] sm:$0xf]
  %v54 = vld [vmem:[%s0 + $0x9c] sm:$0xf]
  %v55 = vld [vmem:[%s0 + $0xa0] sm:$0xf]
  %v56 = vld [vmem:[%s0 + $0xa4] sm:$0xf]
  %v57 = vld [vmem:[%s0 + $0xa8] sm:$0xf]
  %v58 = vld [vmem:[%s0 + $0xac] sm:$0xf]
  %v59 = vld [vmem:[%s0 + $0xb0] sm:$0xf]
  %v60 = vld [vmem:[%s0 + $0xb4] sm:$0xf]
  %v61 = vld [vmem:[%s0 + $0xb8] sm:$0xf]
  %v62 = vld [vmem:[%s0 + $0xbc] sm:$0xf]
  %v63 = vld [vmem:[%s0 + $0xc0] sm:$0xf]
  %v64 = vld [vmem:[%s0 + $0xc4] sm:$0xf]
  %v65 = vld [vmem:[%s0 + $0xc8] sm:$0xf]
  %v66 = vld [vmem:[%s0 + $0xcc] sm:$0xf]
  %v67 = vld [vmem:[%s0 + $0xd0] sm:$0xf]
  %v68 = vld [vmem:[%s0 + $0xd4] sm:$0xf]
  %v69 = vld [vmem:[%s0 + $0xd8] sm:$0xf]
  %v70 = vld [vmem:[%s0 + $0xdc] sm:$0xf]
  %v71 = vld [vmem:[%s0 + $0xe0] sm:$0xf]
  %v72 = vld [vmem:[%s0 + $0xe4] sm:$0xf]
  %v73 = vld [vmem:[%s0 + $0xe8] sm:$0xf]
  %v74 = vld [vmem:[%s0 + $0xec] sm:$0xf]
  %v75 = vld [vmem:[%s0 + $0xf0] sm:$0xf]
  %v76 = vld [vmem:[%s0 + $0xf4] sm:$0xf]
  %v77 = vld [vmem:[%s0 + $0xf8] sm:$0xf]
  %v78 = vld [vmem:[%s0 + $0xfc] sm:$0xf]
  %v79 = vld [vmem:[%s1] sm:$0xf]
  %v80 = vld [vmem:[%s1 + $0x4] sm:$0xf]
  %v81 = vld [vmem:[%s1 + $0x8] sm:$0xf]
  %v82 = vld [vmem:[%s1 + $0xc] sm:$0xf]
  %v83 = vld [vmem:[%s1 + $0x10] sm:$0xf]
  %v84 = vld [vmem:[%s1 + $0x14] sm:$0xf]
  %v85 = vld [vmem:[%s1 + $0x18] sm:$0xf]
  %v86 = vld [vmem:[%s1 + $0x1c] sm:$0xf]
  %v87 = vld [vmem:[%s1 + $0x20] sm:$0xf]
  %v88 = vld [vmem:[%s1 + $0x24] sm:$0xf]
  %v89 = vld [vmem:[%s1 + $0x28] sm:$0xf]
  %v90 = vld [vmem:[%s1 + $0x2c] sm:$0xf]
  %v91 = vld [vmem:[%s1 + $0x30] sm:$0xf]
  %v92 = vld [vmem:[%s1 + $0x34] sm:$0xf]
  %v93 = vld [vmem:[%s1 + $0x38] sm:$0xf]
  %v94 = vld [vmem:[%s1 + $0x3c] sm:$0xf]
  %v95 = vld [vmem:[%s2] sm:$0x1]
  %v97 = vlaneseq
  %v98 = vshrl.u32 %v97, 7
  %v99 = vsub.s32 0, %v98
  %v100 = vrot.slane %v95, %v99
  %v166 = vunpack.c.l.b16 %v15
  %v167 = vunpack.c.l.b16 %v16
  %v168 = vunpack.c.l.b16 %v17
  %v169 = vunpack.c.l.b16 %v18
  %v170 = vunpack.c.l.b16 %v19
  %v171 = vunpack.c.l.b16 %v20
  %v172 = vunpack.c.l.b16 %v21
  %v173 = vunpack.c.l.b16 %v22
  %v174 = vunpack.c.l.b16 %v23
  %v175 = vunpack.c.l.b16 %v24
  %v176 = vunpack.c.l.b16 %v25
  %v177 = vunpack.c.l.b16 %v26
  %v178 = vunpack.c.l.b16 %v27
  %v179 = vunpack.c.l.b16 %v28
  %v180 = vunpack.c.l.b16 %v29
  %v181 = vunpack.c.l.b16 %v30
  %v182 = vunpack.c.l.b16 %v31
  %v183 = vunpack.c.l.b16 %v32
  %v184 = vunpack.c.l.b16 %v33
  %v185 = vunpack.c.l.b16 %v34
  %v186 = vunpack.c.l.b16 %v35
  %v187 = vunpack.c.l.b16 %v36
  %v188 = vunpack.c.l.b16 %v37
  %v189 = vunpack.c.l.b16 %v38
  %v190 = vunpack.c.l.b16 %v39
  %v191 = vunpack.c.l.b16 %v40
  %v192 = vunpack.c.l.b16 %v41
  %v193 = vunpack.c.l.b16 %v42
  %v194 = vunpack.c.l.b16 %v43
  %v195 = vunpack.c.l.b16 %v44
  %v196 = vunpack.c.l.b16 %v45
  %v197 = vunpack.c.l.b16 %v46
  %v198 = vunpack.c.l.b16 %v47
  %v199 = vunpack.c.l.b16 %v48
  %v200 = vunpack.c.l.b16 %v49
  %v201 = vunpack.c.l.b16 %v50
  %v202 = vunpack.c.l.b16 %v51
  %v203 = vunpack.c.l.b16 %v52
  %v204 = vunpack.c.l.b16 %v53
  %v205 = vunpack.c.l.b16 %v54
  %v206 = vunpack.c.l.b16 %v55
  %v207 = vunpack.c.l.b16 %v56
  %v208 = vunpack.c.l.b16 %v57
  %v209 = vunpack.c.l.b16 %v58
  %v210 = vunpack.c.l.b16 %v59
  %v211 = vunpack.c.l.b16 %v60
  %v212 = vunpack.c.l.b16 %v61
  %v213 = vunpack.c.l.b16 %v62
  %v214 = vunpack.c.l.b16 %v63
  %v215 = vunpack.c.l.b16 %v64
  %v216 = vunpack.c.l.b16 %v65
  %v217 = vunpack.c.l.b16 %v66
  %v218 = vunpack.c.l.b16 %v67
  %v219 = vunpack.c.l.b16 %v68
  %v220 = vunpack.c.l.b16 %v69
  %v221 = vunpack.c.l.b16 %v70
  %v222 = vunpack.c.l.b16 %v71
  %v223 = vunpack.c.l.b16 %v72
  %v224 = vunpack.c.l.b16 %v73
  %v225 = vunpack.c.l.b16 %v74
  %v226 = vunpack.c.l.b16 %v75
  %v227 = vunpack.c.l.b16 %v76
  %v228 = vunpack.c.l.b16 %v77
  %v229 = vunpack.c.l.b16 %v78
  %v230 = vpack.c.b16 %v167, %v166
  %v231 = vpack.c.b16 %v169, %v168
  %v232 = vpack.c.b16 %v171, %v170
  %v233 = vpack.c.b16 %v173, %v172
  %v234 = vpack.c.b16 %v175, %v174
  %v235 = vpack.c.b16 %v177, %v176
  %v236 = vpack.c.b16 %v179, %v178
  %v237 = vpack.c.b16 %v181, %v180
  %v238 = vpack.c.b16 %v183, %v182
  %v239 = vpack.c.b16 %v185, %v184
  %v240 = vpack.c.b16 %v187, %v186
  %v241 = vpack.c.b16 %v189, %v188
  %v242 = vpack.c.b16 %v191, %v190
  %v243 = vpack.c.b16 %v193, %v192
  %v244 = vpack.c.b16 %v195, %v194
  %v245 = vpack.c.b16 %v197, %v196
  %v246 = vpack.c.b16 %v199, %v198
  %v247 = vpack.c.b16 %v201, %v200
  %v248 = vpack.c.b16 %v203, %v202
  %v249 = vpack.c.b16 %v205, %v204
  %v250 = vpack.c.b16 %v207, %v206
  %v251 = vpack.c.b16 %v209, %v208
  %v252 = vpack.c.b16 %v211, %v210
  %v253 = vpack.c.b16 %v213, %v212
  %v254 = vpack.c.b16 %v215, %v214
  %v255 = vpack.c.b16 %v217, %v216
  %v256 = vpack.c.b16 %v219, %v218
  %v257 = vpack.c.b16 %v221, %v220
  %v258 = vpack.c.b16 %v223, %v222
  %v259 = vpack.c.b16 %v225, %v224
  %v260 = vpack.c.b16 %v227, %v226
  %v261 = vpack.c.b16 %v229, %v228
  %v310 = vunpack.c.l.b16 %v79
  %v311 = vunpack.c.l.b16 %v80
  %v312 = vunpack.c.l.b16 %v81
  %v313 = vunpack.c.l.b16 %v82
  %v314 = vunpack.c.l.b16 %v83
  %v315 = vunpack.c.l.b16 %v84
  %v316 = vunpack.c.l.b16 %v85
  %v317 = vunpack.c.l.b16 %v86
  %v318 = vunpack.c.l.b16 %v87
  %v319 = vunpack.c.l.b16 %v88
  %v320 = vunpack.c.l.b16 %v89
  %v321 = vunpack.c.l.b16 %v90
  %v322 = vunpack.c.l.b16 %v91
  %v323 = vunpack.c.l.b16 %v92
  %v324 = vunpack.c.l.b16 %v93
  %v325 = vunpack.c.l.b16 %v94
  %v326 = vpack.c.b16 %v311, %v310
  %v327 = vpack.c.b16 %v313, %v312
  %v328 = vpack.c.b16 %v315, %v314
  %v329 = vpack.c.b16 %v317, %v316
  %v330 = vpack.c.b16 %v319, %v318
  %v331 = vpack.c.b16 %v321, %v320
  %v332 = vpack.c.b16 %v323, %v322
  %v333 = vpack.c.b16 %v325, %v324
  %342 = vmatprep.subr.bf16.mxu0 0
  %343 = vmatpush1.bf16.msra.mxu0 %v326
  %344 = vmatprep.subr.bf16.mxu0 0
  %345 = vmatpush1.bf16.msra.mxu0 %v327
  %346 = vmatprep.subr.bf16.mxu0 0
  %347 = vmatpush1.bf16.msra.mxu0 %v328
  %348 = vmatprep.subr.bf16.mxu0 0
  %349 = vmatpush1.bf16.msra.mxu0 %v329
  %350 = vmatprep.subr.bf16.mxu0 0
  %351 = vmatpush1.bf16.msra.mxu0 %v330
  %352 = vmatprep.subr.bf16.mxu0 0
  %353 = vmatpush1.bf16.msra.mxu0 %v331
  %354 = vmatprep.subr.bf16.mxu0 0
  %355 = vmatpush1.bf16.msra.mxu0 %v332
  %356 = vmatprep.subr.bf16.mxu0 0
  %357 = vmatpush1.bf16.msra.mxu0 %v333
  %358 = vmatprep.subr.bf16.mxu0 0
  %359 = vmatpush1.bf16.msra.mxu0 0
  %360 = vmatprep.subr.bf16.mxu0 0
  %361 = vmatpush1.bf16.msra.mxu0 0
  %362 = vmatprep.subr.bf16.mxu0 0
  %363 = vmatpush1.bf16.msra.mxu0 0
  %364 = vmatprep.subr.bf16.mxu0 0
  %365 = vmatpush1.bf16.msra.mxu0 0
  %366 = vmatprep.subr.bf16.mxu0 0
  %367 = vmatpush1.bf16.msra.mxu0 0
  %368 = vmatprep.subr.bf16.mxu0 0
  %369 = vmatpush1.bf16.msra.mxu0 0
  %370 = vmatprep.subr.bf16.mxu0 0
  %371 = vmatpush1.bf16.msra.mxu0 0
  %372 = vmatprep.subr.bf16.mxu0 0
  %373 = vmatpush1.bf16.msra.mxu0 0
  %374 = vmatprep.mubr.bf16.mxu0 0
  %375 = vmatmul.mubr.bf16.gmra.mrb[0].mxu0 %v230
  %v376 = vpop.f32.mrb[0].mxu0
  %v377 = vadd.f32 %v100, %v376
  %v378 = vpop.f32.mrb[0].mxu0
  %v379 = vpop.f32.mrb[0].mxu0
  %v380 = vadd.f32 %v100, %v379
  %v381 = vpop.f32.mrb[0].mxu0
  %382 = vmatprep.mubr.bf16.mxu0 0
  %383 = vmatmul.mubr.bf16.gmra.mrb[0].mxu0 %v231
  %v384 = vpop.f32.mrb[0].mxu0
  %v385 = vadd.f32 %v100, %v384
  %v386 = vpop.f32.mrb[0].mxu0
  %v387 = vpop.f32.mrb[0].mxu0
  %v388 = vadd.f32 %v100, %v387
  %v389 = vpop.f32.mrb[0].mxu0
  %390 = vmatprep.mubr.bf16.mxu0 0
  %391 = vmatmul.mubr.bf16.gmra.mrb[0].mxu0 %v232
  %v392 = vpop.f32.mrb[0].mxu0
  %v393 = vadd.f32 %v100, %v392
  %v394 = vpop.f32.mrb[0].mxu0
  %v395 = vpop.f32.mrb[0].mxu0
  %v396 = vadd.f32 %v100, %v395
  %v397 = vpop.f32.mrb[0].mxu0
  %398 = vmatprep.mubr.bf16.mxu0 0
  %399 = vmatmul.mubr.bf16.gmra.mrb[0].mxu0 %v233
  %v400 = vpop.f32.mrb[0].mxu0
  %v401 = vadd.f32 %v100, %v400
  %v402 = vpop.f32.mrb[0].mxu0
  %v403 = vpop.f32.mrb[0].mxu0
  %v404 = vadd.f32 %v100, %v403
  %v405 = vpop.f32.mrb[0].mxu0
  %406 = vmatprep.mubr.bf16.mxu0 0
  %407 = vmatmul.mubr.bf16.gmra.mrb[0].mxu0 %v234
  %v408 = vpop.f32.mrb[0].mxu0
  %v409 = vadd.f32 %v100, %v408
  %v410 = vpop.f32.mrb[0].mxu0
  %v411 = vpop.f32.mrb[0].mxu0
  %v412 = vadd.f32 %v100, %v411
  %v413 = vpop.f32.mrb[0].mxu0
  %414 = vmatprep.mubr.bf16.mxu0 0
  %415 = vmatmul.mubr.bf16.gmra.mrb[0].mxu0 %v235
  %v416 = vpop.f32.mrb[0].mxu0
  %v417 = vadd.f32 %v100, %v416
  %v418 = vpop.f32.mrb[0].mxu0
  %v419 = vpop.f32.mrb[0].mxu0
  %v420 = vadd.f32 %v100, %v419
  %v421 = vpop.f32.mrb[0].mxu0
  %422 = vmatprep.mubr.bf16.mxu0 0
  %423 = vmatmul.mubr.bf16.gmra.mrb[0].mxu0 %v236
  %v424 = vpop.f32.mrb[0].mxu0
  %v425 = vadd.f32 %v100, %v424
  %v426 = vpop.f32.mrb[0].mxu0
  %v427 = vpop.f32.mrb[0].mxu0
  %v428 = vadd.f32 %v100, %v427
  %v429 = vpop.f32.mrb[0].mxu0
  %430 = vmatprep.mubr.bf16.mxu0 0
  %431 = vmatmul.mubr.bf16.gmra.mrb[0].mxu0 %v237
  %v432 = vpop.f32.mrb[0].mxu0
  %v433 = vadd.f32 %v100, %v432
  %v434 = vpop.f32.mrb[0].mxu0
  %v435 = vpop.f32.mrb[0].mxu0
  %v436 = vadd.f32 %v100, %v435
  %v437 = vpop.f32.mrb[0].mxu0
  %438 = vmatprep.mubr.bf16.mxu0 0
  %439 = vmatmul.mubr.bf16.gmra.mrb[0].mxu0 %v238
  %v440 = vpop.f32.mrb[0].mxu0
  %v441 = vadd.f32 %v100, %v440
  %v442 = vpop.f32.mrb[0].mxu0
  %v443 = vpop.f32.mrb[0].mxu0
  %v444 = vadd.f32 %v100, %v443
  %v445 = vpop.f32.mrb[0].mxu0
  %446 = vmatprep.mubr.bf16.mxu0 0
  %447 = vmatmul.mubr.bf16.gmra.mrb[0].mxu0 %v239
  %v448 = vpop.f32.mrb[0].mxu0
  %v449 = vadd.f32 %v100, %v448
  %v450 = vpop.f32.mrb[0].mxu0
  %v451 = vpop.f32.mrb[0].mxu0
  %v452 = vadd.f32 %v100, %v451
  %v453 = vpop.f32.mrb[0].mxu0
  %454 = vmatprep.mubr.bf16.mxu0 0
  %455 = vmatmul.mubr.bf16.gmra.mrb[0].mxu0 %v240
  %v456 = vpop.f32.mrb[0].mxu0
  %v457 = vadd.f32 %v100, %v456
  %v458 = vpop.f32.mrb[0].mxu0
  %v459 = vpop.f32.mrb[0].mxu0
  %v460 = vadd.f32 %v100, %v459
  %v461 = vpop.f32.mrb[0].mxu0
  %462 = vmatprep.mubr.bf16.mxu0 0
  %463 = vmatmul.mubr.bf16.gmra.mrb[0].mxu0 %v241
  %v464 = vpop.f32.mrb[0].mxu0
  %v465 = vadd.f32 %v100, %v464
  %v466 = vpop.f32.mrb[0].mxu0
  %v467 = vpop.f32.mrb[0].mxu0
  %v468 = vadd.f32 %v100, %v467
  %v469 = vpop.f32.mrb[0].mxu0
  %470 = vmatprep.mubr.bf16.mxu0 0
  %471 = vmatmul.mubr.bf16.gmra.mrb[0].mxu0 %v242
  %v472 = vpop.f32.mrb[0].mxu0
  %v473 = vadd.f32 %v100, %v472
  %v474 = vpop.f32.mrb[0].mxu0
  %v475 = vpop.f32.mrb[0].mxu0
  %v476 = vadd.f32 %v100, %v475
  %v477 = vpop.f32.mrb[0].mxu0
  %478 = vmatprep.mubr.bf16.mxu0 0
  %479 = vmatmul.mubr.bf16.gmra.mrb[0].mxu0 %v243
  %v480 = vpop.f32.mrb[0].mxu0
  %v481 = vadd.f32 %v100, %v480
  %v482 = vpop.f32.mrb[0].mxu0
  %v483 = vpop.f32.mrb[0].mxu0
  %v484 = vadd.f32 %v100, %v483
  %v485 = vpop.f32.mrb[0].mxu0
  %486 = vmatprep.mubr.bf16.mxu0 0
  %487 = vmatmul.mubr.bf16.gmra.mrb[0].mxu0 %v244
  %v488 = vpop.f32.mrb[0].mxu0
  %v489 = vadd.f32 %v100, %v488
  %v490 = vpop.f32.mrb[0].mxu0
  %v491 = vpop.f32.mrb[0].mxu0
  %v492 = vadd.f32 %v100, %v491
  %v493 = vpop.f32.mrb[0].mxu0
  %494 = vmatprep.mubr.bf16.mxu0 0
  %495 = vmatmul.mubr.bf16.gmra.mrb[0].mxu0 %v245
  %v496 = vpop.f32.mrb[0].mxu0
  %v497 = vadd.f32 %v100, %v496
  %v498 = vpop.f32.mrb[0].mxu0
  %v499 = vpop.f32.mrb[0].mxu0
  %v500 = vadd.f32 %v100, %v499
  %v501 = vpop.f32.mrb[0].mxu0
  %502 = vmatprep.mubr.bf16.mxu0 0
  %503 = vmatmul.mubr.bf16.gmra.mrb[0].mxu0 %v246
  %v504 = vpop.f32.mrb[0].mxu0
  %v505 = vadd.f32 %v100, %v504
  %v506 = vpop.f32.mrb[0].mxu0
  %v507 = vpop.f32.mrb[0].mxu0
  %v508 = vadd.f32 %v100, %v507
  %v509 = vpop.f32.mrb[0].mxu0
  %510 = vmatprep.mubr.bf16.mxu0 0
  %511 = vmatmul.mubr.bf16.gmra.mrb[0].mxu0 %v247
  %v512 = vpop.f32.mrb[0].mxu0
  %v513 = vadd.f32 %v100, %v512
  %v514 = vpop.f32.mrb[0].mxu0
  %v515 = vpop.f32.mrb[0].mxu0
  %v516 = vadd.f32 %v100, %v515
  %v517 = vpop.f32.mrb[0].mxu0
  %518 = vmatprep.mubr.bf16.mxu0 0
  %519 = vmatmul.mubr.bf16.gmra.mrb[0].mxu0 %v248
  %v520 = vpop.f32.mrb[0].mxu0
  %v521 = vadd.f32 %v100, %v520
  %v522 = vpop.f32.mrb[0].mxu0
  %v523 = vpop.f32.mrb[0].mxu0
  %v524 = vadd.f32 %v100, %v523
  %v525 = vpop.f32.mrb[0].mxu0
  %526 = vmatprep.mubr.bf16.mxu0 0
  %527 = vmatmul.mubr.bf16.gmra.mrb[0].mxu0 %v249
  %v528 = vpop.f32.mrb[0].mxu0
  %v529 = vadd.f32 %v100, %v528
  %v530 = vpop.f32.mrb[0].mxu0
  %v531 = vpop.f32.mrb[0].mxu0
  %v532 = vadd.f32 %v100, %v531
  %v533 = vpop.f32.mrb[0].mxu0
  %534 = vmatprep.mubr.bf16.mxu0 0
  %535 = vmatmul.mubr.bf16.gmra.mrb[0].mxu0 %v250
  %v536 = vpop.f32.mrb[0].mxu0
  %v537 = vadd.f32 %v100, %v536
  %v538 = vpop.f32.mrb[0].mxu0
  %v539 = vpop.f32.mrb[0].mxu0
  %v540 = vadd.f32 %v100, %v539
  %v541 = vpop.f32.mrb[0].mxu0
  %542 = vmatprep.mubr.bf16.mxu0 0
  %543 = vmatmul.mubr.bf16.gmra.mrb[0].mxu0 %v251
  %v544 = vpop.f32.mrb[0].mxu0
  %v545 = vadd.f32 %v100, %v544
  %v546 = vpop.f32.mrb[0].mxu0
  %v547 = vpop.f32.mrb[0].mxu0
  %v548 = vadd.f32 %v100, %v547
  %v549 = vpop.f32.mrb[0].mxu0
  %550 = vmatprep.mubr.bf16.mxu0 0
  %551 = vmatmul.mubr.bf16.gmra.mrb[0].mxu0 %v252
  %v552 = vpop.f32.mrb[0].mxu0
  %v553 = vadd.f32 %v100, %v552
  %v554 = vpop.f32.mrb[0].mxu0
  %v555 = vpop.f32.mrb[0].mxu0
  %v556 = vadd.f32 %v100, %v555
  %v557 = vpop.f32.mrb[0].mxu0
  %558 = vmatprep.mubr.bf16.mxu0 0
  %559 = vmatmul.mubr.bf16.gmra.mrb[0].mxu0 %v253
  %v560 = vpop.f32.mrb[0].mxu0
  %v561 = vadd.f32 %v100, %v560
  %v562 = vpop.f32.mrb[0].mxu0
  %v563 = vpop.f32.mrb[0].mxu0
  %v564 = vadd.f32 %v100, %v563
  %v565 = vpop.f32.mrb[0].mxu0
  %566 = vmatprep.mubr.bf16.mxu0 0
  %567 = vmatmul.mubr.bf16.gmra.mrb[0].mxu0 %v254
  %v568 = vpop.f32.mrb[0].mxu0
  %v569 = vadd.f32 %v100, %v568
  %v570 = vpop.f32.mrb[0].mxu0
  %v571 = vpop.f32.mrb[0].mxu0
  %v572 = vadd.f32 %v100, %v571
  %v573 = vpop.f32.mrb[0].mxu0
  %574 = vmatprep.mubr.bf16.mxu0 0
  %575 = vmatmul.mubr.bf16.gmra.mrb[0].mxu0 %v255
  %v576 = vpop.f32.mrb[0].mxu0
  %v577 = vadd.f32 %v100, %v576
  %v578 = vpop.f32.mrb[0].mxu0
  %v579 = vpop.f32.mrb[0].mxu0
  %v580 = vadd.f32 %v100, %v579
  %v581 = vpop.f32.mrb[0].mxu0
  %582 = vmatprep.mubr.bf16.mxu0 0
  %583 = vmatmul.mubr.bf16.gmra.mrb[0].mxu0 %v256
  %v584 = vpop.f32.mrb[0].mxu0
  %v585 = vadd.f32 %v100, %v584
  %v586 = vpop.f32.mrb[0].mxu0
  %v587 = vpop.f32.mrb[0].mxu0
  %v588 = vadd.f32 %v100, %v587
  %v589 = vpop.f32.mrb[0].mxu0
  %590 = vmatprep.mubr.bf16.mxu0 0
  %591 = vmatmul.mubr.bf16.gmra.mrb[0].mxu0 %v257
  %v592 = vpop.f32.mrb[0].mxu0
  %v593 = vadd.f32 %v100, %v592
  %v594 = vpop.f32.mrb[0].mxu0
  %v595 = vpop.f32.mrb[0].mxu0
  %v596 = vadd.f32 %v100, %v595
  %v597 = vpop.f32.mrb[0].mxu0
  %598 = vmatprep.mubr.bf16.mxu0 0
  %599 = vmatmul.mubr.bf16.gmra.mrb[0].mxu0 %v258
  %v600 = vpop.f32.mrb[0].mxu0
  %v601 = vadd.f32 %v100, %v600
  %v602 = vpop.f32.mrb[0].mxu0
  %v603 = vpop.f32.mrb[0].mxu0
  %v604 = vadd.f32 %v100, %v603
  %v605 = vpop.f32.mrb[0].mxu0
  %606 = vmatprep.mubr.bf16.mxu0 0
  %607 = vmatmul.mubr.bf16.gmra.mrb[0].mxu0 %v259
  %v608 = vpop.f32.mrb[0].mxu0
  %v609 = vadd.f32 %v100, %v608
  %v610 = vpop.f32.mrb[0].mxu0
  %v611 = vpop.f32.mrb[0].mxu0
  %v612 = vadd.f32 %v100, %v611
  %v613 = vpop.f32.mrb[0].mxu0
  %614 = vmatprep.mubr.bf16.mxu0 0
  %615 = vmatmul.mubr.bf16.gmra.mrb[0].mxu0 %v260
  %v616 = vpop.f32.mrb[0].mxu0
  %v617 = vadd.f32 %v100, %v616
  %v618 = vpop.f32.mrb[0].mxu0
  %v619 = vpop.f32.mrb[0].mxu0
  %v620 = vadd.f32 %v100, %v619
  %v621 = vpop.f32.mrb[0].mxu0
  %622 = vmatprep.mubr.bf16.mxu0 0
  %623 = vmatmul.mubr.bf16.gmra.mrb[0].mxu0 %v261
  %v624 = vpop.f32.mrb[0].mxu0
  %v625 = vadd.f32 %v100, %v624
  %v626 = vpop.f32.mrb[0].mxu0
  %v627 = vpop.f32.mrb[0].mxu0
  %v628 = vadd.f32 %v100, %v627
  %v629 = vpop.f32.mrb[0].mxu0
  %630 = vdwg.mxu0
  %v631 = vmax.f32 %v377, 0.0
  %v632 = vmax.f32 %v380, 0.0
  %v633 = vmax.f32 %v385, 0.0
  %v634 = vmax.f32 %v388, 0.0
  %v635 = vmax.f32 %v393, 0.0
  %v636 = vmax.f32 %v396, 0.0
  %v637 = vmax.f32 %v401, 0.0
  %v638 = vmax.f32 %v404, 0.0
  %v639 = vmax.f32 %v409, 0.0
  %v640 = vmax.f32 %v412, 0.0
  %v641 = vmax.f32 %v417, 0.0
  %v642 = vmax.f32 %v420, 0.0
  %v643 = vmax.f32 %v425, 0.0
  %v644 = vmax.f32 %v428, 0.0
  %v645 = vmax.f32 %v433, 0.0
  %v646 = vmax.f32 %v436, 0.0
  %v647 = vmax.f32 %v441, 0.0
  %v648 = vmax.f32 %v444, 0.0
  %v649 = vmax.f32 %v449, 0.0
  %v650 = vmax.f32 %v452, 0.0
  %v651 = vmax.f32 %v457, 0.0
  %v652 = vmax.f32 %v460, 0.0
  %v653 = vmax.f32 %v465, 0.0
  %v654 = vmax.f32 %v468, 0.0
  %v655 = vmax.f32 %v473, 0.0
  %v656 = vmax.f32 %v476, 0.0
  %v657 = vmax.f32 %v481, 0.0
  %v658 = vmax.f32 %v484, 0.0
  %v659 = vmax.f32 %v489, 0.0
  %v660 = vmax.f32 %v492, 0.0
  %v661 = vmax.f32 %v497, 0.0
  %v662 = vmax.f32 %v500, 0.0
  %v663 = vmax.f32 %v505, 0.0
  %v664 = vmax.f32 %v508, 0.0
  %v665 = vmax.f32 %v513, 0.0
  %v666 = vmax.f32 %v516, 0.0
  %v667 = vmax.f32 %v521, 0.0
  %v668 = vmax.f32 %v524, 0.0
  %v669 = vmax.f32 %v529, 0.0
  %v670 = vmax.f32 %v532, 0.0
  %v671 = vmax.f32 %v537, 0.0
  %v672 = vmax.f32 %v540, 0.0
  %v673 = vmax.f32 %v545, 0.0
  %v674 = vmax.f32 %v548, 0.0
  %v675 = vmax.f32 %v553, 0.0
  %v676 = vmax.f32 %v556, 0.0
  %v677 = vmax.f32 %v561, 0.0
  %v678 = vmax.f32 %v564, 0.0
  %v679 = vmax.f32 %v569, 0.0
  %v680 = vmax.f32 %v572, 0.0
  %v681 = vmax.f32 %v577, 0.0
  %v682 = vmax.f32 %v580, 0.0
  %v683 = vmax.f32 %v585, 0.0
  %v684 = vmax.f32 %v588, 0.0
  %v685 = vmax.f32 %v593, 0.0
  %v686 = vmax.f32 %v596, 0.0
  %v687 = vmax.f32 %v601, 0.0
  %v688 = vmax.f32 %v604, 0.0
  %v689 = vmax.f32 %v609, 0.0
  %v690 = vmax.f32 %v612, 0.0
  %v691 = vmax.f32 %v617, 0.0
  %v692 = vmax.f32 %v620, 0.0
  %v693 = vmax.f32 %v625, 0.0
  %v694 = vmax.f32 %v628, 0.0
  %v695 = vpack.c.bf16 %v632, %v631
  %v696 = vpack.c.bf16 %v634, %v633
  %v697 = vpack.c.bf16 %v636, %v635
  %v698 = vpack.c.bf16 %v638, %v637
  %v699 = vpack.c.bf16 %v640, %v639
  %v700 = vpack.c.bf16 %v642, %v641
  %v701 = vpack.c.bf16 %v644, %v643
  %v702 = vpack.c.bf16 %v646, %v645
  %v703 = vpack.c.bf16 %v648, %v647
  %v704 = vpack.c.bf16 %v650, %v649
  %v705 = vpack.c.bf16 %v652, %v651
  %v706 = vpack.c.bf16 %v654, %v653
  %v707 = vpack.c.bf16 %v656, %v655
  %v708 = vpack.c.bf16 %v658, %v657
  %v709 = vpack.c.bf16 %v660, %v659
  %v710 = vpack.c.bf16 %v662, %v661
  %v711 = vpack.c.bf16 %v664, %v663
  %v712 = vpack.c.bf16 %v666, %v665
  %v713 = vpack.c.bf16 %v668, %v667
  %v714 = vpack.c.bf16 %v670, %v669
  %v715 = vpack.c.bf16 %v672, %v671
  %v716 = vpack.c.bf16 %v674, %v673
  %v717 = vpack.c.bf16 %v676, %v675
  %v718 = vpack.c.bf16 %v678, %v677
  %v719 = vpack.c.bf16 %v680, %v679
  %v720 = vpack.c.bf16 %v682, %v681
  %v721 = vpack.c.bf16 %v684, %v683
  %v722 = vpack.c.bf16 %v686, %v685
  %v723 = vpack.c.bf16 %v688, %v687
  %v724 = vpack.c.bf16 %v690, %v689
  %v725 = vpack.c.bf16 %v692, %v691
  %v726 = vpack.c.bf16 %v694, %v693
  %v759 = vunpack.c.l.b16 %v695
  %v760 = vunpack.c.h.b16 %v695
  %v761 = vunpack.c.l.b16 %v696
  %v762 = vunpack.c.h.b16 %v696
  %v763 = vunpack.c.l.b16 %v697
  %v764 = vunpack.c.h.b16 %v697
  %v765 = vunpack.c.l.b16 %v698
  %v766 = vunpack.c.h.b16 %v698
  %v767 = vunpack.c.l.b16 %v699
  %v768 = vunpack.c.h.b16 %v699
  %v769 = vunpack.c.l.b16 %v700
  %v770 = vunpack.c.h.b16 %v700
  %v771 = vunpack.c.l.b16 %v701
  %v772 = vunpack.c.h.b16 %v701
  %v773 = vunpack.c.l.b16 %v702
  %v774 = vunpack.c.h.b16 %v702
  %v775 = vunpack.c.l.b16 %v703
  %v776 = vunpack.c.h.b16 %v703
  %v777 = vunpack.c.l.b16 %v704
  %v778 = vunpack.c.h.b16 %v704
  %v779 = vunpack.c.l.b16 %v705
  %v780 = vunpack.c.h.b16 %v705
  %v781 = vunpack.c.l.b16 %v706
  %v782 = vunpack.c.h.b16 %v706
  %v783 = vunpack.c.l.b16 %v707
  %v784 = vunpack.c.h.b16 %v707
  %v785 = vunpack.c.l.b16 %v708
  %v786 = vunpack.c.h.b16 %v708
  %v787 = vunpack.c.l.b16 %v709
  %v788 = vunpack.c.h.b16 %v709
  %v789 = vunpack.c.l.b16 %v710
  %v790 = vunpack.c.h.b16 %v710
  %v791 = vunpack.c.l.b16 %v711
  %v792 = vunpack.c.h.b16 %v711
  %v793 = vunpack.c.l.b16 %v712
  %v794 = vunpack.c.h.b16 %v712
  %v795 = vunpack.c.l.b16 %v713
  %v796 = vunpack.c.h.b16 %v713
  %v797 = vunpack.c.l.b16 %v714
  %v798 = vunpack.c.h.b16 %v714
  %v799 = vunpack.c.l.b16 %v715
  %v800 = vunpack.c.h.b16 %v715
  %v801 = vunpack.c.l.b16 %v716
  %v802 = vunpack.c.h.b16 %v716
  %v803 = vunpack.c.l.b16 %v717
  %v804 = vunpack.c.h.b16 %v717
  %v805 = vunpack.c.l.b16 %v718
  %v806 = vunpack.c.h.b16 %v718
  %v807 = vunpack.c.l.b16 %v719
  %v808 = vunpack.c.h.b16 %v719
  %v809 = vunpack.c.l.b16 %v720
  %v810 = vunpack.c.h.b16 %v720
  %v811 = vunpack.c.l.b16 %v721
  %v812 = vunpack.c.h.b16 %v721
  %v813 = vunpack.c.l.b16 %v722
  %v814 = vunpack.c.h.b16 %v722
  %v815 = vunpack.c.l.b16 %v723
  %v816 = vunpack.c.h.b16 %v723
  %v817 = vunpack.c.l.b16 %v724
  %v818 = vunpack.c.h.b16 %v724
  %v819 = vunpack.c.l.b16 %v725
  %v820 = vunpack.c.h.b16 %v725
  %v821 = vunpack.c.l.b16 %v726
  %v822 = vunpack.c.h.b16 %v726
  %v823 = vpack.c.b16 %v759, %v759
  %v824 = vpack.c.b16 %v760, %v760
  %v825 = vpack.c.b16 %v761, %v761
  %v826 = vpack.c.b16 %v762, %v762
  %v827 = vpack.c.b16 %v763, %v763
  %v828 = vpack.c.b16 %v764, %v764
  %v829 = vpack.c.b16 %v765, %v765
  %v830 = vpack.c.b16 %v766, %v766
  %v831 = vpack.c.b16 %v767, %v767
  %v832 = vpack.c.b16 %v768, %v768
  %v833 = vpack.c.b16 %v769, %v769
  %v834 = vpack.c.b16 %v770, %v770
  %v835 = vpack.c.b16 %v771, %v771
  %v836 = vpack.c.b16 %v772, %v772
  %v837 = vpack.c.b16 %v773, %v773
  %v838 = vpack.c.b16 %v774, %v774
  %v839 = vpack.c.b16 %v775, %v775
  %v840 = vpack.c.b16 %v776, %v776
  %v841 = vpack.c.b16 %v777, %v777
  %v842 = vpack.c.b16 %v778, %v778
  %v843 = vpack.c.b16 %v779, %v779
  %v844 = vpack.c.b16 %v780, %v780
  %v845 = vpack.c.b16 %v781, %v781
  %v846 = vpack.c.b16 %v782, %v782
  %v847 = vpack.c.b16 %v783, %v783
  %v848 = vpack.c.b16 %v784, %v784
  %v849 = vpack.c.b16 %v785, %v785
  %v850 = vpack.c.b16 %v786, %v786
  %v851 = vpack.c.b16 %v787, %v787
  %v852 = vpack.c.b16 %v788, %v788
  %v853 = vpack.c.b16 %v789, %v789
  %v854 = vpack.c.b16 %v790, %v790
  %v855 = vpack.c.b16 %v791, %v791
  %v856 = vpack.c.b16 %v792, %v792
  %v857 = vpack.c.b16 %v793, %v793
  %v858 = vpack.c.b16 %v794, %v794
  %v859 = vpack.c.b16 %v795, %v795
  %v860 = vpack.c.b16 %v796, %v796
  %v861 = vpack.c.b16 %v797, %v797
  %v862 = vpack.c.b16 %v798, %v798
  %v863 = vpack.c.b16 %v799, %v799
  %v864 = vpack.c.b16 %v800, %v800
  %v865 = vpack.c.b16 %v801, %v801
  %v866 = vpack.c.b16 %v802, %v802
  %v867 = vpack.c.b16 %v803, %v803
  %v868 = vpack.c.b16 %v804, %v804
  %v869 = vpack.c.b16 %v805, %v805
  %v870 = vpack.c.b16 %v806, %v806
  %v871 = vpack.c.b16 %v807, %v807
  %v872 = vpack.c.b16 %v808, %v808
  %v873 = vpack.c.b16 %v809, %v809
  %v874 = vpack.c.b16 %v810, %v810
  %v875 = vpack.c.b16 %v811, %v811
  %v876 = vpack.c.b16 %v812, %v812
  %v877 = vpack.c.b16 %v813, %v813
  %v878 = vpack.c.b16 %v814, %v814
  %v879 = vpack.c.b16 %v815, %v815
  %v880 = vpack.c.b16 %v816, %v816
  %v881 = vpack.c.b16 %v817, %v817
  %v882 = vpack.c.b16 %v818, %v818
  %v883 = vpack.c.b16 %v819, %v819
  %v884 = vpack.c.b16 %v820, %v820
  %v885 = vpack.c.b16 %v821, %v821
  %v886 = vpack.c.b16 %v822, %v822
  %951 = vst [vmem:[%s3] sm:$0xf] %v823
  %952 = vst [vmem:[%s3 + $0x4] sm:$0xf] %v824
  %953 = vst [vmem:[%s3 + $0x8] sm:$0xf] %v825
  %954 = vst [vmem:[%s3 + $0xc] sm:$0xf] %v826
  %955 = vst [vmem:[%s3 + $0x10] sm:$0xf] %v827
  %956 = vst [vmem:[%s3 + $0x14] sm:$0xf] %v828
  %957 = vst [vmem:[%s3 + $0x18] sm:$0xf] %v829
  %958 = vst [vmem:[%s3 + $0x1c] sm:$0xf] %v830
  %959 = vst [vmem:[%s3 + $0x20] sm:$0xf] %v831
  %960 = vst [vmem:[%s3 + $0x24] sm:$0xf] %v832
  %961 = vst [vmem:[%s3 + $0x28] sm:$0xf] %v833
  %962 = vst [vmem:[%s3 + $0x2c] sm:$0xf] %v834
  %963 = vst [vmem:[%s3 + $0x30] sm:$0xf] %v835
  %964 = vst [vmem:[%s3 + $0x34] sm:$0xf] %v836
  %965 = vst [vmem:[%s3 + $0x38] sm:$0xf] %v837
  %966 = vst [vmem:[%s3 + $0x3c] sm:$0xf] %v838
  %967 = vst [vmem:[%s3 + $0x40] sm:$0xf] %v839
  %968 = vst [vmem:[%s3 + $0x44] sm:$0xf] %v840
  %969 = vst [vmem:[%s3 + $0x48] sm:$0xf] %v841
  %970 = vst [vmem:[%s3 + $0x4c] sm:$0xf] %v842
  %971 = vst [vmem:[%s3 + $0x50] sm:$0xf] %v843
  %972 = vst [vmem:[%s3 + $0x54] sm:$0xf] %v844
  %973 = vst [vmem:[%s3 + $0x58] sm:$0xf] %v845
  %974 = vst [vmem:[%s3 + $0x5c] sm:$0xf] %v846
  %975 = vst [vmem:[%s3 + $0x60] sm:$0xf] %v847
  %976 = vst [vmem:[%s3 + $0x64] sm:$0xf] %v848
  %977 = vst [vmem:[%s3 + $0x68] sm:$0xf] %v849
  %978 = vst [vmem:[%s3 + $0x6c] sm:$0xf] %v850
  %979 = vst [vmem:[%s3 + $0x70] sm:$0xf] %v851
  %980 = vst [vmem:[%s3 + $0x74] sm:$0xf] %v852
  %981 = vst [vmem:[%s3 + $0x78] sm:$0xf] %v853
  %982 = vst [vmem:[%s3 + $0x7c] sm:$0xf] %v854
  %983 = vst [vmem:[%s3 + $0x80] sm:$0xf] %v855
  %984 = vst [vmem:[%s3 + $0x84] sm:$0xf] %v856
  %985 = vst [vmem:[%s3 + $0x88] sm:$0xf] %v857
  %986 = vst [vmem:[%s3 + $0x8c] sm:$0xf] %v858
  %987 = vst [vmem:[%s3 + $0x90] sm:$0xf] %v859
  %988 = vst [vmem:[%s3 + $0x94] sm:$0xf] %v860
  %989 = vst [vmem:[%s3 + $0x98] sm:$0xf] %v861
  %990 = vst [vmem:[%s3 + $0x9c] sm:$0xf] %v862
  %991 = vst [vmem:[%s3 + $0xa0] sm:$0xf] %v863
  %992 = vst [vmem:[%s3 + $0xa4] sm:$0xf] %v864
  %993 = vst [vmem:[%s3 + $0xa8] sm:$0xf] %v865
  %994 = vst [vmem:[%s3 + $0xac] sm:$0xf] %v866
  %995 = vst [vmem:[%s3 + $0xb0] sm:$0xf] %v867
  %996 = vst [vmem:[%s3 + $0xb4] sm:$0xf] %v868
  %997 = vst [vmem:[%s3 + $0xb8] sm:$0xf] %v869
  %998 = vst [vmem:[%s3 + $0xbc] sm:$0xf] %v870
  %999 = vst [vmem:[%s3 + $0xc0] sm:$0xf] %v871
  %1000 = vst [vmem:[%s3 + $0xc4] sm:$0xf] %v872
  %1001 = vst [vmem:[%s3 + $0xc8] sm:$0xf] %v873
  %1002 = vst [vmem:[%s3 + $0xcc] sm:$0xf] %v874
  %1003 = vst [vmem:[%s3 + $0xd0] sm:$0xf] %v875
  %1004 = vst [vmem:[%s3 + $0xd4] sm:$0xf] %v876
  %1005 = vst [vmem:[%s3 + $0xd8] sm:$0xf] %v877
  %1006 = vst [vmem:[%s3 + $0xdc] sm:$0xf] %v878
  %1007 = vst [vmem:[%s3 + $0xe0] sm:$0xf] %v879
  %1008 = vst [vmem:[%s3 + $0xe4] sm:$0xf] %v880
  %1009 = vst [vmem:[%s3 + $0xe8] sm:$0xf] %v881
  %1010 = vst [vmem:[%s3 + $0xec] sm:$0xf] %v882
  %1011 = vst [vmem:[%s3 + $0xf0] sm:$0xf] %v883
  %1012 = vst [vmem:[%s3 + $0xf4] sm:$0xf] %v884
  %1013 = vst [vmem:[%s3 + $0xf8] sm:$0xf] %v885
  %1014 = vst [vmem:[%s3 + $0xfc] sm:$0xf] %v886
  // Predicated region
  $region14: #{bottleneck_forward.4} parent=0 // pred_check
    _
  $region15: #{bottleneck_forward.4} parent=0 // pred_check_branch
    %1016 = sbr.rel (0) target = $region17
  $region16: #{bottleneck_forward.4} parent=0 // pred_region
    _
  $region17: #{bottleneck_forward.4} parent=0 // pred_fallthru
    _
  // Predicated region
  $region18: #{bottleneck_forward.4} parent=0 // pred_check
    _
  $region19: #{bottleneck_forward.4} parent=0 // pred_check_branch
    %1018 = sbr.rel (0) target = $region21
  $region20: #{bottleneck_forward.4} parent=0 // pred_region
    _
  $region21: #{bottleneck_forward.4} parent=0 // pred_fallthru
    _

// kernel: bottleneck_forward.5
$region0: #{bottleneck_forward.5}
  #allocation0 [shape = 'u32[]', space=smem, size = 0x4, offset = 0x4, fixed_abs, tag = 'smem constant byte address 0x4 - core index']
  #allocation1 [shape = 'u32[144,128]{1,0:T(1,128)}', space=vmem, size = 0x12000, scoped, tag = 'internal scratch']
  %s0 = inlined_call_operand.vmem [shape: bf16[2,18,18,128], index: 0, kind: input, shape index: {}, may-alias: {0,1,2}]
  %s1 = inlined_call_operand.vmem [shape: bf16[2,18,18,128], index: 1, kind: input, shape index: {}, may-alias: {0,1,2}]
  %s2 = inlined_call_operand.vmem [shape: bf16[2,18,18,128], index: 2, kind: input, shape index: {}, may-alias: {0,1,2}]
  %s3 = inlined_call_operand.vmem [shape: bf16[3,3,128,128], index: 3, kind: input, shape index: {}]
  %s4 = inlined_call_operand.vmem [shape: f32[1,128], index: 4, kind: input, shape index: {}]
  %s5 = inlined_call_operand.vmem [shape: bf16[2,16,16,128], index: 5, kind: output, shape index: {}]
  %s6 = sld [smem:[#allocation0]]
  $region53: #{bottleneck_forward.5} parent=0
    _
  %s8 = ssub.s32 1, %s6
  %s9 = scalar_select 0, %s8, %s6
  loop: start=0, step=1, limit=34
  $region2: #{bottleneck_forward.5} parent=0 // loop_pre_header
    _
  $region3: #{bottleneck_forward.5} parent=0 // loop_header
    %s11 = sphi 0, %s15
    %p12 = scmp.ge.s32.totalorder %s11, 34
    %s18 = sphi 0, %s30
    %s19 = sphi 0, %s26
    %s20 = sphi 0, %s18
    %s21 = sphi 0, %s19
    %s22 = sphi 0, %s20
    %s23 = sphi 0, %s21
    %s35 = sphi 0, %s37
    %s38 = sphi 0, %s35
    %s39 = sphi 0, %s38
    %s55 = sphi 0, %s39
    %s65 = sphi 0, %s67
    %s68 = sphi 0, %s65
    %s69 = sphi 0, %s68
    %s85 = sphi 0, %s69
    %s95 = sphi 0, %s97
    %s98 = sphi 0, %s95
    %s99 = sphi 0, %s98
    %s115 = sphi 0, %s99
    %s119 = sphi 0, %s119
    %s121 = sphi 0, %s119
    %s122 = sphi 0, %s121
    %s136 = sphi 0, %s122
    %s140 = sphi 0, %s140
    %s142 = sphi 0, %s140
    %s143 = sphi 0, %s142
    %s157 = sphi 0, %s143
    %s165 = sphi 0, %s167
    %s168 = sphi 0, %s165
    %s169 = sphi 0, %s168
    %s185 = sphi 0, %s169
  $region4: #{bottleneck_forward.5} parent=0 // loop_header_branch
    %14 = sbr.rel (%p12) target = $region8
  $region5: #{bottleneck_forward.5} parent=0 // loop_body
    %s16 = ssub.s32 %s11, 1
    %s17 = ssub.s32 %s11, 2
    %s24 = sadd.s32 1, %s19
    %p25 = scmp.ge.s32.totalorder %s24, 16
    %s26 = scalar_select %p25, 0, %s24
    %s27 = sadd.s32 1, %s18
    %s28 = scalar_select %p25, %s27, %s18
    %p29 = scmp.ge.s32.totalorder %s28, 2
    %s30 = scalar_select %p29, 0, %s28
    %s31 = ssub.s32 %s18, %s30
    %s32 = ssub.s32 %s19, %s26
    %s33 = sor.u32 %s31, %s32
    %p34 = scmp.eq.s32.totalorder %s33, 0
    %s36 = sadd.s32 %s35, 1
    %s37 = scalar_select %p34, %s35, %s36
    %p40 = pneg %p34
    %p41 = scmp.eq.s32.totalorder %s11, 31
    %p42 = por %p40, %p41
    %p43 = scmp.ne.s32.totalorder %s35, %s38
    %p44 = scmp.eq.s32.totalorder %s11, 0
    %p45 = por %p43, %p44
    %p46 = scmp.ne.s32.totalorder %s35, %s38
    %p47 = scmp.eq.s32.totalorder %s16, 31
    %p48 = por %p46, %p47
    %p49 = scmp.ne.s32.totalorder %s38, %s39
    %p50 = scmp.eq.s32.totalorder %s16, 0
    %p51 = por %p49, %p50
    %p52 = scmp.ne.s32.totalorder %s38, %s39
    %p53 = scmp.eq.s32.totalorder %s17, 31
    %p54 = por %p52, %p53
    %p56 = scmp.ne.s32.totalorder %s39, %s55
    %p57 = scmp.eq.s32.totalorder %s17, 0
    %p58 = por %p56, %p57
    %s59 = sadd.s32 %s19, 1
    %s60 = sadd.s32 %s26, 1
    %s61 = ssub.s32 %s18, %s30
    %s62 = ssub.s32 %s59, %s60
    %s63 = sor.u32 %s61, %s62
    %p64 = scmp.eq.s32.totalorder %s63, 0
    %s66 = sadd.s32 %s65, 1
    %s67 = scalar_select %p64, %s65, %s66
    %p70 = pneg %p64
    %p71 = scmp.eq.s32.totalorder %s11, 31
    %p72 = por %p70, %p71
    %p73 = scmp.ne.s32.totalorder %s65, %s68
    %p74 = scmp.eq.s32.totalorder %s11, 0
    %p75 = por %p73, %p74
    %p76 = scmp.ne.s32.totalorder %s65, %s68
    %p77 = scmp.eq.s32.totalorder %s16, 31
    %p78 = por %p76, %p77
    %p79 = scmp.ne.s32.totalorder %s68, %s69
    %p80 = scmp.eq.s32.totalorder %s16, 0
    %p81 = por %p79, %p80
    %p82 = scmp.ne.s32.totalorder %s68, %s69
    %p83 = scmp.eq.s32.totalorder %s17, 31
    %p84 = por %p82, %p83
    %p86 = scmp.ne.s32.totalorder %s69, %s85
    %p87 = scmp.eq.s32.totalorder %s17, 0
    %p88 = por %p86, %p87
    %s89 = sadd.s32 %s19, 2
    %s90 = sadd.s32 %s26, 2
    %s91 = ssub.s32 %s18, %s30
    %s92 = ssub.s32 %s89, %s90
    %s93 = sor.u32 %s91, %s92
    %p94 = scmp.eq.s32.totalorder %s93, 0
    %s96 = sadd.s32 %s95, 1
    %s97 = scalar_select %p94, %s95, %s96
    %p100 = pneg %p94
    %p101 = scmp.eq.s32.totalorder %s11, 31
    %p102 = por %p100, %p101
    %p103 = scmp.ne.s32.totalorder %s95, %s98
    %p104 = scmp.eq.s32.totalorder %s11, 0
    %p105 = por %p103, %p104
    %p106 = scmp.ne.s32.totalorder %s95, %s98
    %p107 = scmp.eq.s32.totalorder %s16, 31
    %p108 = por %p106, %p107
    %p109 = scmp.ne.s32.totalorder %s98, %s99
    %p110 = scmp.eq.s32.totalorder %s16, 0
    %p111 = por %p109, %p110
    %p112 = scmp.ne.s32.totalorder %s98, %s99
    %p113 = scmp.eq.s32.totalorder %s17, 31
    %p114 = por %p112, %p113
    %p116 = scmp.ne.s32.totalorder %s99, %s115
    %p117 = scmp.eq.s32.totalorder %s17, 0
    %p118 = por %p116, %p117
    %s120 = sadd.s32 %s119, 1
    %p123 = scmp.eq.s32.totalorder %s11, 31
    %p124 = scmp.ne.s32.totalorder %s119, %s121
    %p125 = scmp.eq.s32.totalorder %s11, 0
    %p126 = por %p124, %p125
    %p127 = scmp.ne.s32.totalorder %s119, %s121
    %p128 = scmp.eq.s32.totalorder %s16, 31
    %p129 = por %p127, %p128
    %p130 = scmp.ne.s32.totalorder %s121, %s122
    %p131 = scmp.eq.s32.totalorder %s16, 0
    %p132 = por %p130, %p131
    %p133 = scmp.ne.s32.totalorder %s121, %s122
    %p134 = scmp.eq.s32.totalorder %s17, 31
    %p135 = por %p133, %p134
    %p137 = scmp.ne.s32.totalorder %s122, %s136
    %p138 = scmp.eq.s32.totalorder %s17, 0
    %p139 = por %p137, %p138
    %s141 = sadd.s32 %s140, 1
    %p144 = scmp.eq.s32.totalorder %s11, 31
    %p145 = scmp.ne.s32.totalorder %s140, %s142
    %p146 = scmp.eq.s32.totalorder %s11, 0
    %p147 = por %p145, %p146
    %p148 = scmp.ne.s32.totalorder %s140, %s142
    %p149 = scmp.eq.s32.totalorder %s16, 31
    %p150 = por %p148, %p149
    %p151 = scmp.ne.s32.totalorder %s142, %s143
    %p152 = scmp.eq.s32.totalorder %s16, 0
    %p153 = por %p151, %p152
    %p154 = scmp.ne.s32.totalorder %s142, %s143
    %p155 = scmp.eq.s32.totalorder %s17, 31
    %p156 = por %p154, %p155
    %p158 = scmp.ne.s32.totalorder %s143, %s157
    %p159 = scmp.eq.s32.totalorder %s17, 0
    %p160 = por %p158, %p159
    %s161 = ssub.s32 %s18, %s30
    %s162 = ssub.s32 %s19, %s26
    %s163 = sor.u32 %s161, %s162
    %p164 = scmp.eq.s32.totalorder %s163, 0
    %s166 = sadd.s32 %s165, 1
    %s167 = scalar_select %p164, %s165, %s166
    %p170 = pneg %p164
    %p171 = scmp.eq.s32.totalorder %s11, 31
    %p172 = por %p170, %p171
    %p173 = scmp.ne.s32.totalorder %s165, %s168
    %p174 = scmp.eq.s32.totalorder %s11, 0
    %p175 = por %p173, %p174
    %p176 = scmp.ne.s32.totalorder %s165, %s168
    %p177 = scmp.eq.s32.totalorder %s16, 31
    %p178 = por %p176, %p177
    %p179 = scmp.ne.s32.totalorder %s168, %s169
    %p180 = scmp.eq.s32.totalorder %s16, 0
    %p181 = por %p179, %p180
    %p182 = scmp.ne.s32.totalorder %s168, %s169
    %p183 = scmp.eq.s32.totalorder %s17, 31
    %p184 = por %p182, %p183
    %p186 = scmp.ne.s32.totalorder %s169, %s185
    %p187 = scmp.eq.s32.totalorder %s17, 0
    %p188 = por %p186, %p187
    %p189 = scmp.le.s32.totalorder 1, %s11
    %p190 = scmp.lt.s32.totalorder %s11, 33
    %p191 = pnand %p189, %p190
    %p192 = pneg %p191
    // Predicated region
    $region9: #{bottleneck_forward.5} parent=5 // pred_check
      _
    $region10: #{bottleneck_forward.5} parent=5 // pred_check_branch
      %194 = sbr.rel (%p191) target = $region12
    $region11: #{bottleneck_forward.5} parent=5 // pred_region
      %s195 = ssub.s32 %s11, 1
      // Predicated region
      $region13: #{bottleneck_forward.5} parent=11 // pred_check
        %p196 = pneg %p132
      $region14: #{bottleneck_forward.5} parent=11 // pred_check_branch
        %198 = sbr.rel (%p196) target = $region16
      $region15: #{bottleneck_forward.5} parent=11 // pred_region
        _
      $region16: #{bottleneck_forward.5} parent=11 // pred_fallthru
        _
      // Predicated region
      $region17: #{bottleneck_forward.5} parent=11 // pred_check
        %p199 = pneg %p153
      $region18: #{bottleneck_forward.5} parent=11 // pred_check_branch
        %201 = sbr.rel (%p199) target = $region20
      $region19: #{bottleneck_forward.5} parent=11 // pred_region
        _
      $region20: #{bottleneck_forward.5} parent=11 // pred_fallthru
        _
    $region12: #{bottleneck_forward.5} parent=5 // pred_fallthru
      _
    %p202 = scmp.lt.s32.totalorder %s11, 32
    // Predicated region
    $region21: #{bottleneck_forward.5} parent=5 // pred_check
      %p203 = pneg %p202
    $region22: #{bottleneck_forward.5} parent=5 // pred_check_branch
      %205 = sbr.rel (%p203) target = $region24
    $region23: #{bottleneck_forward.5} parent=5 // pred_region
      // Predicated region
      $region25: #{bottleneck_forward.5} parent=23 // pred_check
        %p206 = pneg %p45
      $region26: #{bottleneck_forward.5} parent=23 // pred_check_branch
        %208 = sbr.rel (%p206) target = $region28
      $region27: #{bottleneck_forward.5} parent=23 // pred_region
        %p209 = scmp.lt.s32.totalorder %s18, 1
        %s210 = scalar_select %p209, %s18, 1
        %p211 = scmp.lt.s32.totalorder %s19, 17
        %s212 = scalar_select %p211, %s19, 17
        %s213 = smul.addr %s212, 3
        %s214 = smul.addr %s210, 54
        %s215 = sadd.s32 %s213, %s214
        %s216 = smul.addr %s215, 4
        %s217 = scalar_lea.vmem %s0, %s216
      $region28: #{bottleneck_forward.5} parent=23 // pred_fallthru
        _
      // Predicated region
      $region29: #{bottleneck_forward.5} parent=23 // pred_check
        %p218 = pneg %p75
      $region30: #{bottleneck_forward.5} parent=23 // pred_check_branch
        %220 = sbr.rel (%p218) target = $region32
      $region31: #{bottleneck_forward.5} parent=23 // pred_region
        %s221 = sadd.s32 %s19, 1
        %p222 = scmp.lt.s32.totalorder %s18, 1
        %s223 = scalar_select %p222, %s18, 1
        %p224 = scmp.lt.s32.totalorder %s221, 17
        %s225 = scalar_select %p224, %s221, 17
        %s226 = smul.addr %s225, 3
        %s227 = smul.addr %s223, 54
        %s228 = sadd.s32 %s226, %s227
        %s229 = smul.addr %s228, 4
        %s230 = scalar_lea.vmem %s1, %s229
        %s231 = sadd.s32 %s19, 1
      $region32: #{bottleneck_forward.5} parent=23 // pred_fallthru
        _
      // Predicated region
      $region33: #{bottleneck_forward.5} parent=23 // pred_check
        %p232 = pneg %p105
      $region34: #{bottleneck_forward.5} parent=23 // pred_check_branch
        %234 = sbr.rel (%p232) target = $region36
      $region35: #{bottleneck_forward.5} parent=23 // pred_region
        %s235 = sadd.s32 %s19, 2
        %p236 = scmp.lt.s32.totalorder %s18, 1
        %s237 = scalar_select %p236, %s18, 1
        %p238 = scmp.lt.s32.totalorder %s235, 17
        %s239 = scalar_select %p238, %s235, 17
        %s240 = smul.addr %s239, 3
        %s241 = smul.addr %s237, 54
        %s242 = sadd.s32 %s240, %s241
        %s243 = smul.addr %s242, 4
        %s244 = scalar_lea.vmem %s2, %s243
        %s245 = sadd.s32 %s19, 2
      $region36: #{bottleneck_forward.5} parent=23 // pred_fallthru
        _
    $region24: #{bottleneck_forward.5} parent=5 // pred_fallthru
      _
    %p246 = scmp.le.s32.totalorder 1, %s11
    %p247 = scmp.lt.s32.totalorder %s11, 33
    %p248 = pnand %p246, %p247
    %p249 = pneg %p248
    // Predicated region
    $region37: #{bottleneck_forward.5} parent=5 // pred_check
      _
    $region38: #{bottleneck_forward.5} parent=5 // pred_check_branch
      %251 = sbr.rel (%p248) target = $region40
    $region39: #{bottleneck_forward.5} parent=5 // pred_region
      %s252 = ssub.s32 %s11, 1
      %p253 = scmp.lt.s32.totalorder %s20, 1
      %s254 = scalar_select %p253, %s20, 1
      %p255 = scmp.lt.s32.totalorder %s21, 17
      %s256 = scalar_select %p255, %s21, 17
      %s257 = smul.addr %s256, 3
      %s258 = smul.addr %s254, 54
      %s259 = sadd.s32 %s257, %s258
      %s260 = smul.addr %s259, 4
      %s261 = scalar_lea.vmem %s0, %s260
      %p262 = pneg %p51
      %p263 = pneg %p48
      %s264 = sadd.s32 %s21, 1
      %p265 = scmp.lt.s32.totalorder %s20, 1
      %s266 = scalar_select %p265, %s20, 1
      %p267 = scmp.lt.s32.totalorder %s264, 17
      %s268 = scalar_select %p267, %s264, 17
      %s269 = smul.addr %s268, 3
      %s270 = smul.addr %s266, 54
      %s271 = sadd.s32 %s269, %s270
      %s272 = smul.addr %s271, 4
      %s273 = scalar_lea.vmem %s1, %s272
      %p274 = pneg %p81
      %p275 = pneg %p78
      %s276 = sadd.s32 %s21, 2
      %p277 = scmp.lt.s32.totalorder %s20, 1
      %s278 = scalar_select %p277, %s20, 1
      %p279 = scmp.lt.s32.totalorder %s276, 17
      %s280 = scalar_select %p279, %s276, 17
      %s281 = smul.addr %s280, 3
      %s282 = smul.addr %s278, 54
      %s283 = sadd.s32 %s281, %s282
      %s284 = smul.addr %s283, 4
      %s285 = scalar_lea.vmem %s2, %s284
      %p286 = pneg %p111
      %p287 = pneg %p108
      %p288 = pneg %p132
      %p289 = pneg %p129
      %p290 = pneg %p153
      %p291 = pneg %p150
      %p292 = pneg %p181
      %p293 = pneg %p178
      %p294 = scmp.lt.s32.totalorder %s20, 1
      %s295 = scalar_select %p294, %s20, 1
      %p296 = scmp.lt.s32.totalorder %s21, 15
      %s297 = scalar_select %p296, %s21, 15
      %s298 = smul.addr %s297, 2
      %s299 = smul.addr %s295, 32
      %s300 = sadd.s32 %s298, %s299
      %s301 = smul.addr %s300, 4
      %s302 = scalar_lea.vmem %s5, %s301
      %p303 = scmp.lt.s32.totalorder %s20, 1
      %s304 = scalar_select %p303, %s20, 1
      %p305 = scmp.lt.s32.totalorder %s21, 17
      %s306 = scalar_select %p305, %s21, 17
      %s307 = smul.addr %s306, 3
      %s308 = smul.addr %s304, 54
      %s309 = sadd.s32 %s307, %s308
      %s310 = smul.addr %s309, 4
      %s311 = scalar_lea.vmem %s0, %s310
      %s312 = sadd.s32 %s21, 1
      %p313 = scmp.lt.s32.totalorder %s20, 1
      %s314 = scalar_select %p313, %s20, 1
      %p315 = scmp.lt.s32.totalorder %s312, 17
      %s316 = scalar_select %p315, %s312, 17
      %s317 = smul.addr %s316, 3
      %s318 = smul.addr %s314, 54
      %s319 = sadd.s32 %s317, %s318
      %s320 = smul.addr %s319, 4
      %s321 = scalar_lea.vmem %s1, %s320
      %s322 = sadd.s32 %s21, 1
      %s323 = sadd.s32 %s21, 2
      %p324 = scmp.lt.s32.totalorder %s20, 1
      %s325 = scalar_select %p324, %s20, 1
      %p326 = scmp.lt.s32.totalorder %s323, 17
      %s327 = scalar_select %p326, %s323, 17
      %s328 = smul.addr %s327, 3
      %s329 = smul.addr %s325, 54
      %s330 = sadd.s32 %s328, %s329
      %s331 = smul.addr %s330, 4
      %s332 = scalar_lea.vmem %s2, %s331
      %s333 = sadd.s32 %s21, 2
      %p334 = scmp.lt.s32.totalorder %s20, 1
      %s335 = scalar_select %p334, %s20, 1
      %p336 = scmp.lt.s32.totalorder %s21, 15
      %s337 = scalar_select %p336, %s21, 15
      %s338 = smul.addr %s337, 2
      %s339 = smul.addr %s335, 32
      %s340 = sadd.s32 %s338, %s339
      %s341 = smul.addr %s340, 4
      %s342 = scalar_lea.vmem %s5, %s341
      %v344 = vld [vmem:[%s311] sm:$0xf]
      %v345 = vld [vmem:[%s311 + $0x4] sm:$0xf]
      %v346 = vld [vmem:[%s3] sm:$0xf]
      %v347 = vld [vmem:[%s3 + $0x4] sm:$0xf]
      %v348 = vld [vmem:[%s3 + $0x8] sm:$0xf]
      %v349 = vld [vmem:[%s3 + $0xc] sm:$0xf]
      %v350 = vld [vmem:[%s3 + $0x10] sm:$0xf]
      %v351 = vld [vmem:[%s3 + $0x14] sm:$0xf]
      %v352 = vld [vmem:[%s3 + $0x18] sm:$0xf]
      %v353 = vld [vmem:[%s3 + $0x1c] sm:$0xf]
      %v354 = vld [vmem:[%s3 + $0x20] sm:$0xf]
      %v355 = vld [vmem:[%s3 + $0x24] sm:$0xf]
      %v356 = vld [vmem:[%s3 + $0x28] sm:$0xf]
      %v357 = vld [vmem:[%s3 + $0x2c] sm:$0xf]
      %v358 = vld [vmem:[%s3 + $0x30] sm:$0xf]
      %v359 = vld [vmem:[%s3 + $0x34] sm:$0xf]
      %v360 = vld [vmem:[%s3 + $0x38] sm:$0xf]
      %v361 = vld [vmem:[%s3 + $0x3c] sm:$0xf]
      %v362 = vld [vmem:[%s311 + $0x8] sm:$0x1]
      %s363 = scalar_lea.vmem %s3, 64
      %v364 = vld [vmem:[%s363] sm:$0xf]
      %v365 = vld [vmem:[%s363 + $0x4] sm:$0xf]
      %v366 = vld [vmem:[%s363 + $0x8] sm:$0xf]
      %v367 = vld [vmem:[%s363 + $0xc] sm:$0xf]
      %v368 = vld [vmem:[%s363 + $0x10] sm:$0xf]
      %v369 = vld [vmem:[%s363 + $0x14] sm:$0xf]
      %v370 = vld [vmem:[%s363 + $0x18] sm:$0xf]
      %v371 = vld [vmem:[%s363 + $0x1c] sm:$0xf]
      %v372 = vld [vmem:[%s363 + $0x20] sm:$0xf]
      %v373 = vld [vmem:[%s363 + $0x24] sm:$0xf]
      %v374 = vld [vmem:[%s363 + $0x28] sm:$0xf]
      %v375 = vld [vmem:[%s363 + $0x2c] sm:$0xf]
      %v376 = vld [vmem:[%s363 + $0x30] sm:$0xf]
      %v377 = vld [vmem:[%s363 + $0x34] sm:$0xf]
      %v378 = vld [vmem:[%s363 + $0x38] sm:$0xf]
      %v379 = vld [vmem:[%s363 + $0x3c] sm:$0xf]
      %v383 = vunpack.c.l.b16 %v344
      %v384 = vunpack.c.l.b16 %v345
      %v385 = vunpack.c.l.b16 %v362
      %v386 = vpack.c.b16 %v384, %v383
      %v387 = vpack.c.b16 %v385, %v385
      %vm388 = vsmask.f32 7424
      %v390 = vshrl.u32 %v386, 16
      %v392 = vshll.u32 %v386, 16
      %v394 = vrot.slane %v392, 1
      %v395 = vor.u32 %v390, %v394
      %v397 = vshll.u32 %v387, 16
      %v399 = vrot.slane %v397, 1
      %v400 = vsel %vm388, %v395, %v399
      %v418 = vunpack.c.l.b16 %v364
      %v419 = vunpack.c.l.b16 %v365
      %v420 = vunpack.c.l.b16 %v366
      %v421 = vunpack.c.l.b16 %v367
      %v422 = vunpack.c.l.b16 %v368
      %v423 = vunpack.c.l.b16 %v369
      %v424 = vunpack.c.l.b16 %v370
      %v425 = vunpack.c.l.b16 %v371
      %v426 = vunpack.c.l.b16 %v372
      %v427 = vunpack.c.l.b16 %v373
      %v428 = vunpack.c.l.b16 %v374
      %v429 = vunpack.c.l.b16 %v375
      %v430 = vunpack.c.l.b16 %v376
      %v431 = vunpack.c.l.b16 %v377
      %v432 = vunpack.c.l.b16 %v378
      %v433 = vunpack.c.l.b16 %v379
      %v434 = vpack.c.b16 %v419, %v418
      %v435 = vpack.c.b16 %v421, %v420
      %v436 = vpack.c.b16 %v423, %v422
      %v437 = vpack.c.b16 %v425, %v424
      %v438 = vpack.c.b16 %v427, %v426
      %v439 = vpack.c.b16 %v429, %v428
      %v440 = vpack.c.b16 %v431, %v430
      %v441 = vpack.c.b16 %v433, %v432
      %450 = vmatprep.subr.bf16.mxu0 0
      %451 = vmatpush1.bf16.msra.mxu0 %v434
      %452 = vmatprep.subr.bf16.mxu0 0
      %453 = vmatpush1.bf16.msra.mxu0 %v435
      %454 = vmatprep.subr.bf16.mxu0 0
      %455 = vmatpush1.bf16.msra.mxu0 %v436
      %456 = vmatprep.subr.bf16.mxu0 0
      %457 = vmatpush1.bf16.msra.mxu0 %v437
      %458 = vmatprep.subr.bf16.mxu0 0
      %459 = vmatpush1.bf16.msra.mxu0 %v438
      %460 = vmatprep.subr.bf16.mxu0 0
      %461 = vmatpush1.bf16.msra.mxu0 %v439
      %462 = vmatprep.subr.bf16.mxu0 0
      %463 = vmatpush1.bf16.msra.mxu0 %v440
      %464 = vmatprep.subr.bf16.mxu0 0
      %465 = vmatpush1.bf16.msra.mxu0 %v441
      %466 = vmatprep.subr.bf16.mxu0 0
      %467 = vmatpush1.bf16.msra.mxu0 0
      %468 = vmatprep.subr.bf16.mxu0 0
      %469 = vmatpush1.bf16.msra.mxu0 0
      %470 = vmatprep.subr.bf16.mxu0 0
      %471 = vmatpush1.bf16.msra.mxu0 0
      %472 = vmatprep.subr.bf16.mxu0 0
      %473 = vmatpush1.bf16.msra.mxu0 0
      %474 = vmatprep.subr.bf16.mxu0 0
      %475 = vmatpush1.bf16.msra.mxu0 0
      %476 = vmatprep.subr.bf16.mxu0 0
      %477 = vmatpush1.bf16.msra.mxu0 0
      %478 = vmatprep.subr.bf16.mxu0 0
      %479 = vmatpush1.bf16.msra.mxu0 0
      %480 = vmatprep.subr.bf16.mxu0 0
      %481 = vmatpush1.bf16.msra.mxu0 0
      %482 = vmatprep.mubr.bf16.mxu0 0
      %483 = vmatmul.mubr.bf16.gmra.mrb[0].mxu0 %v400
      %v484 = vpop.f32.mrb[0].mxu0
      %v485 = vadd.f32 0.0, %v484
      %v486 = vpop.f32.mrb[0].mxu0
      %v487 = vpop.f32.mrb[0].mxu0
      %v488 = vadd.f32 0.0, %v487
      %v489 = vpop.f32.mrb[0].mxu0
      %490 = vdwg.mxu0
      %v508 = vunpack.c.l.b16 %v346
      %v509 = vunpack.c.l.b16 %v347
      %v510 = vunpack.c.l.b16 %v348
      %v511 = vunpack.c.l.b16 %v349
      %v512 = vunpack.c.l.b16 %v350
      %v513 = vunpack.c.l.b16 %v351
      %v514 = vunpack.c.l.b16 %v352
      %v515 = vunpack.c.l.b16 %v353
      %v516 = vunpack.c.l.b16 %v354
      %v517 = vunpack.c.l.b16 %v355
      %v518 = vunpack.c.l.b16 %v356
      %v519 = vunpack.c.l.b16 %v357
      %v520 = vunpack.c.l.b16 %v358
      %v521 = vunpack.c.l.b16 %v359
      %v522 = vunpack.c.l.b16 %v360
      %v523 = vunpack.c.l.b16 %v361
      %v524 = vpack.c.b16 %v509, %v508
      %v525 = vpack.c.b16 %v511, %v510
      %v526 = vpack.c.b16 %v513, %v512
      %v527 = vpack.c.b16 %v515, %v514
      %v528 = vpack.c.b16 %v517, %v516
      %v529 = vpack.c.b16 %v519, %v518
      %v530 = vpack.c.b16 %v521, %v520
      %v531 = vpack.c.b16 %v523, %v522
      %540 = vmatprep.subr.bf16.mxu0 0
      %541 = vmatpush1.bf16.msra.mxu0 %v524
      %542 = vmatprep.subr.bf16.mxu0 0
      %543 = vmatpush1.bf16.msra.mxu0 %v525
      %544 = vmatprep.subr.bf16.mxu0 0
      %545 = vmatpush1.bf16.msra.mxu0 %v526
      %546 = vmatprep.subr.bf16.mxu0 0
      %547 = vmatpush1.bf16.msra.mxu0 %v527
      %548 = vmatprep.subr.bf16.mxu0 0
      %549 = vmatpush1.bf16.msra.mxu0 %v528
      %550 = vmatprep.subr.bf16.mxu0 0
      %551 = vmatpush1.bf16.msra.mxu0 %v529
      %552 = vmatprep.subr.bf16.mxu0 0
      %553 = vmatpush1.bf16.msra.mxu0 %v530
      %554 = vmatprep.subr.bf16.mxu0 0
      %555 = vmatpush1.bf16.msra.mxu0 %v531
      %556 = vmatprep.subr.bf16.mxu0 0
      %557 = vmatpush1.bf16.msra.mxu0 0
      %558 = vmatprep.subr.bf16.mxu0 0
      %559 = vmatpush1.bf16.msra.mxu0 0
      %560 = vmatprep.subr.bf16.mxu0 0
      %561 = vmatpush1.bf16.msra.mxu0 0
      %562 = vmatprep.subr.bf16.mxu0 0
      %563 = vmatpush1.bf16.msra.mxu0 0
      %564 = vmatprep.subr.bf16.mxu0 0
      %565 = vmatpush1.bf16.msra.mxu0 0
      %566 = vmatprep.subr.bf16.mxu0 0
      %567 = vmatpush1.bf16.msra.mxu0 0
      %568 = vmatprep.subr.bf16.mxu0 0
      %569 = vmatpush1.bf16.msra.mxu0 0
      %570 = vmatprep.subr.bf16.mxu0 0
      %571 = vmatpush1.bf16.msra.mxu0 0
      %572 = vmatprep.mubr.bf16.mxu0 0
      %573 = vmatmul.mubr.bf16.gmra.mrb[0].mxu0 %v386
      %v574 = vpop.f32.mrb[0].mxu0
      %v575 = vadd.f32 %v485, %v574
      %v576 = vpop.f32.mrb[0].mxu0
      %v577 = vpop.f32.mrb[0].mxu0
      %v578 = vadd.f32 %v488, %v577
      %v579 = vpop.f32.mrb[0].mxu0
      %580 = vdwg.mxu0
      %v581 = vld [vmem:[%s311] sm:$0xe]
      %s582 = scalar_lea.vmem %s3, 128
      %v583 = vld [vmem:[%s582] sm:$0xf]
      %v584 = vld [vmem:[%s582 + $0x4] sm:$0xf]
      %v585 = vld [vmem:[%s582 + $0x8] sm:$0xf]
      %v586 = vld [vmem:[%s582 + $0xc] sm:$0xf]
      %v587 = vld [vmem:[%s582 + $0x10] sm:$0xf]
      %v588 = vld [vmem:[%s582 + $0x14] sm:$0xf]
      %v589 = vld [vmem:[%s582 + $0x18] sm:$0xf]
      %v590 = vld [vmem:[%s582 + $0x1c] sm:$0xf]
      %v591 = vld [vmem:[%s582 + $0x20] sm:$0xf]
      %v592 = vld [vmem:[%s582 + $0x24] sm:$0xf]
      %v593 = vld [vmem:[%s582 + $0x28] sm:$0xf]
      %v594 = vld [vmem:[%s582 + $0x2c] sm:$0xf]
      %v595 = vld [vmem:[%s582 + $0x30] sm:$0xf]
      %v596 = vld [vmem:[%s582 + $0x34] sm:$0xf]
      %v597 = vld [vmem:[%s582 + $0x38] sm:$0xf]
      %v598 = vld [vmem:[%s582 + $0x3c] sm:$0xf]
      %v600 = vunpack.c.l.b16 %v581
      %v601 = vpack.c.b16 %v384, %v600
      %vm602 = vcmask 1046528
      %v603 = vrot.slane %v601, 1
      %v604 = vrot.slane %v387, 1
      %v605 = vsel %vm602, %v603, %v604
      %v623 = vunpack.c.l.b16 %v583
      %v624 = vunpack.c.l.b16 %v584
      %v625 = vunpack.c.l.b16 %v585
      %v626 = vunpack.c.l.b16 %v586
      %v627 = vunpack.c.l.b16 %v587
      %v628 = vunpack.c.l.b16 %v588
      %v629 = vunpack.c.l.b16 %v589
      %v630 = vunpack.c.l.b16 %v590
      %v631 = vunpack.c.l.b16 %v591
      %v632 = vunpack.c.l.b16 %v592
      %v633 = vunpack.c.l.b16 %v593
      %v634 = vunpack.c.l.b16 %v594
      %v635 = vunpack.c.l.b16 %v595
      %v636 = vunpack.c.l.b16 %v596
      %v637 = vunpack.c.l.b16 %v597
      %v638 = vunpack.c.l.b16 %v598
      %v639 = vpack.c.b16 %v624, %v623
      %v640 = vpack.c.b16 %v626, %v625
      %v641 = vpack.c.b16 %v628, %v627
      %v642 = vpack.c.b16 %v630, %v629
      %v643 = vpack.c.b16 %v632, %v631
      %v644 = vpack.c.b16 %v634, %v633
      %v645 = vpack.c.b16 %v636, %v635
      %v646 = vpack.c.b16 %v638, %v637
      %655 = vmatprep.subr.bf16.mxu0 0
      %656 = vmatpush1.bf16.msra.mxu0 %v639
      %657 = vmatprep.subr.bf16.mxu0 0
      %658 = vmatpush1.bf16.msra.mxu0 %v640
      %659 = vmatprep.subr.bf16.mxu0 0
      %660 = vmatpush1.bf16.msra.mxu0 %v641
      %661 = vmatprep.subr.bf16.mxu0 0
      %662 = vmatpush1.bf16.msra.mxu0 %v642
      %663 = vmatprep.subr.bf16.mxu0 0
      %664 = vmatpush1.bf16.msra.mxu0 %v643
      %665 = vmatprep.subr.bf16.mxu0 0
      %666 = vmatpush1.bf16.msra.mxu0 %v644
      %667 = vmatprep.subr.bf16.mxu0 0
      %668 = vmatpush1.bf16.msra.mxu0 %v645
      %669 = vmatprep.subr.bf16.mxu0 0
      %670 = vmatpush1.bf16.msra.mxu0 %v646
      %671 = vmatprep.subr.bf16.mxu0 0
      %672 = vmatpush1.bf16.msra.mxu0 0
      %673 = vmatprep.subr.bf16.mxu0 0
      %674 = vmatpush1.bf16.msra.mxu0 0
      %675 = vmatprep.subr.bf16.mxu0 0
      %676 = vmatpush1.bf16.msra.mxu0 0
      %677 = vmatprep.subr.bf16.mxu0 0
      %678 = vmatpush1.bf16.msra.mxu0 0
      %679 = vmatprep.subr.bf16.mxu0 0
      %680 = vmatpush1.bf16.msra.mxu0 0
      %681 = vmatprep.subr.bf16.mxu0 0
      %682 = vmatpush1.bf16.msra.mxu0 0
      %683 = vmatprep.subr.bf16.mxu0 0
      %684 = vmatpush1.bf16.msra.mxu0 0
      %685 = vmatprep.subr.bf16.mxu0 0
      %686 = vmatpush1.bf16.msra.mxu0 0
      %687 = vmatprep.mubr.bf16.mxu0 0
      %688 = vmatmul.mubr.bf16.gmra.mrb[0].mxu0 %v605
      %v689 = vpop.f32.mrb[0].mxu0
      %v690 = vadd.f32 0.0, %v689
      %v691 = vpop.f32.mrb[0].mxu0
      %v692 = vpop.f32.mrb[0].mxu0
      %v693 = vadd.f32 0.0, %v692
      %v694 = vpop.f32.mrb[0].mxu0
      %695 = vdwg.mxu0
      %v696 = vadd.f32 %v575, %v690
      %v697 = vadd.f32 %v578, %v693
      %v698 = vld [vmem:[%s321] sm:$0xf]
      %v699 = vld [vmem:[%s321 + $0x4] sm:$0xf]
      %s700 = scalar_lea.vmem %s3, 192
      %v701 = vld [vmem:[%s700] sm:$0xf]
      %v702 = vld [vmem:[%s700 + $0x4] sm:$0xf]
      %v703 = vld [vmem:[%s700 + $0x8] sm:$0xf]
      %v704 = vld [vmem:[%s700 + $0xc] sm:$0xf]
      %v705 = vld [vmem:[%s700 + $0x10] sm:$0xf]
      %v706 = vld [vmem:[%s700 + $0x14] sm:$0xf]
      %v707 = vld [vmem:[%s700 + $0x18] sm:$0xf]
      %v708 = vld [vmem:[%s700 + $0x1c] sm:$0xf]
      %v709 = vld [vmem:[%s700 + $0x20] sm:$0xf]
      %v710 = vld [vmem:[%s700 + $0x24] sm:$0xf]
      %v711 = vld [vmem:[%s700 + $0x28] sm:$0xf]
      %v712 = vld [vmem:[%s700 + $0x2c] sm:$0xf]
      %v713 = vld [vmem:[%s700 + $0x30] sm:$0xf]
      %v714 = vld [vmem:[%s700 + $0x34] sm:$0xf]
      %v715 = vld [vmem:[%s700 + $0x38] sm:$0xf]
      %v716 = vld [vmem:[%s700 + $0x3c] sm:$0xf]
      %v719 = vunpack.c.l.b16 %v698
      %v720 = vunpack.c.l.b16 %v699
      %v721 = vpack.c.b16 %v720, %v719
      %v739 = vunpack.c.l.b16 %v701
      %v740 = vunpack.c.l.b16 %v702
      %v741 = vunpack.c.l.b16 %v703
      %v742 = vunpack.c.l.b16 %v704
      %v743 = vunpack.c.l.b16 %v705
      %v744 = vunpack.c.l.b16 %v706
      %v745 = vunpack.c.l.b16 %v707
      %v746 = vunpack.c.l.b16 %v708
      %v747 = vunpack.c.l.b16 %v709
      %v748 = vunpack.c.l.b16 %v710
      %v749 = vunpack.c.l.b16 %v711
      %v750 = vunpack.c.l.b16 %v712
      %v751 = vunpack.c.l.b16 %v713
      %v752 = vunpack.c.l.b16 %v714
      %v753 = vunpack.c.l.b16 %v715
      %v754 = vunpack.c.l.b16 %v716
      %v755 = vpack.c.b16 %v740, %v739
      %v756 = vpack.c.b16 %v742, %v741
      %v757 = vpack.c.b16 %v744, %v743
      %v758 = vpack.c.b16 %v746, %v745
      %v759 = vpack.c.b16 %v748, %v747
      %v760 = vpack.c.b16 %v750, %v749
      %v761 = vpack.c.b16 %v752, %v751
      %v762 = vpack.c.b16 %v754, %v753
      %771 = vmatprep.subr.bf16.mxu0 0
      %772 = vmatpush1.bf16.msra.mxu0 %v755
      %773 = vmatprep.subr.bf16.mxu0 0
      %774 = vmatpush1.bf16.msra.mxu0 %v756
      %775 = vmatprep.subr.bf16.mxu0 0
      %776 = vmatpush1.bf16.msra.mxu0 %v757
      %777 = vmatprep.subr.bf16.mxu0 0
      %778 = vmatpush1.bf16.msra.mxu0 %v758
      %779 = vmatprep.subr.bf16.mxu0 0
      %780 = vmatpush1.bf16.msra.mxu0 %v759
      %781 = vmatprep.subr.bf16.mxu0 0
      %782 = vmatpush1.bf16.msra.mxu0 %v760
      %783 = vmatprep.subr.bf16.mxu0 0
      %784 = vmatpush1.bf16.msra.mxu0 %v761
      %785 = vmatprep.subr.bf16.mxu0 0
      %786 = vmatpush1.bf16.msra.mxu0 %v762
      %787 = vmatprep.subr.bf16.mxu0 0
      %788 = vmatpush1.bf16.msra.mxu0 0
      %789 = vmatprep.subr.bf16.mxu0 0
      %790 = vmatpush1.bf16.msra.mxu0 0
      %791 = vmatprep.subr.bf16.mxu0 0
      %792 = vmatpush1.bf16.msra.mxu0 0
      %793 = vmatprep.subr.bf16.mxu0 0
      %794 = vmatpush1.bf16.msra.mxu0 0
      %795 = vmatprep.subr.bf16.mxu0 0
      %796 = vmatpush1.bf16.msra.mxu0 0
      %797 = vmatprep.subr.bf16.mxu0 0
      %798 = vmatpush1.bf16.msra.mxu0 0
      %799 = vmatprep.subr.bf16.mxu0 0
      %800 = vmatpush1.bf16.msra.mxu0 0
      %801 = vmatprep.subr.bf16.mxu0 0
      %802 = vmatpush1.bf16.msra.mxu0 0
      %803 = vmatprep.mubr.bf16.mxu0 0
      %804 = vmatmul.mubr.bf16.gmra.mrb[0].mxu0 %v721
      %v805 = vpop.f32.mrb[0].mxu0
      %v806 = vadd.f32 0.0, %v805
      %v807 = vpop.f32.mrb[0].mxu0
      %v808 = vpop.f32.mrb[0].mxu0
      %v809 = vadd.f32 0.0, %v808
      %v810 = vpop.f32.mrb[0].mxu0
      %811 = vdwg.mxu0
      %v812 = vadd.f32 %v696, %v806
      %v813 = vadd.f32 %v697, %v809
      %v814 = vld [vmem:[%s321] sm:$0xf]
      %v815 = vld [vmem:[%s321 + $0x4] sm:$0xf]
      %v816 = vld [vmem:[%s321 + $0x8] sm:$0x1]
      %s817 = scalar_lea.vmem %s3, 256
      %v818 = vld [vmem:[%s817] sm:$0xf]
      %v819 = vld [vmem:[%s817 + $0x4] sm:$0xf]
      %v820 = vld [vmem:[%s817 + $0x8] sm:$0xf]
      %v821 = vld [vmem:[%s817 + $0xc] sm:$0xf]
      %v822 = vld [vmem:[%s817 + $0x10] sm:$0xf]
      %v823 = vld [vmem:[%s817 + $0x14] sm:$0xf]
      %v824 = vld [vmem:[%s817 + $0x18] sm:$0xf]
      %v825 = vld [vmem:[%s817 + $0x1c] sm:$0xf]
      %v826 = vld [vmem:[%s817 + $0x20] sm:$0xf]
      %v827 = vld [vmem:[%s817 + $0x24] sm:$0xf]
      %v828 = vld [vmem:[%s817 + $0x28] sm:$0xf]
      %v829 = vld [vmem:[%s817 + $0x2c] sm:$0xf]
      %v830 = vld [vmem:[%s817 + $0x30] sm:$0xf]
      %v831 = vld [vmem:[%s817 + $0x34] sm:$0xf]
      %v832 = vld [vmem:[%s817 + $0x38] sm:$0xf]
      %v833 = vld [vmem:[%s817 + $0x3c] sm:$0xf]
      %v837 = vunpack.c.l.b16 %v814
      %v838 = vunpack.c.l.b16 %v815
      %v839 = vunpack.c.l.b16 %v816
      %v840 = vpack.c.b16 %v838, %v837
      %v841 = vpack.c.b16 %v839, %v839
      %v843 = vshrl.u32 %v840, 16
      %v845 = vshll.u32 %v840, 16
      %v847 = vrot.slane %v845, 1
      %v848 = vor.u32 %v843, %v847
      %v850 = vshll.u32 %v841, 16
      %v852 = vrot.slane %v850, 1
      %v853 = vsel %vm388, %v848, %v852
      %v871 = vunpack.c.l.b16 %v818
      %v872 = vunpack.c.l.b16 %v819
      %v873 = vunpack.c.l.b16 %v820
      %v874 = vunpack.c.l.b16 %v821
      %v875 = vunpack.c.l.b16 %v822
      %v876 = vunpack.c.l.b16 %v823
      %v877 = vunpack.c.l.b16 %v824
      %v878 = vunpack.c.l.b16 %v825
      %v879 = vunpack.c.l.b16 %v826
      %v880 = vunpack.c.l.b16 %v827
      %v881 = vunpack.c.l.b16 %v828
      %v882 = vunpack.c.l.b16 %v829
      %v883 = vunpack.c.l.b16 %v830
      %v884 = vunpack.c.l.b16 %v831
      %v885 = vunpack.c.l.b16 %v832
      %v886 = vunpack.c.l.b16 %v833
      %v887 = vpack.c.b16 %v872, %v871
      %v888 = vpack.c.b16 %v874, %v873
      %v889 = vpack.c.b16 %v876, %v875
      %v890 = vpack.c.b16 %v878, %v877
      %v891 = vpack.c.b16 %v880, %v879
      %v892 = vpack.c.b16 %v882, %v881
      %v893 = vpack.c.b16 %v884, %v883
      %v894 = vpack.c.b16 %v886, %v885
      %903 = vmatprep.subr.bf16.mxu0 0
      %904 = vmatpush1.bf16.msra.mxu0 %v887
      %905 = vmatprep.subr.bf16.mxu0 0
      %906 = vmatpush1.bf16.msra.mxu0 %v888
      %907 = vmatprep.subr.bf16.mxu0 0
      %908 = vmatpush1.bf16.msra.mxu0 %v889
      %909 = vmatprep.subr.bf16.mxu0 0
      %910 = vmatpush1.bf16.msra.mxu0 %v890
      %911 = vmatprep.subr.bf16.mxu0 0
      %912 = vmatpush1.bf16.msra.mxu0 %v891
      %913 = vmatprep.subr.bf16.mxu0 0
      %914 = vmatpush1.bf16.msra.mxu0 %v892
      %915 = vmatprep.subr.bf16.mxu0 0
      %916 = vmatpush1.bf16.msra.mxu0 %v893
      %917 = vmatprep.subr.bf16.mxu0 0
      %918 = vmatpush1.bf16.msra.mxu0 %v894
      %919 = vmatprep.subr.bf16.mxu0 0
      %920 = vmatpush1.bf16.msra.mxu0 0
      %921 = vmatprep.subr.bf16.mxu0 0
      %922 = vmatpush1.bf16.msra.mxu0 0
      %923 = vmatprep.subr.bf16.mxu0 0
      %924 = vmatpush1.bf16.msra.mxu0 0
      %925 = vmatprep.subr.bf16.mxu0 0
      %926 = vmatpush1.bf16.msra.mxu0 0
      %927 = vmatprep.subr.bf16.mxu0 0
      %928 = vmatpush1.bf16.msra.mxu0 0
      %929 = vmatprep.subr.bf16.mxu0 0
      %930 = vmatpush1.bf16.msra.mxu0 0
      %931 = vmatprep.subr.bf16.mxu0 0
      %932 = vmatpush1.bf16.msra.mxu0 0
      %933 = vmatprep.subr.bf16.mxu0 0
      %934 = vmatpush1.bf16.msra.mxu0 0
      %935 = vmatprep.mubr.bf16.mxu0 0
      %936 = vmatmul.mubr.bf16.gmra.mrb[0].mxu0 %v853
      %v937 = vpop.f32.mrb[0].mxu0
      %v938 = vadd.f32 0.0, %v937
      %v939 = vpop.f32.mrb[0].mxu0
      %v940 = vpop.f32.mrb[0].mxu0
      %v941 = vadd.f32 0.0, %v940
      %v942 = vpop.f32.mrb[0].mxu0
      %943 = vdwg.mxu0
      %v944 = vadd.f32 %v812, %v938
      %v945 = vadd.f32 %v813, %v941
      %v946 = vld [vmem:[%s321] sm:$0xe]
      %s947 = scalar_lea.vmem %s3, 320
      %v948 = vld [vmem:[%s947] sm:$0xf]
      %v949 = vld [vmem:[%s947 + $0x4] sm:$0xf]
      %v950 = vld [vmem:[%s947 + $0x8] sm:$0xf]
      %v951 = vld [vmem:[%s947 + $0xc] sm:$0xf]
      %v952 = vld [vmem:[%s947 + $0x10] sm:$0xf]
      %v953 = vld [vmem:[%s947 + $0x14] sm:$0xf]
      %v954 = vld [vmem:[%s947 + $0x18] sm:$0xf]
      %v955 = vld [vmem:[%s947 + $0x1c] sm:$0xf]
      %v956 = vld [vmem:[%s947 + $0x20] sm:$0xf]
      %v957 = vld [vmem:[%s947 + $0x24] sm:$0xf]
      %v958 = vld [vmem:[%s947 + $0x28] sm:$0xf]
      %v959 = vld [vmem:[%s947 + $0x2c] sm:$0xf]
      %v960 = vld [vmem:[%s947 + $0x30] sm:$0xf]
      %v961 = vld [vmem:[%s947 + $0x34] sm:$0xf]
      %v962 = vld [vmem:[%s947 + $0x38] sm:$0xf]
      %v963 = vld [vmem:[%s947 + $0x3c] sm:$0xf]
      %v965 = vunpack.c.l.b16 %v946
      %v966 = vpack.c.b16 %v838, %v965
      %v967 = vrot.slane %v966, 1
      %v968 = vrot.slane %v841, 1
      %v969 = vsel %vm602, %v967, %v968
      %v987 = vunpack.c.l.b16 %v948
      %v988 = vunpack.c.l.b16 %v949
      %v989 = vunpack.c.l.b16 %v950
      %v990 = vunpack.c.l.b16 %v951
      %v991 = vunpack.c.l.b16 %v952
      %v992 = vunpack.c.l.b16 %v953
      %v993 = vunpack.c.l.b16 %v954
      %v994 = vunpack.c.l.b16 %v955
      %v995 = vunpack.c.l.b16 %v956
      %v996 = vunpack.c.l.b16 %v957
      %v997 = vunpack.c.l.b16 %v958
      %v998 = vunpack.c.l.b16 %v959
      %v999 = vunpack.c.l.b16 %v960
      %v1000 = vunpack.c.l.b16 %v961
      %v1001 = vunpack.c.l.b16 %v962
      %v1002 = vunpack.c.l.b16 %v963
      %v1003 = vpack.c.b16 %v988, %v987
      %v1004 = vpack.c.b16 %v990, %v989
      %v1005 = vpack.c.b16 %v992, %v991
      %v1006 = vpack.c.b16 %v994, %v993
      %v1007 = vpack.c.b16 %v996, %v995
      %v1008 = vpack.c.b16 %v998, %v997
      %v1009 = vpack.c.b16 %v1000, %v999
      %v1010 = vpack.c.b16 %v1002, %v1001
      %1019 = vmatprep.subr.bf16.mxu0 0
      %1020 = vmatpush1.bf16.msra.mxu0 %v1003
      %1021 = vmatprep.subr.bf16.mxu0 0
      %1022 = vmatpush1.bf16.msra.mxu0 %v1004
      %1023 = vmatprep.subr.bf16.mxu0 0
      %1024 = vmatpush1.bf16.msra.mxu0 %v1005
      %1025 = vmatprep.subr.bf16.mxu0 0
      %1026 = vmatpush1.bf16.msra.mxu0 %v1006
      %1027 = vmatprep.subr.bf16.mxu0 0
      %1028 = vmatpush1.bf16.msra.mxu0 %v1007
      %1029 = vmatprep.subr.bf16.mxu0 0
      %1030 = vmatpush1.bf16.msra.mxu0 %v1008
      %1031 = vmatprep.subr.bf16.mxu0 0
      %1032 = vmatpush1.bf16.msra.mxu0 %v1009
      %1033 = vmatprep.subr.bf16.mxu0 0
      %1034 = vmatpush1.bf16.msra.mxu0 %v1010
      %1035 = vmatprep.subr.bf16.mxu0 0
      %1036 = vmatpush1.bf16.msra.mxu0 0
      %1037 = vmatprep.subr.bf16.mxu0 0
      %1038 = vmatpush1.bf16.msra.mxu0 0
      %1039 = vmatprep.subr.bf16.mxu0 0
      %1040 = vmatpush1.bf16.msra.mxu0 0
      %1041 = vmatprep.subr.bf16.mxu0 0
      %1042 = vmatpush1.bf16.msra.mxu0 0
      %1043 = vmatprep.subr.bf16.mxu0 0
      %1044 = vmatpush1.bf16.msra.mxu0 0
      %1045 = vmatprep.subr.bf16.mxu0 0
      %1046 = vmatpush1.bf16.msra.mxu0 0
      %1047 = vmatprep.subr.bf16.mxu0 0
      %1048 = vmatpush1.bf16.msra.mxu0 0
      %1049 = vmatprep.subr.bf16.mxu0 0
      %1050 = vmatpush1.bf16.msra.mxu0 0
      %1051 = vmatprep.mubr.bf16.mxu0 0
      %1052 = vmatmul.mubr.bf16.gmra.mrb[0].mxu0 %v969
      %v1053 = vpop.f32.mrb[0].mxu0
      %v1054 = vadd.f32 0.0, %v1053
      %v1055 = vpop.f32.mrb[0].mxu0
      %v1056 = vpop.f32.mrb[0].mxu0
      %v1057 = vadd.f32 0.0, %v1056
      %v1058 = vpop.f32.mrb[0].mxu0
      %1059 = vdwg.mxu0
      %v1060 = vadd.f32 %v944, %v1054
      %v1061 = vadd.f32 %v945, %v1057
      %v1062 = vld [vmem:[%s332] sm:$0xf]
      %v1063 = vld [vmem:[%s332 + $0x4] sm:$0xf]
      %s1064 = scalar_lea.vmem %s3, 384
      %v1065 = vld [vmem:[%s1064] sm:$0xf]
      %v1066 = vld [vmem:[%s1064 + $0x4] sm:$0xf]
      %v1067 = vld [vmem:[%s1064 + $0x8] sm:$0xf]
      %v1068 = vld [vmem:[%s1064 + $0xc] sm:$0xf]
      %v1069 = vld [vmem:[%s1064 + $0x10] sm:$0xf]
      %v1070 = vld [vmem:[%s1064 + $0x14] sm:$0xf]
      %v1071 = vld [vmem:[%s1064 + $0x18] sm:$0xf]
      %v1072 = vld [vmem:[%s1064 + $0x1c] sm:$0xf]
      %v1073 = vld [vmem:[%s1064 + $0x20] sm:$0xf]
      %v1074 = vld [vmem:[%s1064 + $0x24] sm:$0xf]
      %v1075 = vld [vmem:[%s1064 + $0x28] sm:$0xf]
      %v1076 = vld [vmem:[%s1064 + $0x2c] sm:$0xf]
      %v1077 = vld [vmem:[%s1064 + $0x30] sm:$0xf]
      %v1078 = vld [vmem:[%s1064 + $0x34] sm:$0xf]
      %v1079 = vld [vmem:[%s1064 + $0x38] sm:$0xf]
      %v1080 = vld [vmem:[%s1064 + $0x3c] sm:$0xf]
      %v1083 = vunpack.c.l.b16 %v1062
      %v1084 = vunpack.c.l.b16 %v1063
      %v1085 = vpack.c.b16 %v1084, %v1083
      %v1103 = vunpack.c.l.b16 %v1065
      %v1104 = vunpack.c.l.b16 %v1066
      %v1105 = vunpack.c.l.b16 %v1067
      %v1106 = vunpack.c.l.b16 %v1068
      %v1107 = vunpack.c.l.b16 %v1069
      %v1108 = vunpack.c.l.b16 %v1070
      %v1109 = vunpack.c.l.b16 %v1071
      %v1110 = vunpack.c.l.b16 %v1072
      %v1111 = vunpack.c.l.b16 %v1073
      %v1112 = vunpack.c.l.b16 %v1074
      %v1113 = vunpack.c.l.b16 %v1075
      %v1114 = vunpack.c.l.b16 %v1076
      %v1115 = vunpack.c.l.b16 %v1077
      %v1116 = vunpack.c.l.b16 %v1078
      %v1117 = vunpack.c.l.b16 %v1079
      %v1118 = vunpack.c.l.b16 %v1080
      %v1119 = vpack.c.b16 %v1104, %v1103
      %v1120 = vpack.c.b16 %v1106, %v1105
      %v1121 = vpack.c.b16 %v1108, %v1107
      %v1122 = vpack.c.b16 %v1110, %v1109
      %v1123 = vpack.c.b16 %v1112, %v1111
      %v1124 = vpack.c.b16 %v1114, %v1113
      %v1125 = vpack.c.b16 %v1116, %v1115
      %v1126 = vpack.c.b16 %v1118, %v1117
      %1135 = vmatprep.subr.bf16.mxu0 0
      %1136 = vmatpush1.bf16.msra.mxu0 %v1119
      %1137 = vmatprep.subr.bf16.mxu0 0
      %1138 = vmatpush1.bf16.msra.mxu0 %v1120
      %1139 = vmatprep.subr.bf16.mxu0 0
      %1140 = vmatpush1.bf16.msra.mxu0 %v1121
      %1141 = vmatprep.subr.bf16.mxu0 0
      %1142 = vmatpush1.bf16.msra.mxu0 %v1122
      %1143 = vmatprep.subr.bf16.mxu0 0
      %1144 = vmatpush1.bf16.msra.mxu0 %v1123
      %1145 = vmatprep.subr.bf16.mxu0 0
      %1146 = vmatpush1.bf16.msra.mxu0 %v1124
      %1147 = vmatprep.subr.bf16.mxu0 0
      %1148 = vmatpush1.bf16.msra.mxu0 %v1125
      %1149 = vmatprep.subr.bf16.mxu0 0
      %1150 = vmatpush1.bf16.msra.mxu0 %v1126
      %1151 = vmatprep.subr.bf16.mxu0 0
      %1152 = vmatpush1.bf16.msra.mxu0 0
      %1153 = vmatprep.subr.bf16.mxu0 0
      %1154 = vmatpush1.bf16.msra.mxu0 0
      %1155 = vmatprep.subr.bf16.mxu0 0
      %1156 = vmatpush1.bf16.msra.mxu0 0
      %1157 = vmatprep.subr.bf16.mxu0 0
      %1158 = vmatpush1.bf16.msra.mxu0 0
      %1159 = vmatprep.subr.bf16.mxu0 0
      %1160 = vmatpush1.bf16.msra.mxu0 0
      %1161 = vmatprep.subr.bf16.mxu0 0
      %1162 = vmatpush1.bf16.msra.mxu0 0
      %1163 = vmatprep.subr.bf16.mxu0 0
      %1164 = vmatpush1.bf16.msra.mxu0 0
      %1165 = vmatprep.subr.bf16.mxu0 0
      %1166 = vmatpush1.bf16.msra.mxu0 0
      %1167 = vmatprep.mubr.bf16.mxu0 0
      %1168 = vmatmul.mubr.bf16.gmra.mrb[0].mxu0 %v1085
      %v1169 = vpop.f32.mrb[0].mxu0
      %v1170 = vadd.f32 0.0, %v1169
      %v1171 = vpop.f32.mrb[0].mxu0
      %v1172 = vpop.f32.mrb[0].mxu0
      %v1173 = vadd.f32 0.0, %v1172
      %v1174 = vpop.f32.mrb[0].mxu0
      %1175 = vdwg.mxu0
      %v1176 = vadd.f32 %v1060, %v1170
      %v1177 = vadd.f32 %v1061, %v1173
      %v1178 = vld [vmem:[%s332] sm:$0xf]
      %v1179 = vld [vmem:[%s332 + $0x4] sm:$0xf]
      %v1180 = vld [vmem:[%s332 + $0x8] sm:$0x1]
      %s1181 = scalar_lea.vmem %s3, 448
      %v1182 = vld [vmem:[%s1181] sm:$0xf]
      %v1183 = vld [vmem:[%s1181 + $0x4] sm:$0xf]
      %v1184 = vld [vmem:[%s1181 + $0x8] sm:$0xf]
      %v1185 = vld [vmem:[%s1181 + $0xc] sm:$0xf]
      %v1186 = vld [vmem:[%s1181 + $0x10] sm:$0xf]
      %v1187 = vld [vmem:[%s1181 + $0x14] sm:$0xf]
      %v1188 = vld [vmem:[%s1181 + $0x18] sm:$0xf]
      %v1189 = vld [vmem:[%s1181 + $0x1c] sm:$0xf]
      %v1190 = vld [vmem:[%s1181 + $0x20] sm:$0xf]
      %v1191 = vld [vmem:[%s1181 + $0x24] sm:$0xf]
      %v1192 = vld [vmem:[%s1181 + $0x28] sm:$0xf]
      %v1193 = vld [vmem:[%s1181 + $0x2c] sm:$0xf]
      %v1194 = vld [vmem:[%s1181 + $0x30] sm:$0xf]
      %v1195 = vld [vmem:[%s1181 + $0x34] sm:$0xf]
      %v1196 = vld [vmem:[%s1181 + $0x38] sm:$0xf]
      %v1197 = vld [vmem:[%s1181 + $0x3c] sm:$0xf]
      %v1201 = vunpack.c.l.b16 %v1178
      %v1202 = vunpack.c.l.b16 %v1179
      %v1203 = vunpack.c.l.b16 %v1180
      %v1204 = vpack.c.b16 %v1202, %v1201
      %v1205 = vpack.c.b16 %v1203, %v1203
      %v1207 = vshrl.u32 %v1204, 16
      %v1209 = vshll.u32 %v1204, 16
      %v1211 = vrot.slane %v1209, 1
      %v1212 = vor.u32 %v1207, %v1211
      %v1214 = vshll.u32 %v1205, 16
      %v1216 = vrot.slane %v1214, 1
      %v1217 = vsel %vm388, %v1212, %v1216
      %v1235 = vunpack.c.l.b16 %v1182
      %v1236 = vunpack.c.l.b16 %v1183
      %v1237 = vunpack.c.l.b16 %v1184
      %v1238 = vunpack.c.l.b16 %v1185
      %v1239 = vunpack.c.l.b16 %v1186
      %v1240 = vunpack.c.l.b16 %v1187
      %v1241 = vunpack.c.l.b16 %v1188
      %v1242 = vunpack.c.l.b16 %v1189
      %v1243 = vunpack.c.l.b16 %v1190
      %v1244 = vunpack.c.l.b16 %v1191
      %v1245 = vunpack.c.l.b16 %v1192
      %v1246 = vunpack.c.l.b16 %v1193
      %v1247 = vunpack.c.l.b16 %v1194
      %v1248 = vunpack.c.l.b16 %v1195
      %v1249 = vunpack.c.l.b16 %v1196
      %v1250 = vunpack.c.l.b16 %v1197
      %v1251 = vpack.c.b16 %v1236, %v1235
      %v1252 = vpack.c.b16 %v1238, %v1237
      %v1253 = vpack.c.b16 %v1240, %v1239
      %v1254 = vpack.c.b16 %v1242, %v1241
      %v1255 = vpack.c.b16 %v1244, %v1243
      %v1256 = vpack.c.b16 %v1246, %v1245
      %v1257 = vpack.c.b16 %v1248, %v1247
      %v1258 = vpack.c.b16 %v1250, %v1249
      %1267 = vmatprep.subr.bf16.mxu0 0
      %1268 = vmatpush1.bf16.msra.mxu0 %v1251
      %1269 = vmatprep.subr.bf16.mxu0 0
      %1270 = vmatpush1.bf16.msra.mxu0 %v1252
      %1271 = vmatprep.subr.bf16.mxu0 0
      %1272 = vmatpush1.bf16.msra.mxu0 %v1253
      %1273 = vmatprep.subr.bf16.mxu0 0
      %1274 = vmatpush1.bf16.msra.mxu0 %v1254
      %1275 = vmatprep.subr.bf16.mxu0 0
      %1276 = vmatpush1.bf16.msra.mxu0 %v1255
      %1277 = vmatprep.subr.bf16.mxu0 0
      %1278 = vmatpush1.bf16.msra.mxu0 %v1256
      %1279 = vmatprep.subr.bf16.mxu0 0
      %1280 = vmatpush1.bf16.msra.mxu0 %v1257
      %1281 = vmatprep.subr.bf16.mxu0 0
      %1282 = vmatpush1.bf16.msra.mxu0 %v1258
      %1283 = vmatprep.subr.bf16.mxu0 0
      %1284 = vmatpush1.bf16.msra.mxu0 0
      %1285 = vmatprep.subr.bf16.mxu0 0
      %1286 = vmatpush1.bf16.msra.mxu0 0
      %1287 = vmatprep.subr.bf16.mxu0 0
      %1288 = vmatpush1.bf16.msra.mxu0 0
      %1289 = vmatprep.subr.bf16.mxu0 0
      %1290 = vmatpush1.bf16.msra.mxu0 0
      %1291 = vmatprep.subr.bf16.mxu0 0
      %1292 = vmatpush1.bf16.msra.mxu0 0
      %1293 = vmatprep.subr.bf16.mxu0 0
      %1294 = vmatpush1.bf16.msra.mxu0 0
      %1295 = vmatprep.subr.bf16.mxu0 0
      %1296 = vmatpush1.bf16.msra.mxu0 0
      %1297 = vmatprep.subr.bf16.mxu0 0
      %1298 = vmatpush1.bf16.msra.mxu0 0
      %1299 = vmatprep.mubr.bf16.mxu0 0
      %1300 = vmatmul.mubr.bf16.gmra.mrb[0].mxu0 %v1217
      %v1301 = vpop.f32.mrb[0].mxu0
      %v1302 = vadd.f32 0.0, %v1301
      %v1303 = vpop.f32.mrb[0].mxu0
      %v1304 = vpop.f32.mrb[0].mxu0
      %v1305 = vadd.f32 0.0, %v1304
      %v1306 = vpop.f32.mrb[0].mxu0
      %1307 = vdwg.mxu0
      %v1308 = vadd.f32 %v1176, %v1302
      %v1309 = vadd.f32 %v1177, %v1305
      %v1310 = vld [vmem:[%s332] sm:$0xe]
      %s1311 = scalar_lea.vmem %s3, 512
      %v1312 = vld [vmem:[%s1311] sm:$0xf]
      %v1313 = vld [vmem:[%s1311 + $0x4] sm:$0xf]
      %v1314 = vld [vmem:[%s1311 + $0x8] sm:$0xf]
      %v1315 = vld [vmem:[%s1311 + $0xc] sm:$0xf]
      %v1316 = vld [vmem:[%s1311 + $0x10] sm:$0xf]
      %v1317 = vld [vmem:[%s1311 + $0x14] sm:$0xf]
      %v1318 = vld [vmem:[%s1311 + $0x18] sm:$0xf]
      %v1319 = vld [vmem:[%s1311 + $0x1c] sm:$0xf]
      %v1320 = vld [vmem:[%s1311 + $0x20] sm:$0xf]
      %v1321 = vld [vmem:[%s1311 + $0x24] sm:$0xf]
      %v1322 = vld [vmem:[%s1311 + $0x28] sm:$0xf]
      %v1323 = vld [vmem:[%s1311 + $0x2c] sm:$0xf]
      %v1324 = vld [vmem:[%s1311 + $0x30] sm:$0xf]
      %v1325 = vld [vmem:[%s1311 + $0x34] sm:$0xf]
      %v1326 = vld [vmem:[%s1311 + $0x38] sm:$0xf]
      %v1327 = vld [vmem:[%s1311 + $0x3c] sm:$0xf]
      %v1329 = vunpack.c.l.b16 %v1310
      %v1330 = vpack.c.b16 %v1202, %v1329
      %v1331 = vrot.slane %v1330, 1
      %v1332 = vrot.slane %v1205, 1
      %v1333 = vsel %vm602, %v1331, %v1332
      %v1351 = vunpack.c.l.b16 %v1312
      %v1352 = vunpack.c.l.b16 %v1313
      %v1353 = vunpack.c.l.b16 %v1314
      %v1354 = vunpack.c.l.b16 %v1315
      %v1355 = vunpack.c.l.b16 %v1316
      %v1356 = vunpack.c.l.b16 %v1317
      %v1357 = vunpack.c.l.b16 %v1318
      %v1358 = vunpack.c.l.b16 %v1319
      %v1359 = vunpack.c.l.b16 %v1320
      %v1360 = vunpack.c.l.b16 %v1321
      %v1361 = vunpack.c.l.b16 %v1322
      %v1362 = vunpack.c.l.b16 %v1323
      %v1363 = vunpack.c.l.b16 %v1324
      %v1364 = vunpack.c.l.b16 %v1325
      %v1365 = vunpack.c.l.b16 %v1326
      %v1366 = vunpack.c.l.b16 %v1327
      %v1367 = vpack.c.b16 %v1352, %v1351
      %v1368 = vpack.c.b16 %v1354, %v1353
      %v1369 = vpack.c.b16 %v1356, %v1355
      %v1370 = vpack.c.b16 %v1358, %v1357
      %v1371 = vpack.c.b16 %v1360, %v1359
      %v1372 = vpack.c.b16 %v1362, %v1361
      %v1373 = vpack.c.b16 %v1364, %v1363
      %v1374 = vpack.c.b16 %v1366, %v1365
      %1383 = vmatprep.subr.bf16.mxu0 0
      %1384 = vmatpush1.bf16.msra.mxu0 %v1367
      %1385 = vmatprep.subr.bf16.mxu0 0
      %1386 = vmatpush1.bf16.msra.mxu0 %v1368
      %1387 = vmatprep.subr.bf16.mxu0 0
      %1388 = vmatpush1.bf16.msra.mxu0 %v1369
      %1389 = vmatprep.subr.bf16.mxu0 0
      %1390 = vmatpush1.bf16.msra.mxu0 %v1370
      %1391 = vmatprep.subr.bf16.mxu0 0
      %1392 = vmatpush1.bf16.msra.mxu0 %v1371
      %1393 = vmatprep.subr.bf16.mxu0 0
      %1394 = vmatpush1.bf16.msra.mxu0 %v1372
      %1395 = vmatprep.subr.bf16.mxu0 0
      %1396 = vmatpush1.bf16.msra.mxu0 %v1373
      %1397 = vmatprep.subr.bf16.mxu0 0
      %1398 = vmatpush1.bf16.msra.mxu0 %v1374
      %1399 = vmatprep.subr.bf16.mxu0 0
      %1400 = vmatpush1.bf16.msra.mxu0 0
      %1401 = vmatprep.subr.bf16.mxu0 0
      %1402 = vmatpush1.bf16.msra.mxu0 0
      %1403 = vmatprep.subr.bf16.mxu0 0
      %1404 = vmatpush1.bf16.msra.mxu0 0
      %1405 = vmatprep.subr.bf16.mxu0 0
      %1406 = vmatpush1.bf16.msra.mxu0 0
      %1407 = vmatprep.subr.bf16.mxu0 0
      %1408 = vmatpush1.bf16.msra.mxu0 0
      %1409 = vmatprep.subr.bf16.mxu0 0
      %1410 = vmatpush1.bf16.msra.mxu0 0
      %1411 = vmatprep.subr.bf16.mxu0 0
      %1412 = vmatpush1.bf16.msra.mxu0 0
      %1413 = vmatprep.subr.bf16.mxu0 0
      %1414 = vmatpush1.bf16.msra.mxu0 0
      %1415 = vmatprep.mubr.bf16.mxu0 0
      %1416 = vmatmul.mubr.bf16.gmra.mrb[0].mxu0 %v1333
      %v1417 = vpop.f32.mrb[0].mxu0
      %v1418 = vadd.f32 0.0, %v1417
      %v1419 = vpop.f32.mrb[0].mxu0
      %v1420 = vpop.f32.mrb[0].mxu0
      %v1421 = vadd.f32 0.0, %v1420
      %v1422 = vpop.f32.mrb[0].mxu0
      %1423 = vdwg.mxu0
      %v1424 = vadd.f32 %v1308, %v1418
      %v1425 = vadd.f32 %v1309, %v1421
      %v1426 = vld [vmem:[%s4] sm:$0x1]
      %v1428 = vlaneseq
      %v1429 = vshrl.u32 %v1428, 7
      %v1430 = vsub.s32 0, %v1429
      %v1431 = vrot.slane %v1426, %v1430
      %v1433 = vadd.f32 %v1424, %v1431
      %v1434 = vadd.f32 %v1425, %v1431
      %v1435 = vmax.f32 %v1433, 0.0
      %v1436 = vmax.f32 %v1434, 0.0
      %v1437 = vpack.c.bf16 %v1436, %v1435
      %v1439 = vunpack.c.l.b16 %v1437
      %v1440 = vunpack.c.h.b16 %v1437
      %v1441 = vpack.c.b16 %v1439, %v1439
      %v1442 = vpack.c.b16 %v1440, %v1440
      %1445 = vst [vmem:[%s342] sm:$0xf] %v1441
      %1446 = vst [vmem:[%s342 + $0x4] sm:$0xf] %v1442
      %p1447 = scmp.lt.s32.totalorder %s20, 1
      %s1448 = scalar_select %p1447, %s20, 1
      %p1449 = scmp.lt.s32.totalorder %s21, 15
      %s1450 = scalar_select %p1449, %s21, 15
      %s1451 = smul.addr %s1450, 2
      %s1452 = smul.addr %s1448, 32
      %s1453 = sadd.s32 %s1451, %s1452
      %s1454 = smul.addr %s1453, 4
      %s1455 = scalar_lea.vmem %s5, %s1454
      // Predicated region
      $region41: #{bottleneck_forward.5} parent=39 // pred_check
        %p1456 = pneg %p178
      $region42: #{bottleneck_forward.5} parent=39 // pred_check_branch
        %1458 = sbr.rel (%p1456) target = $region44
      $region43: #{bottleneck_forward.5} parent=39 // pred_region
        _
      $region44: #{bottleneck_forward.5} parent=39 // pred_fallthru
        _
    $region40: #{bottleneck_forward.5} parent=5 // pred_fallthru
      _
    %p1459 = scmp.le.s32.totalorder 2, %s11
    // Predicated region
    $region45: #{bottleneck_forward.5} parent=5 // pred_check
      %p1460 = pneg %p1459
    $region46: #{bottleneck_forward.5} parent=5 // pred_check_branch
      %1462 = sbr.rel (%p1460) target = $region48
    $region47: #{bottleneck_forward.5} parent=5 // pred_region
      %s1463 = ssub.s32 %s11, 2
      // Predicated region
      $region49: #{bottleneck_forward.5} parent=47 // pred_check
        %p1464 = pneg %p184
      $region50: #{bottleneck_forward.5} parent=47 // pred_check_branch
        %1466 = sbr.rel (%p1464) target = $region52
      $region51: #{bottleneck_forward.5} parent=47 // pred_region
        %p1467 = scmp.lt.s32.totalorder %s22, 1
        %s1468 = scalar_select %p1467, %s22, 1
        %p1469 = scmp.lt.s32.totalorder %s23, 15
        %s1470 = scalar_select %p1469, %s23, 15
        %s1471 = smul.addr %s1470, 2
        %s1472 = smul.addr %s1468, 32
        %s1473 = sadd.s32 %s1471, %s1472
        %s1474 = smul.addr %s1473, 4
        %s1475 = scalar_lea.vmem %s5, %s1474
      $region52: #{bottleneck_forward.5} parent=47 // pred_fallthru
        _
    $region48: #{bottleneck_forward.5} parent=5 // pred_fallthru
      _
  $region6: #{bottleneck_forward.5} parent=0 // loop_footer
    %s15 = sadd.s32 1, %s11
  $region7: #{bottleneck_forward.5} parent=0 // loop_footer_branch
    %10 = sbr.rel target = $region3
  $region8: #{bottleneck_forward.5} parent=0 // loop_exit
    _

// kernel: bottleneck_forward.6
$region0: #{bottleneck_forward.6}
  #allocation0 [shape = 'u32[]', space=smem, size = 0x4, offset = 0x4, fixed_abs, tag = 'smem constant byte address 0x4 - core index']
  #allocation1 [shape = 'u32[144,128]{1,0:T(1,128)}', space=vmem, size = 0x12000, scoped, tag = 'internal scratch']
  %s0 = inlined_call_operand.vmem [shape: bf16[512,128], index: 0, kind: input, shape index: {}]
  %s1 = inlined_call_operand.vmem [shape: bf16[128,128], index: 1, kind: input, shape index: {}]
  %s2 = inlined_call_operand.vmem [shape: f32[1,128], index: 2, kind: input, shape index: {}]
  %s3 = inlined_call_operand.vmem [shape: f32[512,128], index: 3, kind: output, shape index: {}]
  %s4 = sld [smem:[#allocation0]]
  $region22: #{bottleneck_forward.6} parent=0
    _
  %s6 = ssub.s32 1, %s4
  %s7 = scalar_select 0, %s6, %s4
  // Predicated region
  $region2: #{bottleneck_forward.6} parent=0 // pred_check
    _
  $region3: #{bottleneck_forward.6} parent=0 // pred_check_branch
    %9 = sbr.rel (0) target = $region5
  $region4: #{bottleneck_forward.6} parent=0 // pred_region
    _
  $region5: #{bottleneck_forward.6} parent=0 // pred_fallthru
    _
  // Predicated region
  $region6: #{bottleneck_forward.6} parent=0 // pred_check
    _
  $region7: #{bottleneck_forward.6} parent=0 // pred_check_branch
    %11 = sbr.rel (0) target = $region9
  $region8: #{bottleneck_forward.6} parent=0 // pred_region
    _
  $region9: #{bottleneck_forward.6} parent=0 // pred_fallthru
    _
  // Predicated region
  $region10: #{bottleneck_forward.6} parent=0 // pred_check
    _
  $region11: #{bottleneck_forward.6} parent=0 // pred_check_branch
    %13 = sbr.rel (0) target = $region13
  $region12: #{bottleneck_forward.6} parent=0 // pred_region
    _
  $region13: #{bottleneck_forward.6} parent=0 // pred_fallthru
    _
  %v15 = vld [vmem:[%s0] sm:$0xf]
  %v16 = vld [vmem:[%s0 + $0x4] sm:$0xf]
  %v17 = vld [vmem:[%s0 + $0x8] sm:$0xf]
  %v18 = vld [vmem:[%s0 + $0xc] sm:$0xf]
  %v19 = vld [vmem:[%s0 + $0x10] sm:$0xf]
  %v20 = vld [vmem:[%s0 + $0x14] sm:$0xf]
  %v21 = vld [vmem:[%s0 + $0x18] sm:$0xf]
  %v22 = vld [vmem:[%s0 + $0x1c] sm:$0xf]
  %v23 = vld [vmem:[%s0 + $0x20] sm:$0xf]
  %v24 = vld [vmem:[%s0 + $0x24] sm:$0xf]
  %v25 = vld [vmem:[%s0 + $0x28] sm:$0xf]
  %v26 = vld [vmem:[%s0 + $0x2c] sm:$0xf]
  %v27 = vld [vmem:[%s0 + $0x30] sm:$0xf]
  %v28 = vld [vmem:[%s0 + $0x34] sm:$0xf]
  %v29 = vld [vmem:[%s0 + $0x38] sm:$0xf]
  %v30 = vld [vmem:[%s0 + $0x3c] sm:$0xf]
  %v31 = vld [vmem:[%s0 + $0x40] sm:$0xf]
  %v32 = vld [vmem:[%s0 + $0x44] sm:$0xf]
  %v33 = vld [vmem:[%s0 + $0x48] sm:$0xf]
  %v34 = vld [vmem:[%s0 + $0x4c] sm:$0xf]
  %v35 = vld [vmem:[%s0 + $0x50] sm:$0xf]
  %v36 = vld [vmem:[%s0 + $0x54] sm:$0xf]
  %v37 = vld [vmem:[%s0 + $0x58] sm:$0xf]
  %v38 = vld [vmem:[%s0 + $0x5c] sm:$0xf]
  %v39 = vld [vmem:[%s0 + $0x60] sm:$0xf]
  %v40 = vld [vmem:[%s0 + $0x64] sm:$0xf]
  %v41 = vld [vmem:[%s0 + $0x68] sm:$0xf]
  %v42 = vld [vmem:[%s0 + $0x6c] sm:$0xf]
  %v43 = vld [vmem:[%s0 + $0x70] sm:$0xf]
  %v44 = vld [vmem:[%s0 + $0x74] sm:$0xf]
  %v45 = vld [vmem:[%s0 + $0x78] sm:$0xf]
  %v46 = vld [vmem:[%s0 + $0x7c] sm:$0xf]
  %v47 = vld [vmem:[%s0 + $0x80] sm:$0xf]
  %v48 = vld [vmem:[%s0 + $0x84] sm:$0xf]
  %v49 = vld [vmem:[%s0 + $0x88] sm:$0xf]
  %v50 = vld [vmem:[%s0 + $0x8c] sm:$0xf]
  %v51 = vld [vmem:[%s0 + $0x90] sm:$0xf]
  %v52 = vld [vmem:[%s0 + $0x94] sm:$0xf]
  %v53 = vld [vmem:[%s0 + $0x98] sm:$0xf]
  %v54 = vld [vmem:[%s0 + $0x9c] sm:$0xf]
  %v55 = vld [vmem:[%s0 + $0xa0] sm:$0xf]
  %v56 = vld [vmem:[%s0 + $0xa4] sm:$0xf]
  %v57 = vld [vmem:[%s0 + $0xa8] sm:$0xf]
  %v58 = vld [vmem:[%s0 + $0xac] sm:$0xf]
  %v59 = vld [vmem:[%s0 + $0xb0] sm:$0xf]
  %v60 = vld [vmem:[%s0 + $0xb4] sm:$0xf]
  %v61 = vld [vmem:[%s0 + $0xb8] sm:$0xf]
  %v62 = vld [vmem:[%s0 + $0xbc] sm:$0xf]
  %v63 = vld [vmem:[%s0 + $0xc0] sm:$0xf]
  %v64 = vld [vmem:[%s0 + $0xc4] sm:$0xf]
  %v65 = vld [vmem:[%s0 + $0xc8] sm:$0xf]
  %v66 = vld [vmem:[%s0 + $0xcc] sm:$0xf]
  %v67 = vld [vmem:[%s0 + $0xd0] sm:$0xf]
  %v68 = vld [vmem:[%s0 + $0xd4] sm:$0xf]
  %v69 = vld [vmem:[%s0 + $0xd8] sm:$0xf]
  %v70 = vld [vmem:[%s0 + $0xdc] sm:$0xf]
  %v71 = vld [vmem:[%s0 + $0xe0] sm:$0xf]
  %v72 = vld [vmem:[%s0 + $0xe4] sm:$0xf]
  %v73 = vld [vmem:[%s0 + $0xe8] sm:$0xf]
  %v74 = vld [vmem:[%s0 + $0xec] sm:$0xf]
  %v75 = vld [vmem:[%s0 + $0xf0] sm:$0xf]
  %v76 = vld [vmem:[%s0 + $0xf4] sm:$0xf]
  %v77 = vld [vmem:[%s0 + $0xf8] sm:$0xf]
  %v78 = vld [vmem:[%s0 + $0xfc] sm:$0xf]
  %v79 = vld [vmem:[%s1] sm:$0xf]
  %v80 = vld [vmem:[%s1 + $0x4] sm:$0xf]
  %v81 = vld [vmem:[%s1 + $0x8] sm:$0xf]
  %v82 = vld [vmem:[%s1 + $0xc] sm:$0xf]
  %v83 = vld [vmem:[%s1 + $0x10] sm:$0xf]
  %v84 = vld [vmem:[%s1 + $0x14] sm:$0xf]
  %v85 = vld [vmem:[%s1 + $0x18] sm:$0xf]
  %v86 = vld [vmem:[%s1 + $0x1c] sm:$0xf]
  %v87 = vld [vmem:[%s1 + $0x20] sm:$0xf]
  %v88 = vld [vmem:[%s1 + $0x24] sm:$0xf]
  %v89 = vld [vmem:[%s1 + $0x28] sm:$0xf]
  %v90 = vld [vmem:[%s1 + $0x2c] sm:$0xf]
  %v91 = vld [vmem:[%s1 + $0x30] sm:$0xf]
  %v92 = vld [vmem:[%s1 + $0x34] sm:$0xf]
  %v93 = vld [vmem:[%s1 + $0x38] sm:$0xf]
  %v94 = vld [vmem:[%s1 + $0x3c] sm:$0xf]
  %v95 = vld [vmem:[%s2] sm:$0x1]
  %v97 = vlaneseq
  %v98 = vshrl.u32 %v97, 7
  %v99 = vsub.s32 0, %v98
  %v100 = vrot.slane %v95, %v99
  %v166 = vunpack.c.l.b16 %v15
  %v167 = vunpack.c.l.b16 %v16
  %v168 = vunpack.c.l.b16 %v17
  %v169 = vunpack.c.l.b16 %v18
  %v170 = vunpack.c.l.b16 %v19
  %v171 = vunpack.c.l.b16 %v20
  %v172 = vunpack.c.l.b16 %v21
  %v173 = vunpack.c.l.b16 %v22
  %v174 = vunpack.c.l.b16 %v23
  %v175 = vunpack.c.l.b16 %v24
  %v176 = vunpack.c.l.b16 %v25
  %v177 = vunpack.c.l.b16 %v26
  %v178 = vunpack.c.l.b16 %v27
  %v179 = vunpack.c.l.b16 %v28
  %v180 = vunpack.c.l.b16 %v29
  %v181 = vunpack.c.l.b16 %v30
  %v182 = vunpack.c.l.b16 %v31
  %v183 = vunpack.c.l.b16 %v32
  %v184 = vunpack.c.l.b16 %v33
  %v185 = vunpack.c.l.b16 %v34
  %v186 = vunpack.c.l.b16 %v35
  %v187 = vunpack.c.l.b16 %v36
  %v188 = vunpack.c.l.b16 %v37
  %v189 = vunpack.c.l.b16 %v38
  %v190 = vunpack.c.l.b16 %v39
  %v191 = vunpack.c.l.b16 %v40
  %v192 = vunpack.c.l.b16 %v41
  %v193 = vunpack.c.l.b16 %v42
  %v194 = vunpack.c.l.b16 %v43
  %v195 = vunpack.c.l.b16 %v44
  %v196 = vunpack.c.l.b16 %v45
  %v197 = vunpack.c.l.b16 %v46
  %v198 = vunpack.c.l.b16 %v47
  %v199 = vunpack.c.l.b16 %v48
  %v200 = vunpack.c.l.b16 %v49
  %v201 = vunpack.c.l.b16 %v50
  %v202 = vunpack.c.l.b16 %v51
  %v203 = vunpack.c.l.b16 %v52
  %v204 = vunpack.c.l.b16 %v53
  %v205 = vunpack.c.l.b16 %v54
  %v206 = vunpack.c.l.b16 %v55
  %v207 = vunpack.c.l.b16 %v56
  %v208 = vunpack.c.l.b16 %v57
  %v209 = vunpack.c.l.b16 %v58
  %v210 = vunpack.c.l.b16 %v59
  %v211 = vunpack.c.l.b16 %v60
  %v212 = vunpack.c.l.b16 %v61
  %v213 = vunpack.c.l.b16 %v62
  %v214 = vunpack.c.l.b16 %v63
  %v215 = vunpack.c.l.b16 %v64
  %v216 = vunpack.c.l.b16 %v65
  %v217 = vunpack.c.l.b16 %v66
  %v218 = vunpack.c.l.b16 %v67
  %v219 = vunpack.c.l.b16 %v68
  %v220 = vunpack.c.l.b16 %v69
  %v221 = vunpack.c.l.b16 %v70
  %v222 = vunpack.c.l.b16 %v71
  %v223 = vunpack.c.l.b16 %v72
  %v224 = vunpack.c.l.b16 %v73
  %v225 = vunpack.c.l.b16 %v74
  %v226 = vunpack.c.l.b16 %v75
  %v227 = vunpack.c.l.b16 %v76
  %v228 = vunpack.c.l.b16 %v77
  %v229 = vunpack.c.l.b16 %v78
  %v230 = vpack.c.b16 %v167, %v166
  %v231 = vpack.c.b16 %v169, %v168
  %v232 = vpack.c.b16 %v171, %v170
  %v233 = vpack.c.b16 %v173, %v172
  %v234 = vpack.c.b16 %v175, %v174
  %v235 = vpack.c.b16 %v177, %v176
  %v236 = vpack.c.b16 %v179, %v178
  %v237 = vpack.c.b16 %v181, %v180
  %v238 = vpack.c.b16 %v183, %v182
  %v239 = vpack.c.b16 %v185, %v184
  %v240 = vpack.c.b16 %v187, %v186
  %v241 = vpack.c.b16 %v189, %v188
  %v242 = vpack.c.b16 %v191, %v190
  %v243 = vpack.c.b16 %v193, %v192
  %v244 = vpack.c.b16 %v195, %v194
  %v245 = vpack.c.b16 %v197, %v196
  %v246 = vpack.c.b16 %v199, %v198
  %v247 = vpack.c.b16 %v201, %v200
  %v248 = vpack.c.b16 %v203, %v202
  %v249 = vpack.c.b16 %v205, %v204
  %v250 = vpack.c.b16 %v207, %v206
  %v251 = vpack.c.b16 %v209, %v208
  %v252 = vpack.c.b16 %v211, %v210
  %v253 = vpack.c.b16 %v213, %v212
  %v254 = vpack.c.b16 %v215, %v214
  %v255 = vpack.c.b16 %v217, %v216
  %v256 = vpack.c.b16 %v219, %v218
  %v257 = vpack.c.b16 %v221, %v220
  %v258 = vpack.c.b16 %v223, %v222
  %v259 = vpack.c.b16 %v225, %v224
  %v260 = vpack.c.b16 %v227, %v226
  %v261 = vpack.c.b16 %v229, %v228
  %v310 = vunpack.c.l.b16 %v79
  %v311 = vunpack.c.l.b16 %v80
  %v312 = vunpack.c.l.b16 %v81
  %v313 = vunpack.c.l.b16 %v82
  %v314 = vunpack.c.l.b16 %v83
  %v315 = vunpack.c.l.b16 %v84
  %v316 = vunpack.c.l.b16 %v85
  %v317 = vunpack.c.l.b16 %v86
  %v318 = vunpack.c.l.b16 %v87
  %v319 = vunpack.c.l.b16 %v88
  %v320 = vunpack.c.l.b16 %v89
  %v321 = vunpack.c.l.b16 %v90
  %v322 = vunpack.c.l.b16 %v91
  %v323 = vunpack.c.l.b16 %v92
  %v324 = vunpack.c.l.b16 %v93
  %v325 = vunpack.c.l.b16 %v94
  %v326 = vpack.c.b16 %v311, %v310
  %v327 = vpack.c.b16 %v313, %v312
  %v328 = vpack.c.b16 %v315, %v314
  %v329 = vpack.c.b16 %v317, %v316
  %v330 = vpack.c.b16 %v319, %v318
  %v331 = vpack.c.b16 %v321, %v320
  %v332 = vpack.c.b16 %v323, %v322
  %v333 = vpack.c.b16 %v325, %v324
  %342 = vmatprep.subr.bf16.mxu0 0
  %343 = vmatpush1.bf16.msra.mxu0 %v326
  %344 = vmatprep.subr.bf16.mxu0 0
  %345 = vmatpush1.bf16.msra.mxu0 %v327
  %346 = vmatprep.subr.bf16.mxu0 0
  %347 = vmatpush1.bf16.msra.mxu0 %v328
  %348 = vmatprep.subr.bf16.mxu0 0
  %349 = vmatpush1.bf16.msra.mxu0 %v329
  %350 = vmatprep.subr.bf16.mxu0 0
  %351 = vmatpush1.bf16.msra.mxu0 %v330
  %352 = vmatprep.subr.bf16.mxu0 0
  %353 = vmatpush1.bf16.msra.mxu0 %v331
  %354 = vmatprep.subr.bf16.mxu0 0
  %355 = vmatpush1.bf16.msra.mxu0 %v332
  %356 = vmatprep.subr.bf16.mxu0 0
  %357 = vmatpush1.bf16.msra.mxu0 %v333
  %358 = vmatprep.subr.bf16.mxu0 0
  %359 = vmatpush1.bf16.msra.mxu0 0
  %360 = vmatprep.subr.bf16.mxu0 0
  %361 = vmatpush1.bf16.msra.mxu0 0
  %362 = vmatprep.subr.bf16.mxu0 0
  %363 = vmatpush1.bf16.msra.mxu0 0
  %364 = vmatprep.subr.bf16.mxu0 0
  %365 = vmatpush1.bf16.msra.mxu0 0
  %366 = vmatprep.subr.bf16.mxu0 0
  %367 = vmatpush1.bf16.msra.mxu0 0
  %368 = vmatprep.subr.bf16.mxu0 0
  %369 = vmatpush1.bf16.msra.mxu0 0
  %370 = vmatprep.subr.bf16.mxu0 0
  %371 = vmatpush1.bf16.msra.mxu0 0
  %372 = vmatprep.subr.bf16.mxu0 0
  %373 = vmatpush1.bf16.msra.mxu0 0
  %374 = vmatprep.mubr.bf16.mxu0 0
  %375 = vmatmul.mubr.bf16.gmra.mrb[0].mxu0 %v230
  %v376 = vpop.f32.mrb[0].mxu0
  %v377 = vadd.f32 %v100, %v376
  %v378 = vpop.f32.mrb[0].mxu0
  %v379 = vpop.f32.mrb[0].mxu0
  %v380 = vadd.f32 %v100, %v379
  %v381 = vpop.f32.mrb[0].mxu0
  %382 = vmatprep.mubr.bf16.mxu0 0
  %383 = vmatmul.mubr.bf16.gmra.mrb[0].mxu0 %v231
  %v384 = vpop.f32.mrb[0].mxu0
  %v385 = vadd.f32 %v100, %v384
  %v386 = vpop.f32.mrb[0].mxu0
  %v387 = vpop.f32.mrb[0].mxu0
  %v388 = vadd.f32 %v100, %v387
  %v389 = vpop.f32.mrb[0].mxu0
  %390 = vmatprep.mubr.bf16.mxu0 0
  %391 = vmatmul.mubr.bf16.gmra.mrb[0].mxu0 %v232
  %v392 = vpop.f32.mrb[0].mxu0
  %v393 = vadd.f32 %v100, %v392
  %v394 = vpop.f32.mrb[0].mxu0
  %v395 = vpop.f32.mrb[0].mxu0
  %v396 = vadd.f32 %v100, %v395
  %v397 = vpop.f32.mrb[0].mxu0
  %398 = vmatprep.mubr.bf16.mxu0 0
  %399 = vmatmul.mubr.bf16.gmra.mrb[0].mxu0 %v233
  %v400 = vpop.f32.mrb[0].mxu0
  %v401 = vadd.f32 %v100, %v400
  %v402 = vpop.f32.mrb[0].mxu0
  %v403 = vpop.f32.mrb[0].mxu0
  %v404 = vadd.f32 %v100, %v403
  %v405 = vpop.f32.mrb[0].mxu0
  %406 = vmatprep.mubr.bf16.mxu0 0
  %407 = vmatmul.mubr.bf16.gmra.mrb[0].mxu0 %v234
  %v408 = vpop.f32.mrb[0].mxu0
  %v409 = vadd.f32 %v100, %v408
  %v410 = vpop.f32.mrb[0].mxu0
  %v411 = vpop.f32.mrb[0].mxu0
  %v412 = vadd.f32 %v100, %v411
  %v413 = vpop.f32.mrb[0].mxu0
  %414 = vmatprep.mubr.bf16.mxu0 0
  %415 = vmatmul.mubr.bf16.gmra.mrb[0].mxu0 %v235
  %v416 = vpop.f32.mrb[0].mxu0
  %v417 = vadd.f32 %v100, %v416
  %v418 = vpop.f32.mrb[0].mxu0
  %v419 = vpop.f32.mrb[0].mxu0
  %v420 = vadd.f32 %v100, %v419
  %v421 = vpop.f32.mrb[0].mxu0
  %422 = vmatprep.mubr.bf16.mxu0 0
  %423 = vmatmul.mubr.bf16.gmra.mrb[0].mxu0 %v236
  %v424 = vpop.f32.mrb[0].mxu0
  %v425 = vadd.f32 %v100, %v424
  %v426 = vpop.f32.mrb[0].mxu0
  %v427 = vpop.f32.mrb[0].mxu0
  %v428 = vadd.f32 %v100, %v427
  %v429 = vpop.f32.mrb[0].mxu0
  %430 = vmatprep.mubr.bf16.mxu0 0
  %431 = vmatmul.mubr.bf16.gmra.mrb[0].mxu0 %v237
  %v432 = vpop.f32.mrb[0].mxu0
  %v433 = vadd.f32 %v100, %v432
  %v434 = vpop.f32.mrb[0].mxu0
  %v435 = vpop.f32.mrb[0].mxu0
  %v436 = vadd.f32 %v100, %v435
  %v437 = vpop.f32.mrb[0].mxu0
  %438 = vmatprep.mubr.bf16.mxu0 0
  %439 = vmatmul.mubr.bf16.gmra.mrb[0].mxu0 %v238
  %v440 = vpop.f32.mrb[0].mxu0
  %v441 = vadd.f32 %v100, %v440
  %v442 = vpop.f32.mrb[0].mxu0
  %v443 = vpop.f32.mrb[0].mxu0
  %v444 = vadd.f32 %v100, %v443
  %v445 = vpop.f32.mrb[0].mxu0
  %446 = vmatprep.mubr.bf16.mxu0 0
  %447 = vmatmul.mubr.bf16.gmra.mrb[0].mxu0 %v239
  %v448 = vpop.f32.mrb[0].mxu0
  %v449 = vadd.f32 %v100, %v448
  %v450 = vpop.f32.mrb[0].mxu0
  %v451 = vpop.f32.mrb[0].mxu0
  %v452 = vadd.f32 %v100, %v451
  %v453 = vpop.f32.mrb[0].mxu0
  %454 = vmatprep.mubr.bf16.mxu0 0
  %455 = vmatmul.mubr.bf16.gmra.mrb[0].mxu0 %v240
  %v456 = vpop.f32.mrb[0].mxu0
  %v457 = vadd.f32 %v100, %v456
  %v458 = vpop.f32.mrb[0].mxu0
  %v459 = vpop.f32.mrb[0].mxu0
  %v460 = vadd.f32 %v100, %v459
  %v461 = vpop.f32.mrb[0].mxu0
  %462 = vmatprep.mubr.bf16.mxu0 0
  %463 = vmatmul.mubr.bf16.gmra.mrb[0].mxu0 %v241
  %v464 = vpop.f32.mrb[0].mxu0
  %v465 = vadd.f32 %v100, %v464
  %v466 = vpop.f32.mrb[0].mxu0
  %v467 = vpop.f32.mrb[0].mxu0
  %v468 = vadd.f32 %v100, %v467
  %v469 = vpop.f32.mrb[0].mxu0
  %470 = vmatprep.mubr.bf16.mxu0 0
  %471 = vmatmul.mubr.bf16.gmra.mrb[0].mxu0 %v242
  %v472 = vpop.f32.mrb[0].mxu0
  %v473 = vadd.f32 %v100, %v472
  %v474 = vpop.f32.mrb[0].mxu0
  %v475 = vpop.f32.mrb[0].mxu0
  %v476 = vadd.f32 %v100, %v475
  %v477 = vpop.f32.mrb[0].mxu0
  %478 = vmatprep.mubr.bf16.mxu0 0
  %479 = vmatmul.mubr.bf16.gmra.mrb[0].mxu0 %v243
  %v480 = vpop.f32.mrb[0].mxu0
  %v481 = vadd.f32 %v100, %v480
  %v482 = vpop.f32.mrb[0].mxu0
  %v483 = vpop.f32.mrb[0].mxu0
  %v484 = vadd.f32 %v100, %v483
  %v485 = vpop.f32.mrb[0].mxu0
  %486 = vmatprep.mubr.bf16.mxu0 0
  %487 = vmatmul.mubr.bf16.gmra.mrb[0].mxu0 %v244
  %v488 = vpop.f32.mrb[0].mxu0
  %v489 = vadd.f32 %v100, %v488
  %v490 = vpop.f32.mrb[0].mxu0
  %v491 = vpop.f32.mrb[0].mxu0
  %v492 = vadd.f32 %v100, %v491
  %v493 = vpop.f32.mrb[0].mxu0
  %494 = vmatprep.mubr.bf16.mxu0 0
  %495 = vmatmul.mubr.bf16.gmra.mrb[0].mxu0 %v245
  %v496 = vpop.f32.mrb[0].mxu0
  %v497 = vadd.f32 %v100, %v496
  %v498 = vpop.f32.mrb[0].mxu0
  %v499 = vpop.f32.mrb[0].mxu0
  %v500 = vadd.f32 %v100, %v499
  %v501 = vpop.f32.mrb[0].mxu0
  %502 = vmatprep.mubr.bf16.mxu0 0
  %503 = vmatmul.mubr.bf16.gmra.mrb[0].mxu0 %v246
  %v504 = vpop.f32.mrb[0].mxu0
  %v505 = vadd.f32 %v100, %v504
  %v506 = vpop.f32.mrb[0].mxu0
  %v507 = vpop.f32.mrb[0].mxu0
  %v508 = vadd.f32 %v100, %v507
  %v509 = vpop.f32.mrb[0].mxu0
  %510 = vmatprep.mubr.bf16.mxu0 0
  %511 = vmatmul.mubr.bf16.gmra.mrb[0].mxu0 %v247
  %v512 = vpop.f32.mrb[0].mxu0
  %v513 = vadd.f32 %v100, %v512
  %v514 = vpop.f32.mrb[0].mxu0
  %v515 = vpop.f32.mrb[0].mxu0
  %v516 = vadd.f32 %v100, %v515
  %v517 = vpop.f32.mrb[0].mxu0
  %518 = vmatprep.mubr.bf16.mxu0 0
  %519 = vmatmul.mubr.bf16.gmra.mrb[0].mxu0 %v248
  %v520 = vpop.f32.mrb[0].mxu0
  %v521 = vadd.f32 %v100, %v520
  %v522 = vpop.f32.mrb[0].mxu0
  %v523 = vpop.f32.mrb[0].mxu0
  %v524 = vadd.f32 %v100, %v523
  %v525 = vpop.f32.mrb[0].mxu0
  %526 = vmatprep.mubr.bf16.mxu0 0
  %527 = vmatmul.mubr.bf16.gmra.mrb[0].mxu0 %v249
  %v528 = vpop.f32.mrb[0].mxu0
  %v529 = vadd.f32 %v100, %v528
  %v530 = vpop.f32.mrb[0].mxu0
  %v531 = vpop.f32.mrb[0].mxu0
  %v532 = vadd.f32 %v100, %v531
  %v533 = vpop.f32.mrb[0].mxu0
  %534 = vmatprep.mubr.bf16.mxu0 0
  %535 = vmatmul.mubr.bf16.gmra.mrb[0].mxu0 %v250
  %v536 = vpop.f32.mrb[0].mxu0
  %v537 = vadd.f32 %v100, %v536
  %v538 = vpop.f32.mrb[0].mxu0
  %v539 = vpop.f32.mrb[0].mxu0
  %v540 = vadd.f32 %v100, %v539
  %v541 = vpop.f32.mrb[0].mxu0
  %542 = vmatprep.mubr.bf16.mxu0 0
  %543 = vmatmul.mubr.bf16.gmra.mrb[0].mxu0 %v251
  %v544 = vpop.f32.mrb[0].mxu0
  %v545 = vadd.f32 %v100, %v544
  %v546 = vpop.f32.mrb[0].mxu0
  %v547 = vpop.f32.mrb[0].mxu0
  %v548 = vadd.f32 %v100, %v547
  %v549 = vpop.f32.mrb[0].mxu0
  %550 = vmatprep.mubr.bf16.mxu0 0
  %551 = vmatmul.mubr.bf16.gmra.mrb[0].mxu0 %v252
  %v552 = vpop.f32.mrb[0].mxu0
  %v553 = vadd.f32 %v100, %v552
  %v554 = vpop.f32.mrb[0].mxu0
  %v555 = vpop.f32.mrb[0].mxu0
  %v556 = vadd.f32 %v100, %v555
  %v557 = vpop.f32.mrb[0].mxu0
  %558 = vmatprep.mubr.bf16.mxu0 0
  %559 = vmatmul.mubr.bf16.gmra.mrb[0].mxu0 %v253
  %v560 = vpop.f32.mrb[0].mxu0
  %v561 = vadd.f32 %v100, %v560
  %v562 = vpop.f32.mrb[0].mxu0
  %v563 = vpop.f32.mrb[0].mxu0
  %v564 = vadd.f32 %v100, %v563
  %v565 = vpop.f32.mrb[0].mxu0
  %566 = vmatprep.mubr.bf16.mxu0 0
  %567 = vmatmul.mubr.bf16.gmra.mrb[0].mxu0 %v254
  %v568 = vpop.f32.mrb[0].mxu0
  %v569 = vadd.f32 %v100, %v568
  %v570 = vpop.f32.mrb[0].mxu0
  %v571 = vpop.f32.mrb[0].mxu0
  %v572 = vadd.f32 %v100, %v571
  %v573 = vpop.f32.mrb[0].mxu0
  %574 = vmatprep.mubr.bf16.mxu0 0
  %575 = vmatmul.mubr.bf16.gmra.mrb[0].mxu0 %v255
  %v576 = vpop.f32.mrb[0].mxu0
  %v577 = vadd.f32 %v100, %v576
  %v578 = vpop.f32.mrb[0].mxu0
  %v579 = vpop.f32.mrb[0].mxu0
  %v580 = vadd.f32 %v100, %v579
  %v581 = vpop.f32.mrb[0].mxu0
  %582 = vmatprep.mubr.bf16.mxu0 0
  %583 = vmatmul.mubr.bf16.gmra.mrb[0].mxu0 %v256
  %v584 = vpop.f32.mrb[0].mxu0
  %v585 = vadd.f32 %v100, %v584
  %v586 = vpop.f32.mrb[0].mxu0
  %v587 = vpop.f32.mrb[0].mxu0
  %v588 = vadd.f32 %v100, %v587
  %v589 = vpop.f32.mrb[0].mxu0
  %590 = vmatprep.mubr.bf16.mxu0 0
  %591 = vmatmul.mubr.bf16.gmra.mrb[0].mxu0 %v257
  %v592 = vpop.f32.mrb[0].mxu0
  %v593 = vadd.f32 %v100, %v592
  %v594 = vpop.f32.mrb[0].mxu0
  %v595 = vpop.f32.mrb[0].mxu0
  %v596 = vadd.f32 %v100, %v595
  %v597 = vpop.f32.mrb[0].mxu0
  %598 = vmatprep.mubr.bf16.mxu0 0
  %599 = vmatmul.mubr.bf16.gmra.mrb[0].mxu0 %v258
  %v600 = vpop.f32.mrb[0].mxu0
  %v601 = vadd.f32 %v100, %v600
  %v602 = vpop.f32.mrb[0].mxu0
  %v603 = vpop.f32.mrb[0].mxu0
  %v604 = vadd.f32 %v100, %v603
  %v605 = vpop.f32.mrb[0].mxu0
  %606 = vmatprep.mubr.bf16.mxu0 0
  %607 = vmatmul.mubr.bf16.gmra.mrb[0].mxu0 %v259
  %v608 = vpop.f32.mrb[0].mxu0
  %v609 = vadd.f32 %v100, %v608
  %v610 = vpop.f32.mrb[0].mxu0
  %v611 = vpop.f32.mrb[0].mxu0
  %v612 = vadd.f32 %v100, %v611
  %v613 = vpop.f32.mrb[0].mxu0
  %614 = vmatprep.mubr.bf16.mxu0 0
  %615 = vmatmul.mubr.bf16.gmra.mrb[0].mxu0 %v260
  %v616 = vpop.f32.mrb[0].mxu0
  %v617 = vadd.f32 %v100, %v616
  %v618 = vpop.f32.mrb[0].mxu0
  %v619 = vpop.f32.mrb[0].mxu0
  %v620 = vadd.f32 %v100, %v619
  %v621 = vpop.f32.mrb[0].mxu0
  %622 = vmatprep.mubr.bf16.mxu0 0
  %623 = vmatmul.mubr.bf16.gmra.mrb[0].mxu0 %v261
  %v624 = vpop.f32.mrb[0].mxu0
  %v625 = vadd.f32 %v100, %v624
  %v626 = vpop.f32.mrb[0].mxu0
  %v627 = vpop.f32.mrb[0].mxu0
  %v628 = vadd.f32 %v100, %v627
  %v629 = vpop.f32.mrb[0].mxu0
  %630 = vdwg.mxu0
  %631 = vst [vmem:[%s3] sm:$0xff] %v377
  %632 = vst [vmem:[%s3 + $0x8] sm:$0xff] %v380
  %633 = vst [vmem:[%s3 + $0x10] sm:$0xff] %v385
  %634 = vst [vmem:[%s3 + $0x18] sm:$0xff] %v388
  %635 = vst [vmem:[%s3 + $0x20] sm:$0xff] %v393
  %636 = vst [vmem:[%s3 + $0x28] sm:$0xff] %v396
  %637 = vst [vmem:[%s3 + $0x30] sm:$0xff] %v401
  %638 = vst [vmem:[%s3 + $0x38] sm:$0xff] %v404
  %639 = vst [vmem:[%s3 + $0x40] sm:$0xff] %v409
  %640 = vst [vmem:[%s3 + $0x48] sm:$0xff] %v412
  %641 = vst [vmem:[%s3 + $0x50] sm:$0xff] %v417
  %642 = vst [vmem:[%s3 + $0x58] sm:$0xff] %v420
  %643 = vst [vmem:[%s3 + $0x60] sm:$0xff] %v425
  %644 = vst [vmem:[%s3 + $0x68] sm:$0xff] %v428
  %645 = vst [vmem:[%s3 + $0x70] sm:$0xff] %v433
  %646 = vst [vmem:[%s3 + $0x78] sm:$0xff] %v436
  %647 = vst [vmem:[%s3 + $0x80] sm:$0xff] %v441
  %648 = vst [vmem:[%s3 + $0x88] sm:$0xff] %v444
  %649 = vst [vmem:[%s3 + $0x90] sm:$0xff] %v449
  %650 = vst [vmem:[%s3 + $0x98] sm:$0xff] %v452
  %651 = vst [vmem:[%s3 + $0xa0] sm:$0xff] %v457
  %652 = vst [vmem:[%s3 + $0xa8] sm:$0xff] %v460
  %653 = vst [vmem:[%s3 + $0xb0] sm:$0xff] %v465
  %654 = vst [vmem:[%s3 + $0xb8] sm:$0xff] %v468
  %655 = vst [vmem:[%s3 + $0xc0] sm:$0xff] %v473
  %656 = vst [vmem:[%s3 + $0xc8] sm:$0xff] %v476
  %657 = vst [vmem:[%s3 + $0xd0] sm:$0xff] %v481
  %658 = vst [vmem:[%s3 + $0xd8] sm:$0xff] %v484
  %659 = vst [vmem:[%s3 + $0xe0] sm:$0xff] %v489
  %660 = vst [vmem:[%s3 + $0xe8] sm:$0xff] %v492
  %661 = vst [vmem:[%s3 + $0xf0] sm:$0xff] %v497
  %662 = vst [vmem:[%s3 + $0xf8] sm:$0xff] %v500
  %663 = vst [vmem:[%s3 + $0x100] sm:$0xff] %v505
  %664 = vst [vmem:[%s3 + $0x108] sm:$0xff] %v508
  %665 = vst [vmem:[%s3 + $0x110] sm:$0xff] %v513
  %666 = vst [vmem:[%s3 + $0x118] sm:$0xff] %v516
  %667 = vst [vmem:[%s3 + $0x120] sm:$0xff] %v521
  %668 = vst [vmem:[%s3 + $0x128] sm:$0xff] %v524
  %669 = vst [vmem:[%s3 + $0x130] sm:$0xff] %v529
  %670 = vst [vmem:[%s3 + $0x138] sm:$0xff] %v532
  %671 = vst [vmem:[%s3 + $0x140] sm:$0xff] %v537
  %672 = vst [vmem:[%s3 + $0x148] sm:$0xff] %v540
  %673 = vst [vmem:[%s3 + $0x150] sm:$0xff] %v545
  %674 = vst [vmem:[%s3 + $0x158] sm:$0xff] %v548
  %675 = vst [vmem:[%s3 + $0x160] sm:$0xff] %v553
  %676 = vst [vmem:[%s3 + $0x168] sm:$0xff] %v556
  %677 = vst [vmem:[%s3 + $0x170] sm:$0xff] %v561
  %678 = vst [vmem:[%s3 + $0x178] sm:$0xff] %v564
  %679 = vst [vmem:[%s3 + $0x180] sm:$0xff] %v569
  %680 = vst [vmem:[%s3 + $0x188] sm:$0xff] %v572
  %681 = vst [vmem:[%s3 + $0x190] sm:$0xff] %v577
  %682 = vst [vmem:[%s3 + $0x198] sm:$0xff] %v580
  %683 = vst [vmem:[%s3 + $0x1a0] sm:$0xff] %v585
  %684 = vst [vmem:[%s3 + $0x1a8] sm:$0xff] %v588
  %685 = vst [vmem:[%s3 + $0x1b0] sm:$0xff] %v593
  %686 = vst [vmem:[%s3 + $0x1b8] sm:$0xff] %v596
  %687 = vst [vmem:[%s3 + $0x1c0] sm:$0xff] %v601
  %688 = vst [vmem:[%s3 + $0x1c8] sm:$0xff] %v604
  %689 = vst [vmem:[%s3 + $0x1d0] sm:$0xff] %v609
  %690 = vst [vmem:[%s3 + $0x1d8] sm:$0xff] %v612
  %691 = vst [vmem:[%s3 + $0x1e0] sm:$0xff] %v617
  %692 = vst [vmem:[%s3 + $0x1e8] sm:$0xff] %v620
  %693 = vst [vmem:[%s3 + $0x1f0] sm:$0xff] %v625
  %694 = vst [vmem:[%s3 + $0x1f8] sm:$0xff] %v628
  // Predicated region
  $region14: #{bottleneck_forward.6} parent=0 // pred_check
    _
  $region15: #{bottleneck_forward.6} parent=0 // pred_check_branch
    %696 = sbr.rel (0) target = $region17
  $region16: #{bottleneck_forward.6} parent=0 // pred_region
    _
  $region17: #{bottleneck_forward.6} parent=0 // pred_fallthru
    _
  // Predicated region
  $region18: #{bottleneck_forward.6} parent=0 // pred_check
    _
  $region19: #{bottleneck_forward.6} parent=0 // pred_check_branch
    %698 = sbr.rel (0) target = $region21
  $region20: #{bottleneck_forward.6} parent=0 // pred_region
    _
  $region21: #{bottleneck_forward.6} parent=0 // pred_fallthru
    _

// kernel: bottleneck_forward.7
$region0: #{bottleneck_forward.7}
  #allocation0 [shape = 'u32[]', space=smem, size = 0x4, offset = 0x4, fixed_abs, tag = 'smem constant byte address 0x4 - core index']
  #allocation1 [shape = 'u32[144,128]{1,0:T(1,128)}', space=vmem, size = 0x12000, scoped, tag = 'internal scratch']
  %s0 = inlined_call_operand.vmem [shape: bf16[512,128], index: 0, kind: input, shape index: {}]
  %s1 = inlined_call_operand.vmem [shape: bf16[128,128], index: 1, kind: input, shape index: {}]
  %s2 = inlined_call_operand.vmem [shape: f32[1,128], index: 2, kind: input, shape index: {}]
  %s3 = inlined_call_operand.vmem [shape: f32[512,128], index: 3, kind: input, shape index: {}]
  %s4 = inlined_call_operand.vmem [shape: f32[512,128], index: 4, kind: output, shape index: {}]
  %s5 = sld [smem:[#allocation0]]
  $region26: #{bottleneck_forward.7} parent=0
    _
  %s7 = ssub.s32 1, %s5
  %s8 = scalar_select 0, %s7, %s5
  // Predicated region
  $region2: #{bottleneck_forward.7} parent=0 // pred_check
    _
  $region3: #{bottleneck_forward.7} parent=0 // pred_check_branch
    %10 = sbr.rel (0) target = $region5
  $region4: #{bottleneck_forward.7} parent=0 // pred_region
    _
  $region5: #{bottleneck_forward.7} parent=0 // pred_fallthru
    _
  // Predicated region
  $region6: #{bottleneck_forward.7} parent=0 // pred_check
    _
  $region7: #{bottleneck_forward.7} parent=0 // pred_check_branch
    %12 = sbr.rel (0) target = $region9
  $region8: #{bottleneck_forward.7} parent=0 // pred_region
    _
  $region9: #{bottleneck_forward.7} parent=0 // pred_fallthru
    _
  // Predicated region
  $region10: #{bottleneck_forward.7} parent=0 // pred_check
    _
  $region11: #{bottleneck_forward.7} parent=0 // pred_check_branch
    %14 = sbr.rel (0) target = $region13
  $region12: #{bottleneck_forward.7} parent=0 // pred_region
    _
  $region13: #{bottleneck_forward.7} parent=0 // pred_fallthru
    _
  // Predicated region
  $region14: #{bottleneck_forward.7} parent=0 // pred_check
    _
  $region15: #{bottleneck_forward.7} parent=0 // pred_check_branch
    %16 = sbr.rel (0) target = $region17
  $region16: #{bottleneck_forward.7} parent=0 // pred_region
    _
  $region17: #{bottleneck_forward.7} parent=0 // pred_fallthru
    _
  %v18 = vld [vmem:[%s0] sm:$0xf]
  %v19 = vld [vmem:[%s0 + $0x4] sm:$0xf]
  %v20 = vld [vmem:[%s0 + $0x8] sm:$0xf]
  %v21 = vld [vmem:[%s0 + $0xc] sm:$0xf]
  %v22 = vld [vmem:[%s0 + $0x10] sm:$0xf]
  %v23 = vld [vmem:[%s0 + $0x14] sm:$0xf]
  %v24 = vld [vmem:[%s0 + $0x18] sm:$0xf]
  %v25 = vld [vmem:[%s0 + $0x1c] sm:$0xf]
  %v26 = vld [vmem:[%s0 + $0x20] sm:$0xf]
  %v27 = vld [vmem:[%s0 + $0x24] sm:$0xf]
  %v28 = vld [vmem:[%s0 + $0x28] sm:$0xf]
  %v29 = vld [vmem:[%s0 + $0x2c] sm:$0xf]
  %v30 = vld [vmem:[%s0 + $0x30] sm:$0xf]
  %v31 = vld [vmem:[%s0 + $0x34] sm:$0xf]
  %v32 = vld [vmem:[%s0 + $0x38] sm:$0xf]
  %v33 = vld [vmem:[%s0 + $0x3c] sm:$0xf]
  %v34 = vld [vmem:[%s0 + $0x40] sm:$0xf]
  %v35 = vld [vmem:[%s0 + $0x44] sm:$0xf]
  %v36 = vld [vmem:[%s0 + $0x48] sm:$0xf]
  %v37 = vld [vmem:[%s0 + $0x4c] sm:$0xf]
  %v38 = vld [vmem:[%s0 + $0x50] sm:$0xf]
  %v39 = vld [vmem:[%s0 + $0x54] sm:$0xf]
  %v40 = vld [vmem:[%s0 + $0x58] sm:$0xf]
  %v41 = vld [vmem:[%s0 + $0x5c] sm:$0xf]
  %v42 = vld [vmem:[%s0 + $0x60] sm:$0xf]
  %v43 = vld [vmem:[%s0 + $0x64] sm:$0xf]
  %v44 = vld [vmem:[%s0 + $0x68] sm:$0xf]
  %v45 = vld [vmem:[%s0 + $0x6c] sm:$0xf]
  %v46 = vld [vmem:[%s0 + $0x70] sm:$0xf]
  %v47 = vld [vmem:[%s0 + $0x74] sm:$0xf]
  %v48 = vld [vmem:[%s0 + $0x78] sm:$0xf]
  %v49 = vld [vmem:[%s0 + $0x7c] sm:$0xf]
  %v50 = vld [vmem:[%s0 + $0x80] sm:$0xf]
  %v51 = vld [vmem:[%s0 + $0x84] sm:$0xf]
  %v52 = vld [vmem:[%s0 + $0x88] sm:$0xf]
  %v53 = vld [vmem:[%s0 + $0x8c] sm:$0xf]
  %v54 = vld [vmem:[%s0 + $0x90] sm:$0xf]
  %v55 = vld [vmem:[%s0 + $0x94] sm:$0xf]
  %v56 = vld [vmem:[%s0 + $0x98] sm:$0xf]
  %v57 = vld [vmem:[%s0 + $0x9c] sm:$0xf]
  %v58 = vld [vmem:[%s0 + $0xa0] sm:$0xf]
  %v59 = vld [vmem:[%s0 + $0xa4] sm:$0xf]
  %v60 = vld [vmem:[%s0 + $0xa8] sm:$0xf]
  %v61 = vld [vmem:[%s0 + $0xac] sm:$0xf]
  %v62 = vld [vmem:[%s0 + $0xb0] sm:$0xf]
  %v63 = vld [vmem:[%s0 + $0xb4] sm:$0xf]
  %v64 = vld [vmem:[%s0 + $0xb8] sm:$0xf]
  %v65 = vld [vmem:[%s0 + $0xbc] sm:$0xf]
  %v66 = vld [vmem:[%s0 + $0xc0] sm:$0xf]
  %v67 = vld [vmem:[%s0 + $0xc4] sm:$0xf]
  %v68 = vld [vmem:[%s0 + $0xc8] sm:$0xf]
  %v69 = vld [vmem:[%s0 + $0xcc] sm:$0xf]
  %v70 = vld [vmem:[%s0 + $0xd0] sm:$0xf]
  %v71 = vld [vmem:[%s0 + $0xd4] sm:$0xf]
  %v72 = vld [vmem:[%s0 + $0xd8] sm:$0xf]
  %v73 = vld [vmem:[%s0 + $0xdc] sm:$0xf]
  %v74 = vld [vmem:[%s0 + $0xe0] sm:$0xf]
  %v75 = vld [vmem:[%s0 + $0xe4] sm:$0xf]
  %v76 = vld [vmem:[%s0 + $0xe8] sm:$0xf]
  %v77 = vld [vmem:[%s0 + $0xec] sm:$0xf]
  %v78 = vld [vmem:[%s0 + $0xf0] sm:$0xf]
  %v79 = vld [vmem:[%s0 + $0xf4] sm:$0xf]
  %v80 = vld [vmem:[%s0 + $0xf8] sm:$0xf]
  %v81 = vld [vmem:[%s0 + $0xfc] sm:$0xf]
  %v82 = vld [vmem:[%s1] sm:$0xf]
  %v83 = vld [vmem:[%s1 + $0x4] sm:$0xf]
  %v84 = vld [vmem:[%s1 + $0x8] sm:$0xf]
  %v85 = vld [vmem:[%s1 + $0xc] sm:$0xf]
  %v86 = vld [vmem:[%s1 + $0x10] sm:$0xf]
  %v87 = vld [vmem:[%s1 + $0x14] sm:$0xf]
  %v88 = vld [vmem:[%s1 + $0x18] sm:$0xf]
  %v89 = vld [vmem:[%s1 + $0x1c] sm:$0xf]
  %v90 = vld [vmem:[%s1 + $0x20] sm:$0xf]
  %v91 = vld [vmem:[%s1 + $0x24] sm:$0xf]
  %v92 = vld [vmem:[%s1 + $0x28] sm:$0xf]
  %v93 = vld [vmem:[%s1 + $0x2c] sm:$0xf]
  %v94 = vld [vmem:[%s1 + $0x30] sm:$0xf]
  %v95 = vld [vmem:[%s1 + $0x34] sm:$0xf]
  %v96 = vld [vmem:[%s1 + $0x38] sm:$0xf]
  %v97 = vld [vmem:[%s1 + $0x3c] sm:$0xf]
  %v98 = vld [vmem:[%s2] sm:$0x1]
  %v100 = vlaneseq
  %v101 = vshrl.u32 %v100, 7
  %v102 = vsub.s32 0, %v101
  %v103 = vrot.slane %v98, %v102
  %v169 = vunpack.c.l.b16 %v18
  %v170 = vunpack.c.l.b16 %v19
  %v171 = vunpack.c.l.b16 %v20
  %v172 = vunpack.c.l.b16 %v21
  %v173 = vunpack.c.l.b16 %v22
  %v174 = vunpack.c.l.b16 %v23
  %v175 = vunpack.c.l.b16 %v24
  %v176 = vunpack.c.l.b16 %v25
  %v177 = vunpack.c.l.b16 %v26
  %v178 = vunpack.c.l.b16 %v27
  %v179 = vunpack.c.l.b16 %v28
  %v180 = vunpack.c.l.b16 %v29
  %v181 = vunpack.c.l.b16 %v30
  %v182 = vunpack.c.l.b16 %v31
  %v183 = vunpack.c.l.b16 %v32
  %v184 = vunpack.c.l.b16 %v33
  %v185 = vunpack.c.l.b16 %v34
  %v186 = vunpack.c.l.b16 %v35
  %v187 = vunpack.c.l.b16 %v36
  %v188 = vunpack.c.l.b16 %v37
  %v189 = vunpack.c.l.b16 %v38
  %v190 = vunpack.c.l.b16 %v39
  %v191 = vunpack.c.l.b16 %v40
  %v192 = vunpack.c.l.b16 %v41
  %v193 = vunpack.c.l.b16 %v42
  %v194 = vunpack.c.l.b16 %v43
  %v195 = vunpack.c.l.b16 %v44
  %v196 = vunpack.c.l.b16 %v45
  %v197 = vunpack.c.l.b16 %v46
  %v198 = vunpack.c.l.b16 %v47
  %v199 = vunpack.c.l.b16 %v48
  %v200 = vunpack.c.l.b16 %v49
  %v201 = vunpack.c.l.b16 %v50
  %v202 = vunpack.c.l.b16 %v51
  %v203 = vunpack.c.l.b16 %v52
  %v204 = vunpack.c.l.b16 %v53
  %v205 = vunpack.c.l.b16 %v54
  %v206 = vunpack.c.l.b16 %v55
  %v207 = vunpack.c.l.b16 %v56
  %v208 = vunpack.c.l.b16 %v57
  %v209 = vunpack.c.l.b16 %v58
  %v210 = vunpack.c.l.b16 %v59
  %v211 = vunpack.c.l.b16 %v60
  %v212 = vunpack.c.l.b16 %v61
  %v213 = vunpack.c.l.b16 %v62
  %v214 = vunpack.c.l.b16 %v63
  %v215 = vunpack.c.l.b16 %v64
  %v216 = vunpack.c.l.b16 %v65
  %v217 = vunpack.c.l.b16 %v66
  %v218 = vunpack.c.l.b16 %v67
  %v219 = vunpack.c.l.b16 %v68
  %v220 = vunpack.c.l.b16 %v69
  %v221 = vunpack.c.l.b16 %v70
  %v222 = vunpack.c.l.b16 %v71
  %v223 = vunpack.c.l.b16 %v72
  %v224 = vunpack.c.l.b16 %v73
  %v225 = vunpack.c.l.b16 %v74
  %v226 = vunpack.c.l.b16 %v75
  %v227 = vunpack.c.l.b16 %v76
  %v228 = vunpack.c.l.b16 %v77
  %v229 = vunpack.c.l.b16 %v78
  %v230 = vunpack.c.l.b16 %v79
  %v231 = vunpack.c.l.b16 %v80
  %v232 = vunpack.c.l.b16 %v81
  %v233 = vpack.c.b16 %v170, %v169
  %v234 = vpack.c.b16 %v172, %v171
  %v235 = vpack.c.b16 %v174, %v173
  %v236 = vpack.c.b16 %v176, %v175
  %v237 = vpack.c.b16 %v178, %v177
  %v238 = vpack.c.b16 %v180, %v179
  %v239 = vpack.c.b16 %v182, %v181
  %v240 = vpack.c.b16 %v184, %v183
  %v241 = vpack.c.b16 %v186, %v185
  %v242 = vpack.c.b16 %v188, %v187
  %v243 = vpack.c.b16 %v190, %v189
  %v244 = vpack.c.b16 %v192, %v191
  %v245 = vpack.c.b16 %v194, %v193
  %v246 = vpack.c.b16 %v196, %v195
  %v247 = vpack.c.b16 %v198, %v197
  %v248 = vpack.c.b16 %v200, %v199
  %v249 = vpack.c.b16 %v202, %v201
  %v250 = vpack.c.b16 %v204, %v203
  %v251 = vpack.c.b16 %v206, %v205
  %v252 = vpack.c.b16 %v208, %v207
  %v253 = vpack.c.b16 %v210, %v209
  %v254 = vpack.c.b16 %v212, %v211
  %v255 = vpack.c.b16 %v214, %v213
  %v256 = vpack.c.b16 %v216, %v215
  %v257 = vpack.c.b16 %v218, %v217
  %v258 = vpack.c.b16 %v220, %v219
  %v259 = vpack.c.b16 %v222, %v221
  %v260 = vpack.c.b16 %v224, %v223
  %v261 = vpack.c.b16 %v226, %v225
  %v262 = vpack.c.b16 %v228, %v227
  %v263 = vpack.c.b16 %v230, %v229
  %v264 = vpack.c.b16 %v232, %v231
  %v313 = vunpack.c.l.b16 %v82
  %v314 = vunpack.c.l.b16 %v83
  %v315 = vunpack.c.l.b16 %v84
  %v316 = vunpack.c.l.b16 %v85
  %v317 = vunpack.c.l.b16 %v86
  %v318 = vunpack.c.l.b16 %v87
  %v319 = vunpack.c.l.b16 %v88
  %v320 = vunpack.c.l.b16 %v89
  %v321 = vunpack.c.l.b16 %v90
  %v322 = vunpack.c.l.b16 %v91
  %v323 = vunpack.c.l.b16 %v92
  %v324 = vunpack.c.l.b16 %v93
  %v325 = vunpack.c.l.b16 %v94
  %v326 = vunpack.c.l.b16 %v95
  %v327 = vunpack.c.l.b16 %v96
  %v328 = vunpack.c.l.b16 %v97
  %v329 = vpack.c.b16 %v314, %v313
  %v330 = vpack.c.b16 %v316, %v315
  %v331 = vpack.c.b16 %v318, %v317
  %v332 = vpack.c.b16 %v320, %v319
  %v333 = vpack.c.b16 %v322, %v321
  %v334 = vpack.c.b16 %v324, %v323
  %v335 = vpack.c.b16 %v326, %v325
  %v336 = vpack.c.b16 %v328, %v327
  %345 = vmatprep.subr.bf16.mxu0 0
  %346 = vmatpush1.bf16.msra.mxu0 %v329
  %347 = vmatprep.subr.bf16.mxu0 0
  %348 = vmatpush1.bf16.msra.mxu0 %v330
  %349 = vmatprep.subr.bf16.mxu0 0
  %350 = vmatpush1.bf16.msra.mxu0 %v331
  %351 = vmatprep.subr.bf16.mxu0 0
  %352 = vmatpush1.bf16.msra.mxu0 %v332
  %353 = vmatprep.subr.bf16.mxu0 0
  %354 = vmatpush1.bf16.msra.mxu0 %v333
  %355 = vmatprep.subr.bf16.mxu0 0
  %356 = vmatpush1.bf16.msra.mxu0 %v334
  %357 = vmatprep.subr.bf16.mxu0 0
  %358 = vmatpush1.bf16.msra.mxu0 %v335
  %359 = vmatprep.subr.bf16.mxu0 0
  %360 = vmatpush1.bf16.msra.mxu0 %v336
  %361 = vmatprep.subr.bf16.mxu0 0
  %362 = vmatpush1.bf16.msra.mxu0 0
  %363 = vmatprep.subr.bf16.mxu0 0
  %364 = vmatpush1.bf16.msra.mxu0 0
  %365 = vmatprep.subr.bf16.mxu0 0
  %366 = vmatpush1.bf16.msra.mxu0 0
  %367 = vmatprep.subr.bf16.mxu0 0
  %368 = vmatpush1.bf16.msra.mxu0 0
  %369 = vmatprep.subr.bf16.mxu0 0
  %370 = vmatpush1.bf16.msra.mxu0 0
  %371 = vmatprep.subr.bf16.mxu0 0
  %372 = vmatpush1.bf16.msra.mxu0 0
  %373 = vmatprep.subr.bf16.mxu0 0
  %374 = vmatpush1.bf16.msra.mxu0 0
  %375 = vmatprep.subr.bf16.mxu0 0
  %376 = vmatpush1.bf16.msra.mxu0 0
  %377 = vmatprep.mubr.bf16.mxu0 0
  %378 = vmatmul.mubr.bf16.gmra.mrb[0].mxu0 %v233
  %v379 = vpop.f32.mrb[0].mxu0
  %v380 = vadd.f32 %v103, %v379
  %v381 = vpop.f32.mrb[0].mxu0
  %v382 = vpop.f32.mrb[0].mxu0
  %v383 = vadd.f32 %v103, %v382
  %v384 = vpop.f32.mrb[0].mxu0
  %385 = vmatprep.mubr.bf16.mxu0 0
  %386 = vmatmul.mubr.bf16.gmra.mrb[0].mxu0 %v234
  %v387 = vpop.f32.mrb[0].mxu0
  %v388 = vadd.f32 %v103, %v387
  %v389 = vpop.f32.mrb[0].mxu0
  %v390 = vpop.f32.mrb[0].mxu0
  %v391 = vadd.f32 %v103, %v390
  %v392 = vpop.f32.mrb[0].mxu0
  %393 = vmatprep.mubr.bf16.mxu0 0
  %394 = vmatmul.mubr.bf16.gmra.mrb[0].mxu0 %v235
  %v395 = vpop.f32.mrb[0].mxu0
  %v396 = vadd.f32 %v103, %v395
  %v397 = vpop.f32.mrb[0].mxu0
  %v398 = vpop.f32.mrb[0].mxu0
  %v399 = vadd.f32 %v103, %v398
  %v400 = vpop.f32.mrb[0].mxu0
  %401 = vmatprep.mubr.bf16.mxu0 0
  %402 = vmatmul.mubr.bf16.gmra.mrb[0].mxu0 %v236
  %v403 = vpop.f32.mrb[0].mxu0
  %v404 = vadd.f32 %v103, %v403
  %v405 = vpop.f32.mrb[0].mxu0
  %v406 = vpop.f32.mrb[0].mxu0
  %v407 = vadd.f32 %v103, %v406
  %v408 = vpop.f32.mrb[0].mxu0
  %409 = vmatprep.mubr.bf16.mxu0 0
  %410 = vmatmul.mubr.bf16.gmra.mrb[0].mxu0 %v237
  %v411 = vpop.f32.mrb[0].mxu0
  %v412 = vadd.f32 %v103, %v411
  %v413 = vpop.f32.mrb[0].mxu0
  %v414 = vpop.f32.mrb[0].mxu0
  %v415 = vadd.f32 %v103, %v414
  %v416 = vpop.f32.mrb[0].mxu0
  %417 = vmatprep.mubr.bf16.mxu0 0
  %418 = vmatmul.mubr.bf16.gmra.mrb[0].mxu0 %v238
  %v419 = vpop.f32.mrb[0].mxu0
  %v420 = vadd.f32 %v103, %v419
  %v421 = vpop.f32.mrb[0].mxu0
  %v422 = vpop.f32.mrb[0].mxu0
  %v423 = vadd.f32 %v103, %v422
  %v424 = vpop.f32.mrb[0].mxu0
  %425 = vmatprep.mubr.bf16.mxu0 0
  %426 = vmatmul.mubr.bf16.gmra.mrb[0].mxu0 %v239
  %v427 = vpop.f32.mrb[0].mxu0
  %v428 = vadd.f32 %v103, %v427
  %v429 = vpop.f32.mrb[0].mxu0
  %v430 = vpop.f32.mrb[0].mxu0
  %v431 = vadd.f32 %v103, %v430
  %v432 = vpop.f32.mrb[0].mxu0
  %433 = vmatprep.mubr.bf16.mxu0 0
  %434 = vmatmul.mubr.bf16.gmra.mrb[0].mxu0 %v240
  %v435 = vpop.f32.mrb[0].mxu0
  %v436 = vadd.f32 %v103, %v435
  %v437 = vpop.f32.mrb[0].mxu0
  %v438 = vpop.f32.mrb[0].mxu0
  %v439 = vadd.f32 %v103, %v438
  %v440 = vpop.f32.mrb[0].mxu0
  %441 = vmatprep.mubr.bf16.mxu0 0
  %442 = vmatmul.mubr.bf16.gmra.mrb[0].mxu0 %v241
  %v443 = vpop.f32.mrb[0].mxu0
  %v444 = vadd.f32 %v103, %v443
  %v445 = vpop.f32.mrb[0].mxu0
  %v446 = vpop.f32.mrb[0].mxu0
  %v447 = vadd.f32 %v103, %v446
  %v448 = vpop.f32.mrb[0].mxu0
  %449 = vmatprep.mubr.bf16.mxu0 0
  %450 = vmatmul.mubr.bf16.gmra.mrb[0].mxu0 %v242
  %v451 = vpop.f32.mrb[0].mxu0
  %v452 = vadd.f32 %v103, %v451
  %v453 = vpop.f32.mrb[0].mxu0
  %v454 = vpop.f32.mrb[0].mxu0
  %v455 = vadd.f32 %v103, %v454
  %v456 = vpop.f32.mrb[0].mxu0
  %457 = vmatprep.mubr.bf16.mxu0 0
  %458 = vmatmul.mubr.bf16.gmra.mrb[0].mxu0 %v243
  %v459 = vpop.f32.mrb[0].mxu0
  %v460 = vadd.f32 %v103, %v459
  %v461 = vpop.f32.mrb[0].mxu0
  %v462 = vpop.f32.mrb[0].mxu0
  %v463 = vadd.f32 %v103, %v462
  %v464 = vpop.f32.mrb[0].mxu0
  %465 = vmatprep.mubr.bf16.mxu0 0
  %466 = vmatmul.mubr.bf16.gmra.mrb[0].mxu0 %v244
  %v467 = vpop.f32.mrb[0].mxu0
  %v468 = vadd.f32 %v103, %v467
  %v469 = vpop.f32.mrb[0].mxu0
  %v470 = vpop.f32.mrb[0].mxu0
  %v471 = vadd.f32 %v103, %v470
  %v472 = vpop.f32.mrb[0].mxu0
  %473 = vmatprep.mubr.bf16.mxu0 0
  %474 = vmatmul.mubr.bf16.gmra.mrb[0].mxu0 %v245
  %v475 = vpop.f32.mrb[0].mxu0
  %v476 = vadd.f32 %v103, %v475
  %v477 = vpop.f32.mrb[0].mxu0
  %v478 = vpop.f32.mrb[0].mxu0
  %v479 = vadd.f32 %v103, %v478
  %v480 = vpop.f32.mrb[0].mxu0
  %481 = vmatprep.mubr.bf16.mxu0 0
  %482 = vmatmul.mubr.bf16.gmra.mrb[0].mxu0 %v246
  %v483 = vpop.f32.mrb[0].mxu0
  %v484 = vadd.f32 %v103, %v483
  %v485 = vpop.f32.mrb[0].mxu0
  %v486 = vpop.f32.mrb[0].mxu0
  %v487 = vadd.f32 %v103, %v486
  %v488 = vpop.f32.mrb[0].mxu0
  %489 = vmatprep.mubr.bf16.mxu0 0
  %490 = vmatmul.mubr.bf16.gmra.mrb[0].mxu0 %v247
  %v491 = vpop.f32.mrb[0].mxu0
  %v492 = vadd.f32 %v103, %v491
  %v493 = vpop.f32.mrb[0].mxu0
  %v494 = vpop.f32.mrb[0].mxu0
  %v495 = vadd.f32 %v103, %v494
  %v496 = vpop.f32.mrb[0].mxu0
  %497 = vmatprep.mubr.bf16.mxu0 0
  %498 = vmatmul.mubr.bf16.gmra.mrb[0].mxu0 %v248
  %v499 = vpop.f32.mrb[0].mxu0
  %v500 = vadd.f32 %v103, %v499
  %v501 = vpop.f32.mrb[0].mxu0
  %v502 = vpop.f32.mrb[0].mxu0
  %v503 = vadd.f32 %v103, %v502
  %v504 = vpop.f32.mrb[0].mxu0
  %505 = vmatprep.mubr.bf16.mxu0 0
  %506 = vmatmul.mubr.bf16.gmra.mrb[0].mxu0 %v249
  %v507 = vpop.f32.mrb[0].mxu0
  %v508 = vadd.f32 %v103, %v507
  %v509 = vpop.f32.mrb[0].mxu0
  %v510 = vpop.f32.mrb[0].mxu0
  %v511 = vadd.f32 %v103, %v510
  %v512 = vpop.f32.mrb[0].mxu0
  %513 = vmatprep.mubr.bf16.mxu0 0
  %514 = vmatmul.mubr.bf16.gmra.mrb[0].mxu0 %v250
  %v515 = vpop.f32.mrb[0].mxu0
  %v516 = vadd.f32 %v103, %v515
  %v517 = vpop.f32.mrb[0].mxu0
  %v518 = vpop.f32.mrb[0].mxu0
  %v519 = vadd.f32 %v103, %v518
  %v520 = vpop.f32.mrb[0].mxu0
  %521 = vmatprep.mubr.bf16.mxu0 0
  %522 = vmatmul.mubr.bf16.gmra.mrb[0].mxu0 %v251
  %v523 = vpop.f32.mrb[0].mxu0
  %v524 = vadd.f32 %v103, %v523
  %v525 = vpop.f32.mrb[0].mxu0
  %v526 = vpop.f32.mrb[0].mxu0
  %v527 = vadd.f32 %v103, %v526
  %v528 = vpop.f32.mrb[0].mxu0
  %529 = vmatprep.mubr.bf16.mxu0 0
  %530 = vmatmul.mubr.bf16.gmra.mrb[0].mxu0 %v252
  %v531 = vpop.f32.mrb[0].mxu0
  %v532 = vadd.f32 %v103, %v531
  %v533 = vpop.f32.mrb[0].mxu0
  %v534 = vpop.f32.mrb[0].mxu0
  %v535 = vadd.f32 %v103, %v534
  %v536 = vpop.f32.mrb[0].mxu0
  %537 = vmatprep.mubr.bf16.mxu0 0
  %538 = vmatmul.mubr.bf16.gmra.mrb[0].mxu0 %v253
  %v539 = vpop.f32.mrb[0].mxu0
  %v540 = vadd.f32 %v103, %v539
  %v541 = vpop.f32.mrb[0].mxu0
  %v542 = vpop.f32.mrb[0].mxu0
  %v543 = vadd.f32 %v103, %v542
  %v544 = vpop.f32.mrb[0].mxu0
  %545 = vmatprep.mubr.bf16.mxu0 0
  %546 = vmatmul.mubr.bf16.gmra.mrb[0].mxu0 %v254
  %v547 = vpop.f32.mrb[0].mxu0
  %v548 = vadd.f32 %v103, %v547
  %v549 = vpop.f32.mrb[0].mxu0
  %v550 = vpop.f32.mrb[0].mxu0
  %v551 = vadd.f32 %v103, %v550
  %v552 = vpop.f32.mrb[0].mxu0
  %553 = vmatprep.mubr.bf16.mxu0 0
  %554 = vmatmul.mubr.bf16.gmra.mrb[0].mxu0 %v255
  %v555 = vpop.f32.mrb[0].mxu0
  %v556 = vadd.f32 %v103, %v555
  %v557 = vpop.f32.mrb[0].mxu0
  %v558 = vpop.f32.mrb[0].mxu0
  %v559 = vadd.f32 %v103, %v558
  %v560 = vpop.f32.mrb[0].mxu0
  %561 = vmatprep.mubr.bf16.mxu0 0
  %562 = vmatmul.mubr.bf16.gmra.mrb[0].mxu0 %v256
  %v563 = vpop.f32.mrb[0].mxu0
  %v564 = vadd.f32 %v103, %v563
  %v565 = vpop.f32.mrb[0].mxu0
  %v566 = vpop.f32.mrb[0].mxu0
  %v567 = vadd.f32 %v103, %v566
  %v568 = vpop.f32.mrb[0].mxu0
  %569 = vmatprep.mubr.bf16.mxu0 0
  %570 = vmatmul.mubr.bf16.gmra.mrb[0].mxu0 %v257
  %v571 = vpop.f32.mrb[0].mxu0
  %v572 = vadd.f32 %v103, %v571
  %v573 = vpop.f32.mrb[0].mxu0
  %v574 = vpop.f32.mrb[0].mxu0
  %v575 = vadd.f32 %v103, %v574
  %v576 = vpop.f32.mrb[0].mxu0
  %577 = vmatprep.mubr.bf16.mxu0 0
  %578 = vmatmul.mubr.bf16.gmra.mrb[0].mxu0 %v258
  %v579 = vpop.f32.mrb[0].mxu0
  %v580 = vadd.f32 %v103, %v579
  %v581 = vpop.f32.mrb[0].mxu0
  %v582 = vpop.f32.mrb[0].mxu0
  %v583 = vadd.f32 %v103, %v582
  %v584 = vpop.f32.mrb[0].mxu0
  %585 = vmatprep.mubr.bf16.mxu0 0
  %586 = vmatmul.mubr.bf16.gmra.mrb[0].mxu0 %v259
  %v587 = vpop.f32.mrb[0].mxu0
  %v588 = vadd.f32 %v103, %v587
  %v589 = vpop.f32.mrb[0].mxu0
  %v590 = vpop.f32.mrb[0].mxu0
  %v591 = vadd.f32 %v103, %v590
  %v592 = vpop.f32.mrb[0].mxu0
  %593 = vmatprep.mubr.bf16.mxu0 0
  %594 = vmatmul.mubr.bf16.gmra.mrb[0].mxu0 %v260
  %v595 = vpop.f32.mrb[0].mxu0
  %v596 = vadd.f32 %v103, %v595
  %v597 = vpop.f32.mrb[0].mxu0
  %v598 = vpop.f32.mrb[0].mxu0
  %v599 = vadd.f32 %v103, %v598
  %v600 = vpop.f32.mrb[0].mxu0
  %601 = vmatprep.mubr.bf16.mxu0 0
  %602 = vmatmul.mubr.bf16.gmra.mrb[0].mxu0 %v261
  %v603 = vpop.f32.mrb[0].mxu0
  %v604 = vadd.f32 %v103, %v603
  %v605 = vpop.f32.mrb[0].mxu0
  %v606 = vpop.f32.mrb[0].mxu0
  %v607 = vadd.f32 %v103, %v606
  %v608 = vpop.f32.mrb[0].mxu0
  %609 = vmatprep.mubr.bf16.mxu0 0
  %610 = vmatmul.mubr.bf16.gmra.mrb[0].mxu0 %v262
  %v611 = vpop.f32.mrb[0].mxu0
  %v612 = vadd.f32 %v103, %v611
  %v613 = vpop.f32.mrb[0].mxu0
  %v614 = vpop.f32.mrb[0].mxu0
  %v615 = vadd.f32 %v103, %v614
  %v616 = vpop.f32.mrb[0].mxu0
  %617 = vmatprep.mubr.bf16.mxu0 0
  %618 = vmatmul.mubr.bf16.gmra.mrb[0].mxu0 %v263
  %v619 = vpop.f32.mrb[0].mxu0
  %v620 = vadd.f32 %v103, %v619
  %v621 = vpop.f32.mrb[0].mxu0
  %v622 = vpop.f32.mrb[0].mxu0
  %v623 = vadd.f32 %v103, %v622
  %v624 = vpop.f32.mrb[0].mxu0
  %625 = vmatprep.mubr.bf16.mxu0 0
  %626 = vmatmul.mubr.bf16.gmra.mrb[0].mxu0 %v264
  %v627 = vpop.f32.mrb[0].mxu0
  %v628 = vadd.f32 %v103, %v627
  %v629 = vpop.f32.mrb[0].mxu0
  %v630 = vpop.f32.mrb[0].mxu0
  %v631 = vadd.f32 %v103, %v630
  %v632 = vpop.f32.mrb[0].mxu0
  %633 = vdwg.mxu0
  %v634 = vld [vmem:[%s3] sm:$0xff]
  %v635 = vld [vmem:[%s3 + $0x8] sm:$0xff]
  %v636 = vld [vmem:[%s3 + $0x10] sm:$0xff]
  %v637 = vld [vmem:[%s3 + $0x18] sm:$0xff]
  %v638 = vld [vmem:[%s3 + $0x20] sm:$0xff]
  %v639 = vld [vmem:[%s3 + $0x28] sm:$0xff]
  %v640 = vld [vmem:[%s3 + $0x30] sm:$0xff]
  %v641 = vld [vmem:[%s3 + $0x38] sm:$0xff]
  %v642 = vld [vmem:[%s3 + $0x40] sm:$0xff]
  %v643 = vld [vmem:[%s3 + $0x48] sm:$0xff]
  %v644 = vld [vmem:[%s3 + $0x50] sm:$0xff]
  %v645 = vld [vmem:[%s3 + $0x58] sm:$0xff]
  %v646 = vld [vmem:[%s3 + $0x60] sm:$0xff]
  %v647 = vld [vmem:[%s3 + $0x68] sm:$0xff]
  %v648 = vld [vmem:[%s3 + $0x70] sm:$0xff]
  %v649 = vld [vmem:[%s3 + $0x78] sm:$0xff]
  %v650 = vld [vmem:[%s3 + $0x80] sm:$0xff]
  %v651 = vld [vmem:[%s3 + $0x88] sm:$0xff]
  %v652 = vld [vmem:[%s3 + $0x90] sm:$0xff]
  %v653 = vld [vmem:[%s3 + $0x98] sm:$0xff]
  %v654 = vld [vmem:[%s3 + $0xa0] sm:$0xff]
  %v655 = vld [vmem:[%s3 + $0xa8] sm:$0xff]
  %v656 = vld [vmem:[%s3 + $0xb0] sm:$0xff]
  %v657 = vld [vmem:[%s3 + $0xb8] sm:$0xff]
  %v658 = vld [vmem:[%s3 + $0xc0] sm:$0xff]
  %v659 = vld [vmem:[%s3 + $0xc8] sm:$0xff]
  %v660 = vld [vmem:[%s3 + $0xd0] sm:$0xff]
  %v661 = vld [vmem:[%s3 + $0xd8] sm:$0xff]
  %v662 = vld [vmem:[%s3 + $0xe0] sm:$0xff]
  %v663 = vld [vmem:[%s3 + $0xe8] sm:$0xff]
  %v664 = vld [vmem:[%s3 + $0xf0] sm:$0xff]
  %v665 = vld [vmem:[%s3 + $0xf8] sm:$0xff]
  %v666 = vld [vmem:[%s3 + $0x100] sm:$0xff]
  %v667 = vld [vmem:[%s3 + $0x108] sm:$0xff]
  %v668 = vld [vmem:[%s3 + $0x110] sm:$0xff]
  %v669 = vld [vmem:[%s3 + $0x118] sm:$0xff]
  %v670 = vld [vmem:[%s3 + $0x120] sm:$0xff]
  %v671 = vld [vmem:[%s3 + $0x128] sm:$0xff]
  %v672 = vld [vmem:[%s3 + $0x130] sm:$0xff]
  %v673 = vld [vmem:[%s3 + $0x138] sm:$0xff]
  %v674 = vld [vmem:[%s3 + $0x140] sm:$0xff]
  %v675 = vld [vmem:[%s3 + $0x148] sm:$0xff]
  %v676 = vld [vmem:[%s3 + $0x150] sm:$0xff]
  %v677 = vld [vmem:[%s3 + $0x158] sm:$0xff]
  %v678 = vld [vmem:[%s3 + $0x160] sm:$0xff]
  %v679 = vld [vmem:[%s3 + $0x168] sm:$0xff]
  %v680 = vld [vmem:[%s3 + $0x170] sm:$0xff]
  %v681 = vld [vmem:[%s3 + $0x178] sm:$0xff]
  %v682 = vld [vmem:[%s3 + $0x180] sm:$0xff]
  %v683 = vld [vmem:[%s3 + $0x188] sm:$0xff]
  %v684 = vld [vmem:[%s3 + $0x190] sm:$0xff]
  %v685 = vld [vmem:[%s3 + $0x198] sm:$0xff]
  %v686 = vld [vmem:[%s3 + $0x1a0] sm:$0xff]
  %v687 = vld [vmem:[%s3 + $0x1a8] sm:$0xff]
  %v688 = vld [vmem:[%s3 + $0x1b0] sm:$0xff]
  %v689 = vld [vmem:[%s3 + $0x1b8] sm:$0xff]
  %v690 = vld [vmem:[%s3 + $0x1c0] sm:$0xff]
  %v691 = vld [vmem:[%s3 + $0x1c8] sm:$0xff]
  %v692 = vld [vmem:[%s3 + $0x1d0] sm:$0xff]
  %v693 = vld [vmem:[%s3 + $0x1d8] sm:$0xff]
  %v694 = vld [vmem:[%s3 + $0x1e0] sm:$0xff]
  %v695 = vld [vmem:[%s3 + $0x1e8] sm:$0xff]
  %v696 = vld [vmem:[%s3 + $0x1f0] sm:$0xff]
  %v697 = vld [vmem:[%s3 + $0x1f8] sm:$0xff]
  %v698 = vadd.f32 %v380, %v634
  %v699 = vadd.f32 %v383, %v635
  %v700 = vadd.f32 %v388, %v636
  %v701 = vadd.f32 %v391, %v637
  %v702 = vadd.f32 %v396, %v638
  %v703 = vadd.f32 %v399, %v639
  %v704 = vadd.f32 %v404, %v640
  %v705 = vadd.f32 %v407, %v641
  %v706 = vadd.f32 %v412, %v642
  %v707 = vadd.f32 %v415, %v643
  %v708 = vadd.f32 %v420, %v644
  %v709 = vadd.f32 %v423, %v645
  %v710 = vadd.f32 %v428, %v646
  %v711 = vadd.f32 %v431, %v647
  %v712 = vadd.f32 %v436, %v648
  %v713 = vadd.f32 %v439, %v649
  %v714 = vadd.f32 %v444, %v650
  %v715 = vadd.f32 %v447, %v651
  %v716 = vadd.f32 %v452, %v652
  %v717 = vadd.f32 %v455, %v653
  %v718 = vadd.f32 %v460, %v654
  %v719 = vadd.f32 %v463, %v655
  %v720 = vadd.f32 %v468, %v656
  %v721 = vadd.f32 %v471, %v657
  %v722 = vadd.f32 %v476, %v658
  %v723 = vadd.f32 %v479, %v659
  %v724 = vadd.f32 %v484, %v660
  %v725 = vadd.f32 %v487, %v661
  %v726 = vadd.f32 %v492, %v662
  %v727 = vadd.f32 %v495, %v663
  %v728 = vadd.f32 %v500, %v664
  %v729 = vadd.f32 %v503, %v665
  %v730 = vadd.f32 %v508, %v666
  %v731 = vadd.f32 %v511, %v667
  %v732 = vadd.f32 %v516, %v668
  %v733 = vadd.f32 %v519, %v669
  %v734 = vadd.f32 %v524, %v670
  %v735 = vadd.f32 %v527, %v671
  %v736 = vadd.f32 %v532, %v672
  %v737 = vadd.f32 %v535, %v673
  %v738 = vadd.f32 %v540, %v674
  %v739 = vadd.f32 %v543, %v675
  %v740 = vadd.f32 %v548, %v676
  %v741 = vadd.f32 %v551, %v677
  %v742 = vadd.f32 %v556, %v678
  %v743 = vadd.f32 %v559, %v679
  %v744 = vadd.f32 %v564, %v680
  %v745 = vadd.f32 %v567, %v681
  %v746 = vadd.f32 %v572, %v682
  %v747 = vadd.f32 %v575, %v683
  %v748 = vadd.f32 %v580, %v684
  %v749 = vadd.f32 %v583, %v685
  %v750 = vadd.f32 %v588, %v686
  %v751 = vadd.f32 %v591, %v687
  %v752 = vadd.f32 %v596, %v688
  %v753 = vadd.f32 %v599, %v689
  %v754 = vadd.f32 %v604, %v690
  %v755 = vadd.f32 %v607, %v691
  %v756 = vadd.f32 %v612, %v692
  %v757 = vadd.f32 %v615, %v693
  %v758 = vadd.f32 %v620, %v694
  %v759 = vadd.f32 %v623, %v695
  %v760 = vadd.f32 %v628, %v696
  %v761 = vadd.f32 %v631, %v697
  %v762 = vmax.f32 %v698, 0.0
  %v763 = vmax.f32 %v699, 0.0
  %v764 = vmax.f32 %v700, 0.0
  %v765 = vmax.f32 %v701, 0.0
  %v766 = vmax.f32 %v702, 0.0
  %v767 = vmax.f32 %v703, 0.0
  %v768 = vmax.f32 %v704, 0.0
  %v769 = vmax.f32 %v705, 0.0
  %v770 = vmax.f32 %v706, 0.0
  %v771 = vmax.f32 %v707, 0.0
  %v772 = vmax.f32 %v708, 0.0
  %v773 = vmax.f32 %v709, 0.0
  %v774 = vmax.f32 %v710, 0.0
  %v775 = vmax.f32 %v711, 0.0
  %v776 = vmax.f32 %v712, 0.0
  %v777 = vmax.f32 %v713, 0.0
  %v778 = vmax.f32 %v714, 0.0
  %v779 = vmax.f32 %v715, 0.0
  %v780 = vmax.f32 %v716, 0.0
  %v781 = vmax.f32 %v717, 0.0
  %v782 = vmax.f32 %v718, 0.0
  %v783 = vmax.f32 %v719, 0.0
  %v784 = vmax.f32 %v720, 0.0
  %v785 = vmax.f32 %v721, 0.0
  %v786 = vmax.f32 %v722, 0.0
  %v787 = vmax.f32 %v723, 0.0
  %v788 = vmax.f32 %v724, 0.0
  %v789 = vmax.f32 %v725, 0.0
  %v790 = vmax.f32 %v726, 0.0
  %v791 = vmax.f32 %v727, 0.0
  %v792 = vmax.f32 %v728, 0.0
  %v793 = vmax.f32 %v729, 0.0
  %v794 = vmax.f32 %v730, 0.0
  %v795 = vmax.f32 %v731, 0.0
  %v796 = vmax.f32 %v732, 0.0
  %v797 = vmax.f32 %v733, 0.0
  %v798 = vmax.f32 %v734, 0.0
  %v799 = vmax.f32 %v735, 0.0
  %v800 = vmax.f32 %v736, 0.0
  %v801 = vmax.f32 %v737, 0.0
  %v802 = vmax.f32 %v738, 0.0
  %v803 = vmax.f32 %v739, 0.0
  %v804 = vmax.f32 %v740, 0.0
  %v805 = vmax.f32 %v741, 0.0
  %v806 = vmax.f32 %v742, 0.0
  %v807 = vmax.f32 %v743, 0.0
  %v808 = vmax.f32 %v744, 0.0
  %v809 = vmax.f32 %v745, 0.0
  %v810 = vmax.f32 %v746, 0.0
  %v811 = vmax.f32 %v747, 0.0
  %v812 = vmax.f32 %v748, 0.0
  %v813 = vmax.f32 %v749, 0.0
  %v814 = vmax.f32 %v750, 0.0
  %v815 = vmax.f32 %v751, 0.0
  %v816 = vmax.f32 %v752, 0.0
  %v817 = vmax.f32 %v753, 0.0
  %v818 = vmax.f32 %v754, 0.0
  %v819 = vmax.f32 %v755, 0.0
  %v820 = vmax.f32 %v756, 0.0
  %v821 = vmax.f32 %v757, 0.0
  %v822 = vmax.f32 %v758, 0.0
  %v823 = vmax.f32 %v759, 0.0
  %v824 = vmax.f32 %v760, 0.0
  %v825 = vmax.f32 %v761, 0.0
  %826 = vst [vmem:[%s4] sm:$0xff] %v762
  %827 = vst [vmem:[%s4 + $0x8] sm:$0xff] %v763
  %828 = vst [vmem:[%s4 + $0x10] sm:$0xff] %v764
  %829 = vst [vmem:[%s4 + $0x18] sm:$0xff] %v765
  %830 = vst [vmem:[%s4 + $0x20] sm:$0xff] %v766
  %831 = vst [vmem:[%s4 + $0x28] sm:$0xff] %v767
  %832 = vst [vmem:[%s4 + $0x30] sm:$0xff] %v768
  %833 = vst [vmem:[%s4 + $0x38] sm:$0xff] %v769
  %834 = vst [vmem:[%s4 + $0x40] sm:$0xff] %v770
  %835 = vst [vmem:[%s4 + $0x48] sm:$0xff] %v771
  %836 = vst [vmem:[%s4 + $0x50] sm:$0xff] %v772
  %837 = vst [vmem:[%s4 + $0x58] sm:$0xff] %v773
  %838 = vst [vmem:[%s4 + $0x60] sm:$0xff] %v774
  %839 = vst [vmem:[%s4 + $0x68] sm:$0xff] %v775
  %840 = vst [vmem:[%s4 + $0x70] sm:$0xff] %v776
  %841 = vst [vmem:[%s4 + $0x78] sm:$0xff] %v777
  %842 = vst [vmem:[%s4 + $0x80] sm:$0xff] %v778
  %843 = vst [vmem:[%s4 + $0x88] sm:$0xff] %v779
  %844 = vst [vmem:[%s4 + $0x90] sm:$0xff] %v780
  %845 = vst [vmem:[%s4 + $0x98] sm:$0xff] %v781
  %846 = vst [vmem:[%s4 + $0xa0] sm:$0xff] %v782
  %847 = vst [vmem:[%s4 + $0xa8] sm:$0xff] %v783
  %848 = vst [vmem:[%s4 + $0xb0] sm:$0xff] %v784
  %849 = vst [vmem:[%s4 + $0xb8] sm:$0xff] %v785
  %850 = vst [vmem:[%s4 + $0xc0] sm:$0xff] %v786
  %851 = vst [vmem:[%s4 + $0xc8] sm:$0xff] %v787
  %852 = vst [vmem:[%s4 + $0xd0] sm:$0xff] %v788
  %853 = vst [vmem:[%s4 + $0xd8] sm:$0xff] %v789
  %854 = vst [vmem:[%s4 + $0xe0] sm:$0xff] %v790
  %855 = vst [vmem:[%s4 + $0xe8] sm:$0xff] %v791
  %856 = vst [vmem:[%s4 + $0xf0] sm:$0xff] %v792
  %857 = vst [vmem:[%s4 + $0xf8] sm:$0xff] %v793
  %858 = vst [vmem:[%s4 + $0x100] sm:$0xff] %v794
  %859 = vst [vmem:[%s4 + $0x108] sm:$0xff] %v795
  %860 = vst [vmem:[%s4 + $0x110] sm:$0xff] %v796
  %861 = vst [vmem:[%s4 + $0x118] sm:$0xff] %v797
  %862 = vst [vmem:[%s4 + $0x120] sm:$0xff] %v798
  %863 = vst [vmem:[%s4 + $0x128] sm:$0xff] %v799
  %864 = vst [vmem:[%s4 + $0x130] sm:$0xff] %v800
  %865 = vst [vmem:[%s4 + $0x138] sm:$0xff] %v801
  %866 = vst [vmem:[%s4 + $0x140] sm:$0xff] %v802
  %867 = vst [vmem:[%s4 + $0x148] sm:$0xff] %v803
  %868 = vst [vmem:[%s4 + $0x150] sm:$0xff] %v804
  %869 = vst [vmem:[%s4 + $0x158] sm:$0xff] %v805
  %870 = vst [vmem:[%s4 + $0x160] sm:$0xff] %v806
  %871 = vst [vmem:[%s4 + $0x168] sm:$0xff] %v807
  %872 = vst [vmem:[%s4 + $0x170] sm:$0xff] %v808
  %873 = vst [vmem:[%s4 + $0x178] sm:$0xff] %v809
  %874 = vst [vmem:[%s4 + $0x180] sm:$0xff] %v810
  %875 = vst [vmem:[%s4 + $0x188] sm:$0xff] %v811
  %876 = vst [vmem:[%s4 + $0x190] sm:$0xff] %v812
  %877 = vst [vmem:[%s4 + $0x198] sm:$0xff] %v813
  %878 = vst [vmem:[%s4 + $0x1a0] sm:$0xff] %v814
  %879 = vst [vmem:[%s4 + $0x1a8] sm:$0xff] %v815
  %880 = vst [vmem:[%s4 + $0x1b0] sm:$0xff] %v816
  %881 = vst [vmem:[%s4 + $0x1b8] sm:$0xff] %v817
  %882 = vst [vmem:[%s4 + $0x1c0] sm:$0xff] %v818
  %883 = vst [vmem:[%s4 + $0x1c8] sm:$0xff] %v819
  %884 = vst [vmem:[%s4 + $0x1d0] sm:$0xff] %v820
  %885 = vst [vmem:[%s4 + $0x1d8] sm:$0xff] %v821
  %886 = vst [vmem:[%s4 + $0x1e0] sm:$0xff] %v822
  %887 = vst [vmem:[%s4 + $0x1e8] sm:$0xff] %v823
  %888 = vst [vmem:[%s4 + $0x1f0] sm:$0xff] %v824
  %889 = vst [vmem:[%s4 + $0x1f8] sm:$0xff] %v825
  // Predicated region
  $region18: #{bottleneck_forward.7} parent=0 // pred_check
    _
  $region19: #{bottleneck_forward.7} parent=0 // pred_check_branch
    %891 = sbr.rel (0) target = $region21
  $region20: #{bottleneck_forward.7} parent=0 // pred_region
    _
  $region21: #{bottleneck_forward.7} parent=0 // pred_fallthru
    _
  // Predicated region
  $region22: #{bottleneck_forward.7} parent=0 // pred_check
    _
  $region23: #{bottleneck_forward.7} parent=0 // pred_check_branch
    %893 = sbr.rel (0) target = $region25
  $region24: #{bottleneck_forward.7} parent=0 // pred_region
    _
  $region25: #{bottleneck_forward.7} parent=0 // pred_fallthru
    _

</llo_original>
